<compile_context>
chip_gen: v7x
topology: tpu7x:2x2x1
jax: 0.10.0
libtpu: 0.0.40
codegen_flags: <defaults>
</compile_context>

<pallas_src>
import functools

import jax
import jax.numpy as jnp
from jax.experimental import pallas as pl
from jax.experimental.pallas import tpu as pltpu


# ---------------------------------------------------------------------------
# Fused Pallas kernel: embedding + n_layers x bidirectional GRU, all in VMEM.
# ---------------------------------------------------------------------------
def encoder_kernel(*args, T, B, H, n_layers):
    # args layout:
    #   ids_ref : (T*B, 1) int32, time-major (row = t*B + b)
    #   emb_ref : (cb_pad, E) f32, zero-padded embedding table
    #   per layer, per direction: wih (D,3H), whh (H,3H), bih (1,3H), bhh (1,3H)
    #   out_ref : (T*B, 2H) f32  (last-layer output, time-major)
    #   hid_ref : (2*n_layers, B, H) f32
    #   scratch : (n_layers-1) x VMEM (T*B, 2H) f32 (inter-layer activations)
    n_w = n_layers * 2 * 4
    ids_ref, emb_ref = args[0], args[1]
    w_refs = args[2:2 + n_w]
    out_ref, hid_ref = args[2 + n_w], args[3 + n_w]
    scratch_refs = args[4 + n_w:]

    TB = T * B
    H2, H3 = 2 * H, 3 * H

    # ---- Embedding lookup via one-hot matmul (MXU-friendly in-kernel gather)
    ids = ids_ref[...]                                          # (TB, 1) int32
    cbp = emb_ref.shape[0]
    iota = jax.lax.broadcasted_iota(jnp.int32, (TB, cbp), 1)
    onehot = jnp.where(iota == ids, 1.0, 0.0)                   # (TB, cbp) f32
    x = jnp.dot(onehot, emb_ref[...],
                preferred_element_type=jnp.float32)             # (TB, E)
    # self.dropout(embedding): identity in eval mode.

    for layer in range(n_layers):
        base = layer * 2 * 4
        # Last layer writes straight to the kernel output; earlier layers to
        # a VMEM scratch block that the next layer consumes without HBM.
        y_ref = out_ref if layer == n_layers - 1 else scratch_refs[layer]

        dir_pre = []
        for d in range(2):                                      # 0=fwd, 1=bwd
            wih = w_refs[base + d * 4 + 0][...]                 # (D, 3H)
            whh = w_refs[base + d * 4 + 1][...]                 # (H, 3H)
            bih = w_refs[base + d * 4 + 2][...]                 # (1, 3H)
            bhh = w_refs[base + d * 4 + 3][...]                 # (1, 3H)

            # Hoisted input projection for ALL timesteps: one matmul per
            # layer/direction, completely outside the serial recurrence.
            gi = jnp.dot(x, wih, preferred_element_type=jnp.float32) + bih
            # Fold the r/z recurrent biases into the hoisted projection; the
            # n-gate recurrent bias must stay inside r*(...) (GRU semantics).
            gi_rz = gi[:, 0:H2] + bhh[:, 0:H2]                  # (TB, 2H)
            gi_n = gi[:, H2:H3]                                 # (TB, H)
            bhh_n = jnp.broadcast_to(bhh[:, H2:H3], (B, H))     # hoisted bcast
            dir_pre.append((gi_rz, gi_n, whh, bhh_n))

        f_gi_rz, f_gi_n, f_whh, f_bhh_n = dir_pre[0]
        b_gi_rz, b_gi_n, b_whh, b_bhh_n = dir_pre[1]

        h_f = jnp.zeros((B, H), jnp.float32)
        h_b = jnp.zeros((B, H), jnp.float32)

        def gru_step(h, gi_rz_t, gi_n_t, whh, bhh_n):
            # ONE fused recurrent matmul for all three gates (serial path).
            gh = jnp.dot(h, whh, preferred_element_type=jnp.float32)  # (B,3H)
            # r and z share a single sigmoid over a (B, 2H) block.
            rz = jax.nn.sigmoid(gi_rz_t + gh[:, 0:H2])
            r, z = rz[:, 0:H], rz[:, H:H2]
            n = jnp.tanh(gi_n_t + r * (gh[:, H2:H3] + bhh_n))
            return (1.0 - z) * n + z * h

        # Fully unrolled recurrence (T static & small). Backward direction is
        # pure index arithmetic: it reads timestep T-1-s and writes its output
        # row T-1-s, so no array reversal ever materializes.
        for s in range(T):
            rf = s * B                       # fwd rows (time s)
            rb = (T - 1 - s) * B             # bwd rows (time T-1-s)

            h_f = gru_step(h_f, f_gi_rz[rf:rf + B, :],
                           f_gi_n[rf:rf + B, :], f_whh, f_bhh_n)
            h_b = gru_step(h_b, b_gi_rz[rb:rb + B, :],
                           b_gi_n[rb:rb + B, :], b_whh, b_bhh_n)

            y_ref[rf:rf + B, 0:H] = h_f
            y_ref[rb:rb + B, H:H2] = h_b

        hid_ref[2 * layer] = h_f
        hid_ref[2 * layer + 1] = h_b

        # Next layer consumes the full (fwd || bwd) activation, kept in VMEM.
        if layer < n_layers - 1:
            x = y_ref[...]                                       # (TB, 2H)
            # inter-layer GRU dropout: identity in eval mode.


def _vmem_spec():
    return pl.BlockSpec(memory_space=pltpu.MemorySpace.VMEM)


# ---------------------------------------------------------------------------
# Parameter construction (deterministic, mirrors nn.Embedding + nn.GRU shapes)
# ---------------------------------------------------------------------------
def init_params(key, cb_size, emb_dim, hid_dim, n_layers):
    k_emb, k_rnn = jax.random.split(key)
    params = {
        "embedding": jax.random.normal(k_emb, (cb_size, emb_dim), jnp.float32)
    }
    bound = 1.0 / float(hid_dim) ** 0.5
    layer_keys = jax.random.split(k_rnn, n_layers * 2)
    rnn = []
    for layer in range(n_layers):
        in_dim = emb_dim if layer == 0 else 2 * hid_dim
        dirs = []
        for d in range(2):  # 0 = forward, 1 = backward
            kk = jax.random.split(layer_keys[layer * 2 + d], 4)
            # stored transposed: x @ wih, h @ whh; gate order [r | z | n]
            wih = jax.random.uniform(kk[0], (in_dim, 3 * hid_dim),
                                     jnp.float32, -bound, bound)
            whh = jax.random.uniform(kk[1], (hid_dim, 3 * hid_dim),
                                     jnp.float32, -bound, bound)
            bih = jax.random.uniform(kk[2], (1, 3 * hid_dim),
                                     jnp.float32, -bound, bound)
            bhh = jax.random.uniform(kk[3], (1, 3 * hid_dim),
                                     jnp.float32, -bound, bound)
            dirs.append((wih, whh, bih, bhh))
        rnn.append(dirs)
    params["rnn"] = rnn
    return params


# ---------------------------------------------------------------------------
# Encoder forward: one fused pallas_call + tiny layout glue on (2,8)/(16,64).
# ---------------------------------------------------------------------------
@functools.partial(jax.jit, static_argnames=("n_layers", "hid_dim"))
def encoder_forward(input_ids, params, *, n_layers, hid_dim):
    B, T = input_ids.shape
    H = hid_dim

    emb_table = params["embedding"]
    cb, _ = emb_table.shape
    cb_pad = ((cb + 127) // 128) * 128          # lane-aligned one-hot K dim
    emb_pad = jnp.pad(emb_table, ((0, cb_pad - cb), (0, 0)))

    # time-major flat ids: row t*B + b  (tiny (T*B,1) int32 relayout)
    ids_tm = jnp.transpose(input_ids.astype(jnp.int32)).reshape(T * B, 1)

    flat_w = []
    for layer in range(n_layers):
        for d in range(2):
            flat_w.extend(params["rnn"][layer][d])

    kernel = functools.partial(encoder_kernel, T=T, B=B, H=H,
                               n_layers=n_layers)
    out_tm, hidden = pl.pallas_call(
        kernel,
        out_shape=(jax.ShapeDtypeStruct((T * B, 2 * H), jnp.float32),
                   jax.ShapeDtypeStruct((2 * n_layers, B, H), jnp.float32)),
        in_specs=[_vmem_spec() for _ in range(2 + len(flat_w))],
        out_specs=(_vmem_spec(), _vmem_spec()),
        scratch_shapes=[pltpu.VMEM((T * B, 2 * H), jnp.float32)
                        for _ in range(max(n_layers - 1, 0))],
    )(ids_tm, emb_pad, *flat_w)

    outputs = jnp.transpose(out_tm.reshape(T, B, 2 * H), (1, 0, 2))  # (B,T,2H)
    return outputs, hidden


# ---------------------------------------------------------------------------
# Pure-JAX reference (mirrors PyTorch nn.GRU semantics) for correctness check.
# ---------------------------------------------------------------------------
def encoder_reference(input_ids, params, *, n_layers, hid_dim):
    H = hid_dim
    emb = jnp.take(params["embedding"], input_ids, axis=0)      # (B, T, E)
    layer_in = emb
    B, T, _ = layer_in.shape
    hiddens = []
    for layer in range(n_layers):
        dir_outs = []
        for d in range(2):
            wih, whh, bih, bhh = params["rnn"][layer][d]
            x = layer_in if d == 0 else layer_in[:, ::-1, :]
            h = jnp.zeros((B, H), jnp.float32)
            ys = []
            for t in range(T):
                xt = x[:, t, :]
                gi = xt @ wih + bih
                gh = h @ whh + bhh
                r = jax.nn.sigmoid(gi[:, 0:H] + gh[:, 0:H])
                z = jax.nn.sigmoid(gi[:, H:2 * H] + gh[:, H:2 * H])
                n = jnp.tanh(gi[:, 2 * H:] + r * gh[:, 2 * H:])
                h = (1.0 - z) * n + z * h
                ys.append(h)
            y = jnp.stack(ys, axis=1)                           # (B, T, H)
            if d == 1:
                y = y[:, ::-1, :]
            dir_outs.append(y)
            hiddens.append(h)
        layer_in = jnp.concatenate(dir_outs, axis=-1)
    return layer_in, jnp.stack(hiddens, axis=0)


if __name__ == "__main__":
    cb_size, emb_dim, hid_dim, n_layers, dropout = 50, 16, 32, 2, 0.1
    batch, seq = 2, 8

    key = jax.random.PRNGKey(0)
    k_params, k_ids = jax.random.split(key)
    params = init_params(k_params, cb_size, emb_dim, hid_dim, n_layers)
    input_ids = jax.random.randint(k_ids, (batch, seq), 0, cb_size,
                                   dtype=jnp.int32)

    outputs, hidden = encoder_forward(input_ids, params,
                                      n_layers=n_layers, hid_dim=hid_dim)
    jax.block_until_ready((outputs, hidden))

    assert outputs.shape == (batch, seq, 2 * hid_dim), outputs.shape
    assert hidden.shape == (2 * n_layers, batch, hid_dim), hidden.shape
    assert outputs.dtype == jnp.float32 and hidden.dtype == jnp.float32

    ref_out, ref_hid = encoder_reference(input_ids, params,
                                         n_layers=n_layers, hid_dim=hid_dim)
    assert jnp.allclose(outputs, ref_out, atol=1e-4, rtol=1e-4), \
        float(jnp.max(jnp.abs(outputs - ref_out)))
    assert jnp.allclose(hidden, ref_hid, atol=1e-4, rtol=1e-4), \
        float(jnp.max(jnp.abs(hidden - ref_hid)))
    print("KERNEL_OK")
</pallas_src>

<mosaic_0001>
module attributes {stable_mosaic.version = 11 : i64} {
  func.func @encoder_kernel(%arg0: memref<16x1xi32, #tpu.memory_space<vmem>>, %arg1: memref<128x16xf32, #tpu.memory_space<vmem>>, %arg2: memref<16x96xf32, #tpu.memory_space<vmem>>, %arg3: memref<32x96xf32, #tpu.memory_space<vmem>>, %arg4: memref<1x96xf32, #tpu.memory_space<vmem>>, %arg5: memref<1x96xf32, #tpu.memory_space<vmem>>, %arg6: memref<16x96xf32, #tpu.memory_space<vmem>>, %arg7: memref<32x96xf32, #tpu.memory_space<vmem>>, %arg8: memref<1x96xf32, #tpu.memory_space<vmem>>, %arg9: memref<1x96xf32, #tpu.memory_space<vmem>>, %arg10: memref<64x96xf32, #tpu.memory_space<vmem>>, %arg11: memref<32x96xf32, #tpu.memory_space<vmem>>, %arg12: memref<1x96xf32, #tpu.memory_space<vmem>>, %arg13: memref<1x96xf32, #tpu.memory_space<vmem>>, %arg14: memref<64x96xf32, #tpu.memory_space<vmem>>, %arg15: memref<32x96xf32, #tpu.memory_space<vmem>>, %arg16: memref<1x96xf32, #tpu.memory_space<vmem>>, %arg17: memref<1x96xf32, #tpu.memory_space<vmem>>, %arg18: memref<16x64xf32, #tpu.memory_space<vmem>>, %arg19: memref<4x2x32xf32, #tpu.memory_space<vmem>>, %arg20: memref<16x64xf32, #tpu.memory_space<vmem>>) attributes {dimension_semantics = [], scalar_prefetch = 0 : i64, scratch_operands = 1 : i64, tpu.core_type = #tpu.core_type<tc>} {
    %c0 = arith.constant 0 : index
    %c0_0 = arith.constant 0 : index
    %0 = vector.load %arg0[%c0, %c0_0] : memref<16x1xi32, #tpu.memory_space<vmem>>, vector<16x1xi32>
    %1 = tpu.iota {dimensions = array<i32: 1>} : vector<16x128xi32>
    %2 = vector.broadcast %0 : vector<16x1xi32> to vector<16x128xi32>
    %3 = arith.cmpi eq, %1, %2 : vector<16x128xi32>
    %cst = arith.constant 1.000000e+00 : f32
    %cst_1 = arith.constant 0.000000e+00 : f32
    %4 = vector.broadcast %cst : f32 to vector<16x128xf32>
    %5 = vector.broadcast %cst_1 : f32 to vector<16x128xf32>
    %6 = arith.select %3, %4, %5 : vector<16x128xi1>, vector<16x128xf32>
    %c0_2 = arith.constant 0 : index
    %c0_3 = arith.constant 0 : index
    %7 = vector.load %arg1[%c0_2, %c0_3] : memref<128x16xf32, #tpu.memory_space<vmem>>, vector<128x16xf32>
    %cst_4 = arith.constant dense<0.000000e+00> : vector<16x16xf32>
    %8 = tpu.matmul %6, %7, %cst_4 {dimension_numbers = #tpu.dot_dimension_numbers<[1], [0], [0], [1], [0, 0, 1, 1], [], []>} : vector<16x128xf32>, vector<128x16xf32>, vector<16x16xf32> -> vector<16x16xf32>
    %c0_5 = arith.constant 0 : index
    %c0_6 = arith.constant 0 : index
    %9 = vector.load %arg2[%c0_5, %c0_6] : memref<16x96xf32, #tpu.memory_space<vmem>>, vector<16x96xf32>
    %c0_7 = arith.constant 0 : index
    %c0_8 = arith.constant 0 : index
    %10 = vector.load %arg3[%c0_7, %c0_8] : memref<32x96xf32, #tpu.memory_space<vmem>>, vector<32x96xf32>
    %c0_9 = arith.constant 0 : index
    %c0_10 = arith.constant 0 : index
    %11 = vector.load %arg4[%c0_9, %c0_10] : memref<1x96xf32, #tpu.memory_space<vmem>>, vector<1x96xf32>
    %c0_11 = arith.constant 0 : index
    %c0_12 = arith.constant 0 : index
    %12 = vector.load %arg5[%c0_11, %c0_12] : memref<1x96xf32, #tpu.memory_space<vmem>>, vector<1x96xf32>
    %cst_13 = arith.constant dense<0.000000e+00> : vector<16x96xf32>
    %13 = tpu.matmul %8, %9, %cst_13 {dimension_numbers = #tpu.dot_dimension_numbers<[1], [0], [0], [1], [0, 0, 1, 1], [], []>} : vector<16x16xf32>, vector<16x96xf32>, vector<16x96xf32> -> vector<16x96xf32>
    %14 = vector.broadcast %11 : vector<1x96xf32> to vector<16x96xf32>
    %15 = arith.addf %13, %14 : vector<16x96xf32>
    %16 = vector.extract_strided_slice %15 {offsets = [0, 0], sizes = [16, 64], strides = [1, 1]} : vector<16x96xf32> to vector<16x64xf32>
    %17 = vector.extract_strided_slice %12 {offsets = [0, 0], sizes = [1, 64], strides = [1, 1]} : vector<1x96xf32> to vector<1x64xf32>
    %18 = vector.broadcast %17 : vector<1x64xf32> to vector<16x64xf32>
    %19 = arith.addf %16, %18 : vector<16x64xf32>
    %20 = vector.extract_strided_slice %15 {offsets = [0, 64], sizes = [16, 32], strides = [1, 1]} : vector<16x96xf32> to vector<16x32xf32>
    %21 = vector.extract_strided_slice %12 {offsets = [0, 64], sizes = [1, 32], strides = [1, 1]} : vector<1x96xf32> to vector<1x32xf32>
    %22 = vector.shape_cast %21 : vector<1x32xf32> to vector<1x32xf32>
    %23 = vector.broadcast %22 : vector<1x32xf32> to vector<2x32xf32>
    %c0_14 = arith.constant 0 : index
    %c0_15 = arith.constant 0 : index
    %24 = vector.load %arg6[%c0_14, %c0_15] : memref<16x96xf32, #tpu.memory_space<vmem>>, vector<16x96xf32>
    %c0_16 = arith.constant 0 : index
    %c0_17 = arith.constant 0 : index
    %25 = vector.load %arg7[%c0_16, %c0_17] : memref<32x96xf32, #tpu.memory_space<vmem>>, vector<32x96xf32>
    %c0_18 = arith.constant 0 : index
    %c0_19 = arith.constant 0 : index
    %26 = vector.load %arg8[%c0_18, %c0_19] : memref<1x96xf32, #tpu.memory_space<vmem>>, vector<1x96xf32>
    %c0_20 = arith.constant 0 : index
    %c0_21 = arith.constant 0 : index
    %27 = vector.load %arg9[%c0_20, %c0_21] : memref<1x96xf32, #tpu.memory_space<vmem>>, vector<1x96xf32>
    %cst_22 = arith.constant dense<0.000000e+00> : vector<16x96xf32>
    %28 = tpu.matmul %8, %24, %cst_22 {dimension_numbers = #tpu.dot_dimension_numbers<[1], [0], [0], [1], [0, 0, 1, 1], [], []>} : vector<16x16xf32>, vector<16x96xf32>, vector<16x96xf32> -> vector<16x96xf32>
    %29 = vector.broadcast %26 : vector<1x96xf32> to vector<16x96xf32>
    %30 = arith.addf %28, %29 : vector<16x96xf32>
    %31 = vector.extract_strided_slice %30 {offsets = [0, 0], sizes = [16, 64], strides = [1, 1]} : vector<16x96xf32> to vector<16x64xf32>
    %32 = vector.extract_strided_slice %27 {offsets = [0, 0], sizes = [1, 64], strides = [1, 1]} : vector<1x96xf32> to vector<1x64xf32>
    %33 = vector.broadcast %32 : vector<1x64xf32> to vector<16x64xf32>
    %34 = arith.addf %31, %33 : vector<16x64xf32>
    %35 = vector.extract_strided_slice %30 {offsets = [0, 64], sizes = [16, 32], strides = [1, 1]} : vector<16x96xf32> to vector<16x32xf32>
    %36 = vector.extract_strided_slice %27 {offsets = [0, 64], sizes = [1, 32], strides = [1, 1]} : vector<1x96xf32> to vector<1x32xf32>
    %37 = vector.shape_cast %36 : vector<1x32xf32> to vector<1x32xf32>
    %38 = vector.broadcast %37 : vector<1x32xf32> to vector<2x32xf32>
    %cst_23 = arith.constant 0.000000e+00 : f32
    %39 = vector.broadcast %cst_23 : f32 to vector<2x32xf32>
    %cst_24 = arith.constant 0.000000e+00 : f32
    %40 = vector.broadcast %cst_24 : f32 to vector<2x32xf32>
    %41 = vector.extract_strided_slice %19 {offsets = [0, 0], sizes = [2, 64], strides = [1, 1]} : vector<16x64xf32> to vector<2x64xf32>
    %42 = vector.extract_strided_slice %20 {offsets = [0, 0], sizes = [2, 32], strides = [1, 1]} : vector<16x32xf32> to vector<2x32xf32>
    %cst_25 = arith.constant dense<0.000000e+00> : vector<2x96xf32>
    %43 = tpu.matmul %39, %10, %cst_25 {dimension_numbers = #tpu.dot_dimension_numbers<[1], [0], [0], [1], [0, 0, 1, 1], [], []>} : vector<2x32xf32>, vector<32x96xf32>, vector<2x96xf32> -> vector<2x96xf32>
    %44 = vector.extract_strided_slice %43 {offsets = [0, 0], sizes = [2, 64], strides = [1, 1]} : vector<2x96xf32> to vector<2x64xf32>
    %45 = arith.addf %41, %44 : vector<2x64xf32>
    %46 = arith.negf %45 : vector<2x64xf32>
    %47 = math.exp %46 : vector<2x64xf32>
    %cst_26 = arith.constant 1.000000e+00 : f32
    %48 = vector.broadcast %cst_26 : f32 to vector<2x64xf32>
    %49 = arith.addf %48, %47 : vector<2x64xf32>
    %50 = arith.divf %48, %49 : vector<2x64xf32>
    %51 = vector.extract_strided_slice %50 {offsets = [0, 0], sizes = [2, 32], strides = [1, 1]} : vector<2x64xf32> to vector<2x32xf32>
    %52 = vector.extract_strided_slice %50 {offsets = [0, 32], sizes = [2, 32], strides = [1, 1]} : vector<2x64xf32> to vector<2x32xf32>
    %53 = vector.extract_strided_slice %43 {offsets = [0, 64], sizes = [2, 32], strides = [1, 1]} : vector<2x96xf32> to vector<2x32xf32>
    %54 = arith.addf %53, %23 : vector<2x32xf32>
    %55 = arith.mulf %51, %54 : vector<2x32xf32>
    %56 = arith.addf %42, %55 : vector<2x32xf32>
    %57 = math.tanh %56 : vector<2x32xf32>
    %cst_27 = arith.constant 1.000000e+00 : f32
    %58 = vector.broadcast %cst_27 : f32 to vector<2x32xf32>
    %59 = arith.subf %58, %52 : vector<2x32xf32>
    %60 = arith.mulf %59, %57 : vector<2x32xf32>
    %61 = arith.mulf %52, %39 : vector<2x32xf32>
    %62 = arith.addf %60, %61 : vector<2x32xf32>
    %63 = vector.extract_strided_slice %34 {offsets = [14, 0], sizes = [2, 64], strides = [1, 1]} : vector<16x64xf32> to vector<2x64xf32>
    %64 = vector.extract_strided_slice %35 {offsets = [14, 0], sizes = [2, 32], strides = [1, 1]} : vector<16x32xf32> to vector<2x32xf32>
    %cst_28 = arith.constant dense<0.000000e+00> : vector<2x96xf32>
    %65 = tpu.matmul %40, %25, %cst_28 {dimension_numbers = #tpu.dot_dimension_numbers<[1], [0], [0], [1], [0, 0, 1, 1], [], []>} : vector<2x32xf32>, vector<32x96xf32>, vector<2x96xf32> -> vector<2x96xf32>
    %66 = vector.extract_strided_slice %65 {offsets = [0, 0], sizes = [2, 64], strides = [1, 1]} : vector<2x96xf32> to vector<2x64xf32>
    %67 = arith.addf %63, %66 : vector<2x64xf32>
    %68 = arith.negf %67 : vector<2x64xf32>
    %69 = math.exp %68 : vector<2x64xf32>
    %cst_29 = arith.constant 1.000000e+00 : f32
    %70 = vector.broadcast %cst_29 : f32 to vector<2x64xf32>
    %71 = arith.addf %70, %69 : vector<2x64xf32>
    %72 = arith.divf %70, %71 : vector<2x64xf32>
    %73 = vector.extract_strided_slice %72 {offsets = [0, 0], sizes = [2, 32], strides = [1, 1]} : vector<2x64xf32> to vector<2x32xf32>
    %74 = vector.extract_strided_slice %72 {offsets = [0, 32], sizes = [2, 32], strides = [1, 1]} : vector<2x64xf32> to vector<2x32xf32>
    %75 = vector.extract_strided_slice %65 {offsets = [0, 64], sizes = [2, 32], strides = [1, 1]} : vector<2x96xf32> to vector<2x32xf32>
    %76 = arith.addf %75, %38 : vector<2x32xf32>
    %77 = arith.mulf %73, %76 : vector<2x32xf32>
    %78 = arith.addf %64, %77 : vector<2x32xf32>
    %79 = math.tanh %78 : vector<2x32xf32>
    %cst_30 = arith.constant 1.000000e+00 : f32
    %80 = vector.broadcast %cst_30 : f32 to vector<2x32xf32>
    %81 = arith.subf %80, %74 : vector<2x32xf32>
    %82 = arith.mulf %81, %79 : vector<2x32xf32>
    %83 = arith.mulf %74, %40 : vector<2x32xf32>
    %84 = arith.addf %82, %83 : vector<2x32xf32>
    %c0_31 = arith.constant 0 : index
    %c0_32 = arith.constant 0 : index
    %85 = vector.load %arg20[%c0_31, %c0_32] : memref<16x64xf32, #tpu.memory_space<vmem>>, vector<2x32xf32>
    tpu.vector_store %arg20[%c0_31, %c0_32], %62 {strides = array<i32>} : memref<16x64xf32, #tpu.memory_space<vmem>>, vector<2x32xf32>,
    %c14 = arith.constant 14 : index
    %c32 = arith.constant 32 : index
    %86 = vector.load %arg20[%c14, %c32] : memref<16x64xf32, #tpu.memory_space<vmem>>, vector<2x32xf32>
    tpu.vector_store %arg20[%c14, %c32], %84 {strides = array<i32>} : memref<16x64xf32, #tpu.memory_space<vmem>>, vector<2x32xf32>,
    %87 = vector.extract_strided_slice %19 {offsets = [2, 0], sizes = [2, 64], strides = [1, 1]} : vector<16x64xf32> to vector<2x64xf32>
    %88 = vector.extract_strided_slice %20 {offsets = [2, 0], sizes = [2, 32], strides = [1, 1]} : vector<16x32xf32> to vector<2x32xf32>
    %cst_33 = arith.constant dense<0.000000e+00> : vector<2x96xf32>
    %89 = tpu.matmul %62, %10, %cst_33 {dimension_numbers = #tpu.dot_dimension_numbers<[1], [0], [0], [1], [0, 0, 1, 1], [], []>} : vector<2x32xf32>, vector<32x96xf32>, vector<2x96xf32> -> vector<2x96xf32>
    %90 = vector.extract_strided_slice %89 {offsets = [0, 0], sizes = [2, 64], strides = [1, 1]} : vector<2x96xf32> to vector<2x64xf32>
    %91 = arith.addf %87, %90 : vector<2x64xf32>
    %92 = arith.negf %91 : vector<2x64xf32>
    %93 = math.exp %92 : vector<2x64xf32>
    %cst_34 = arith.constant 1.000000e+00 : f32
    %94 = vector.broadcast %cst_34 : f32 to vector<2x64xf32>
    %95 = arith.addf %94, %93 : vector<2x64xf32>
    %96 = arith.divf %94, %95 : vector<2x64xf32>
    %97 = vector.extract_strided_slice %96 {offsets = [0, 0], sizes = [2, 32], strides = [1, 1]} : vector<2x64xf32> to vector<2x32xf32>
    %98 = vector.extract_strided_slice %96 {offsets = [0, 32], sizes = [2, 32], strides = [1, 1]} : vector<2x64xf32> to vector<2x32xf32>
    %99 = vector.extract_strided_slice %89 {offsets = [0, 64], sizes = [2, 32], strides = [1, 1]} : vector<2x96xf32> to vector<2x32xf32>
    %100 = arith.addf %99, %23 : vector<2x32xf32>
    %101 = arith.mulf %97, %100 : vector<2x32xf32>
    %102 = arith.addf %88, %101 : vector<2x32xf32>
    %103 = math.tanh %102 : vector<2x32xf32>
    %cst_35 = arith.constant 1.000000e+00 : f32
    %104 = vector.broadcast %cst_35 : f32 to vector<2x32xf32>
    %105 = arith.subf %104, %98 : vector<2x32xf32>
    %106 = arith.mulf %105, %103 : vector<2x32xf32>
    %107 = arith.mulf %98, %62 : vector<2x32xf32>
    %108 = arith.addf %106, %107 : vector<2x32xf32>
    %109 = vector.extract_strided_slice %34 {offsets = [12, 0], sizes = [2, 64], strides = [1, 1]} : vector<16x64xf32> to vector<2x64xf32>
    %110 = vector.extract_strided_slice %35 {offsets = [12, 0], sizes = [2, 32], strides = [1, 1]} : vector<16x32xf32> to vector<2x32xf32>
    %cst_36 = arith.constant dense<0.000000e+00> : vector<2x96xf32>
    %111 = tpu.matmul %84, %25, %cst_36 {dimension_numbers = #tpu.dot_dimension_numbers<[1], [0], [0], [1], [0, 0, 1, 1], [], []>} : vector<2x32xf32>, vector<32x96xf32>, vector<2x96xf32> -> vector<2x96xf32>
    %112 = vector.extract_strided_slice %111 {offsets = [0, 0], sizes = [2, 64], strides = [1, 1]} : vector<2x96xf32> to vector<2x64xf32>
    %113 = arith.addf %109, %112 : vector<2x64xf32>
    %114 = arith.negf %113 : vector<2x64xf32>
    %115 = math.exp %114 : vector<2x64xf32>
    %cst_37 = arith.constant 1.000000e+00 : f32
    %116 = vector.broadcast %cst_37 : f32 to vector<2x64xf32>
    %117 = arith.addf %116, %115 : vector<2x64xf32>
    %118 = arith.divf %116, %117 : vector<2x64xf32>
    %119 = vector.extract_strided_slice %118 {offsets = [0, 0], sizes = [2, 32], strides = [1, 1]} : vector<2x64xf32> to vector<2x32xf32>
    %120 = vector.extract_strided_slice %118 {offsets = [0, 32], sizes = [2, 32], strides = [1, 1]} : vector<2x64xf32> to vector<2x32xf32>
    %121 = vector.extract_strided_slice %111 {offsets = [0, 64], sizes = [2, 32], strides = [1, 1]} : vector<2x96xf32> to vector<2x32xf32>
    %122 = arith.addf %121, %38 : vector<2x32xf32>
    %123 = arith.mulf %119, %122 : vector<2x32xf32>
    %124 = arith.addf %110, %123 : vector<2x32xf32>
    %125 = math.tanh %124 : vector<2x32xf32>
    %cst_38 = arith.constant 1.000000e+00 : f32
    %126 = vector.broadcast %cst_38 : f32 to vector<2x32xf32>
    %127 = arith.subf %126, %120 : vector<2x32xf32>
    %128 = arith.mulf %127, %125 : vector<2x32xf32>
    %129 = arith.mulf %120, %84 : vector<2x32xf32>
    %130 = arith.addf %128, %129 : vector<2x32xf32>
    %c2 = arith.constant 2 : index
    %c0_39 = arith.constant 0 : index
    %131 = vector.load %arg20[%c2, %c0_39] : memref<16x64xf32, #tpu.memory_space<vmem>>, vector<2x32xf32>
    tpu.vector_store %arg20[%c2, %c0_39], %108 {strides = array<i32>} : memref<16x64xf32, #tpu.memory_space<vmem>>, vector<2x32xf32>,
    %c12 = arith.constant 12 : index
    %c32_40 = arith.constant 32 : index
    %132 = vector.load %arg20[%c12, %c32_40] : memref<16x64xf32, #tpu.memory_space<vmem>>, vector<2x32xf32>
    tpu.vector_store %arg20[%c12, %c32_40], %130 {strides = array<i32>} : memref<16x64xf32, #tpu.memory_space<vmem>>, vector<2x32xf32>,
    %133 = vector.extract_strided_slice %19 {offsets = [4, 0], sizes = [2, 64], strides = [1, 1]} : vector<16x64xf32> to vector<2x64xf32>
    %134 = vector.extract_strided_slice %20 {offsets = [4, 0], sizes = [2, 32], strides = [1, 1]} : vector<16x32xf32> to vector<2x32xf32>
    %cst_41 = arith.constant dense<0.000000e+00> : vector<2x96xf32>
    %135 = tpu.matmul %108, %10, %cst_41 {dimension_numbers = #tpu.dot_dimension_numbers<[1], [0], [0], [1], [0, 0, 1, 1], [], []>} : vector<2x32xf32>, vector<32x96xf32>, vector<2x96xf32> -> vector<2x96xf32>
    %136 = vector.extract_strided_slice %135 {offsets = [0, 0], sizes = [2, 64], strides = [1, 1]} : vector<2x96xf32> to vector<2x64xf32>
    %137 = arith.addf %133, %136 : vector<2x64xf32>
    %138 = arith.negf %137 : vector<2x64xf32>
    %139 = math.exp %138 : vector<2x64xf32>
    %cst_42 = arith.constant 1.000000e+00 : f32
    %140 = vector.broadcast %cst_42 : f32 to vector<2x64xf32>
    %141 = arith.addf %140, %139 : vector<2x64xf32>
    %142 = arith.divf %140, %141 : vector<2x64xf32>
    %143 = vector.extract_strided_slice %142 {offsets = [0, 0], sizes = [2, 32], strides = [1, 1]} : vector<2x64xf32> to vector<2x32xf32>
    %144 = vector.extract_strided_slice %142 {offsets = [0, 32], sizes = [2, 32], strides = [1, 1]} : vector<2x64xf32> to vector<2x32xf32>
    %145 = vector.extract_strided_slice %135 {offsets = [0, 64], sizes = [2, 32], strides = [1, 1]} : vector<2x96xf32> to vector<2x32xf32>
    %146 = arith.addf %145, %23 : vector<2x32xf32>
    %147 = arith.mulf %143, %146 : vector<2x32xf32>
    %148 = arith.addf %134, %147 : vector<2x32xf32>
    %149 = math.tanh %148 : vector<2x32xf32>
    %cst_43 = arith.constant 1.000000e+00 : f32
    %150 = vector.broadcast %cst_43 : f32 to vector<2x32xf32>
    %151 = arith.subf %150, %144 : vector<2x32xf32>
    %152 = arith.mulf %151, %149 : vector<2x32xf32>
    %153 = arith.mulf %144, %108 : vector<2x32xf32>
    %154 = arith.addf %152, %153 : vector<2x32xf32>
    %155 = vector.extract_strided_slice %34 {offsets = [10, 0], sizes = [2, 64], strides = [1, 1]} : vector<16x64xf32> to vector<2x64xf32>
    %156 = vector.extract_strided_slice %35 {offsets = [10, 0], sizes = [2, 32], strides = [1, 1]} : vector<16x32xf32> to vector<2x32xf32>
    %cst_44 = arith.constant dense<0.000000e+00> : vector<2x96xf32>
    %157 = tpu.matmul %130, %25, %cst_44 {dimension_numbers = #tpu.dot_dimension_numbers<[1], [0], [0], [1], [0, 0, 1, 1], [], []>} : vector<2x32xf32>, vector<32x96xf32>, vector<2x96xf32> -> vector<2x96xf32>
    %158 = vector.extract_strided_slice %157 {offsets = [0, 0], sizes = [2, 64], strides = [1, 1]} : vector<2x96xf32> to vector<2x64xf32>
    %159 = arith.addf %155, %158 : vector<2x64xf32>
    %160 = arith.negf %159 : vector<2x64xf32>
    %161 = math.exp %160 : vector<2x64xf32>
    %cst_45 = arith.constant 1.000000e+00 : f32
    %162 = vector.broadcast %cst_45 : f32 to vector<2x64xf32>
    %163 = arith.addf %162, %161 : vector<2x64xf32>
    %164 = arith.divf %162, %163 : vector<2x64xf32>
    %165 = vector.extract_strided_slice %164 {offsets = [0, 0], sizes = [2, 32], strides = [1, 1]} : vector<2x64xf32> to vector<2x32xf32>
    %166 = vector.extract_strided_slice %164 {offsets = [0, 32], sizes = [2, 32], strides = [1, 1]} : vector<2x64xf32> to vector<2x32xf32>
    %167 = vector.extract_strided_slice %157 {offsets = [0, 64], sizes = [2, 32], strides = [1, 1]} : vector<2x96xf32> to vector<2x32xf32>
    %168 = arith.addf %167, %38 : vector<2x32xf32>
    %169 = arith.mulf %165, %168 : vector<2x32xf32>
    %170 = arith.addf %156, %169 : vector<2x32xf32>
    %171 = math.tanh %170 : vector<2x32xf32>
    %cst_46 = arith.constant 1.000000e+00 : f32
    %172 = vector.broadcast %cst_46 : f32 to vector<2x32xf32>
    %173 = arith.subf %172, %166 : vector<2x32xf32>
    %174 = arith.mulf %173, %171 : vector<2x32xf32>
    %175 = arith.mulf %166, %130 : vector<2x32xf32>
    %176 = arith.addf %174, %175 : vector<2x32xf32>
    %c4 = arith.constant 4 : index
    %c0_47 = arith.constant 0 : index
    %177 = vector.load %arg20[%c4, %c0_47] : memref<16x64xf32, #tpu.memory_space<vmem>>, vector<2x32xf32>
    tpu.vector_store %arg20[%c4, %c0_47], %154 {strides = array<i32>} : memref<16x64xf32, #tpu.memory_space<vmem>>, vector<2x32xf32>,
    %c10 = arith.constant 10 : index
    %c32_48 = arith.constant 32 : index
    %178 = vector.load %arg20[%c10, %c32_48] : memref<16x64xf32, #tpu.memory_space<vmem>>, vector<2x32xf32>
    tpu.vector_store %arg20[%c10, %c32_48], %176 {strides = array<i32>} : memref<16x64xf32, #tpu.memory_space<vmem>>, vector<2x32xf32>,
    %179 = vector.extract_strided_slice %19 {offsets = [6, 0], sizes = [2, 64], strides = [1, 1]} : vector<16x64xf32> to vector<2x64xf32>
    %180 = vector.extract_strided_slice %20 {offsets = [6, 0], sizes = [2, 32], strides = [1, 1]} : vector<16x32xf32> to vector<2x32xf32>
    %cst_49 = arith.constant dense<0.000000e+00> : vector<2x96xf32>
    %181 = tpu.matmul %154, %10, %cst_49 {dimension_numbers = #tpu.dot_dimension_numbers<[1], [0], [0], [1], [0, 0, 1, 1], [], []>} : vector<2x32xf32>, vector<32x96xf32>, vector<2x96xf32> -> vector<2x96xf32>
    %182 = vector.extract_strided_slice %181 {offsets = [0, 0], sizes = [2, 64], strides = [1, 1]} : vector<2x96xf32> to vector<2x64xf32>
    %183 = arith.addf %179, %182 : vector<2x64xf32>
    %184 = arith.negf %183 : vector<2x64xf32>
    %185 = math.exp %184 : vector<2x64xf32>
    %cst_50 = arith.constant 1.000000e+00 : f32
    %186 = vector.broadcast %cst_50 : f32 to vector<2x64xf32>
    %187 = arith.addf %186, %185 : vector<2x64xf32>
    %188 = arith.divf %186, %187 : vector<2x64xf32>
    %189 = vector.extract_strided_slice %188 {offsets = [0, 0], sizes = [2, 32], strides = [1, 1]} : vector<2x64xf32> to vector<2x32xf32>
    %190 = vector.extract_strided_slice %188 {offsets = [0, 32], sizes = [2, 32], strides = [1, 1]} : vector<2x64xf32> to vector<2x32xf32>
    %191 = vector.extract_strided_slice %181 {offsets = [0, 64], sizes = [2, 32], strides = [1, 1]} : vector<2x96xf32> to vector<2x32xf32>
    %192 = arith.addf %191, %23 : vector<2x32xf32>
    %193 = arith.mulf %189, %192 : vector<2x32xf32>
    %194 = arith.addf %180, %193 : vector<2x32xf32>
    %195 = math.tanh %194 : vector<2x32xf32>
    %cst_51 = arith.constant 1.000000e+00 : f32
    %196 = vector.broadcast %cst_51 : f32 to vector<2x32xf32>
    %197 = arith.subf %196, %190 : vector<2x32xf32>
    %198 = arith.mulf %197, %195 : vector<2x32xf32>
    %199 = arith.mulf %190, %154 : vector<2x32xf32>
    %200 = arith.addf %198, %199 : vector<2x32xf32>
    %201 = vector.extract_strided_slice %34 {offsets = [8, 0], sizes = [2, 64], strides = [1, 1]} : vector<16x64xf32> to vector<2x64xf32>
    %202 = vector.extract_strided_slice %35 {offsets = [8, 0], sizes = [2, 32], strides = [1, 1]} : vector<16x32xf32> to vector<2x32xf32>
    %cst_52 = arith.constant dense<0.000000e+00> : vector<2x96xf32>
    %203 = tpu.matmul %176, %25, %cst_52 {dimension_numbers = #tpu.dot_dimension_numbers<[1], [0], [0], [1], [0, 0, 1, 1], [], []>} : vector<2x32xf32>, vector<32x96xf32>, vector<2x96xf32> -> vector<2x96xf32>
    %204 = vector.extract_strided_slice %203 {offsets = [0, 0], sizes = [2, 64], strides = [1, 1]} : vector<2x96xf32> to vector<2x64xf32>
    %205 = arith.addf %201, %204 : vector<2x64xf32>
    %206 = arith.negf %205 : vector<2x64xf32>
    %207 = math.exp %206 : vector<2x64xf32>
    %cst_53 = arith.constant 1.000000e+00 : f32
    %208 = vector.broadcast %cst_53 : f32 to vector<2x64xf32>
    %209 = arith.addf %208, %207 : vector<2x64xf32>
    %210 = arith.divf %208, %209 : vector<2x64xf32>
    %211 = vector.extract_strided_slice %210 {offsets = [0, 0], sizes = [2, 32], strides = [1, 1]} : vector<2x64xf32> to vector<2x32xf32>
    %212 = vector.extract_strided_slice %210 {offsets = [0, 32], sizes = [2, 32], strides = [1, 1]} : vector<2x64xf32> to vector<2x32xf32>
    %213 = vector.extract_strided_slice %203 {offsets = [0, 64], sizes = [2, 32], strides = [1, 1]} : vector<2x96xf32> to vector<2x32xf32>
    %214 = arith.addf %213, %38 : vector<2x32xf32>
    %215 = arith.mulf %211, %214 : vector<2x32xf32>
    %216 = arith.addf %202, %215 : vector<2x32xf32>
    %217 = math.tanh %216 : vector<2x32xf32>
    %cst_54 = arith.constant 1.000000e+00 : f32
    %218 = vector.broadcast %cst_54 : f32 to vector<2x32xf32>
    %219 = arith.subf %218, %212 : vector<2x32xf32>
    %220 = arith.mulf %219, %217 : vector<2x32xf32>
    %221 = arith.mulf %212, %176 : vector<2x32xf32>
    %222 = arith.addf %220, %221 : vector<2x32xf32>
    %c6 = arith.constant 6 : index
    %c0_55 = arith.constant 0 : index
    %223 = vector.load %arg20[%c6, %c0_55] : memref<16x64xf32, #tpu.memory_space<vmem>>, vector<2x32xf32>
    tpu.vector_store %arg20[%c6, %c0_55], %200 {strides = array<i32>} : memref<16x64xf32, #tpu.memory_space<vmem>>, vector<2x32xf32>,
    %c8 = arith.constant 8 : index
    %c32_56 = arith.constant 32 : index
    %224 = vector.load %arg20[%c8, %c32_56] : memref<16x64xf32, #tpu.memory_space<vmem>>, vector<2x32xf32>
    tpu.vector_store %arg20[%c8, %c32_56], %222 {strides = array<i32>} : memref<16x64xf32, #tpu.memory_space<vmem>>, vector<2x32xf32>,
    %225 = vector.extract_strided_slice %19 {offsets = [8, 0], sizes = [2, 64], strides = [1, 1]} : vector<16x64xf32> to vector<2x64xf32>
    %226 = vector.extract_strided_slice %20 {offsets = [8, 0], sizes = [2, 32], strides = [1, 1]} : vector<16x32xf32> to vector<2x32xf32>
    %cst_57 = arith.constant dense<0.000000e+00> : vector<2x96xf32>
    %227 = tpu.matmul %200, %10, %cst_57 {dimension_numbers = #tpu.dot_dimension_numbers<[1], [0], [0], [1], [0, 0, 1, 1], [], []>} : vector<2x32xf32>, vector<32x96xf32>, vector<2x96xf32> -> vector<2x96xf32>
    %228 = vector.extract_strided_slice %227 {offsets = [0, 0], sizes = [2, 64], strides = [1, 1]} : vector<2x96xf32> to vector<2x64xf32>
    %229 = arith.addf %225, %228 : vector<2x64xf32>
    %230 = arith.negf %229 : vector<2x64xf32>
    %231 = math.exp %230 : vector<2x64xf32>
    %cst_58 = arith.constant 1.000000e+00 : f32
    %232 = vector.broadcast %cst_58 : f32 to vector<2x64xf32>
    %233 = arith.addf %232, %231 : vector<2x64xf32>
    %234 = arith.divf %232, %233 : vector<2x64xf32>
    %235 = vector.extract_strided_slice %234 {offsets = [0, 0], sizes = [2, 32], strides = [1, 1]} : vector<2x64xf32> to vector<2x32xf32>
    %236 = vector.extract_strided_slice %234 {offsets = [0, 32], sizes = [2, 32], strides = [1, 1]} : vector<2x64xf32> to vector<2x32xf32>
    %237 = vector.extract_strided_slice %227 {offsets = [0, 64], sizes = [2, 32], strides = [1, 1]} : vector<2x96xf32> to vector<2x32xf32>
    %238 = arith.addf %237, %23 : vector<2x32xf32>
    %239 = arith.mulf %235, %238 : vector<2x32xf32>
    %240 = arith.addf %226, %239 : vector<2x32xf32>
    %241 = math.tanh %240 : vector<2x32xf32>
    %cst_59 = arith.constant 1.000000e+00 : f32
    %242 = vector.broadcast %cst_59 : f32 to vector<2x32xf32>
    %243 = arith.subf %242, %236 : vector<2x32xf32>
    %244 = arith.mulf %243, %241 : vector<2x32xf32>
    %245 = arith.mulf %236, %200 : vector<2x32xf32>
    %246 = arith.addf %244, %245 : vector<2x32xf32>
    %247 = vector.extract_strided_slice %34 {offsets = [6, 0], sizes = [2, 64], strides = [1, 1]} : vector<16x64xf32> to vector<2x64xf32>
    %248 = vector.extract_strided_slice %35 {offsets = [6, 0], sizes = [2, 32], strides = [1, 1]} : vector<16x32xf32> to vector<2x32xf32>
    %cst_60 = arith.constant dense<0.000000e+00> : vector<2x96xf32>
    %249 = tpu.matmul %222, %25, %cst_60 {dimension_numbers = #tpu.dot_dimension_numbers<[1], [0], [0], [1], [0, 0, 1, 1], [], []>} : vector<2x32xf32>, vector<32x96xf32>, vector<2x96xf32> -> vector<2x96xf32>
    %250 = vector.extract_strided_slice %249 {offsets = [0, 0], sizes = [2, 64], strides = [1, 1]} : vector<2x96xf32> to vector<2x64xf32>
    %251 = arith.addf %247, %250 : vector<2x64xf32>
    %252 = arith.negf %251 : vector<2x64xf32>
    %253 = math.exp %252 : vector<2x64xf32>
    %cst_61 = arith.constant 1.000000e+00 : f32
    %254 = vector.broadcast %cst_61 : f32 to vector<2x64xf32>
    %255 = arith.addf %254, %253 : vector<2x64xf32>
    %256 = arith.divf %254, %255 : vector<2x64xf32>
    %257 = vector.extract_strided_slice %256 {offsets = [0, 0], sizes = [2, 32], strides = [1, 1]} : vector<2x64xf32> to vector<2x32xf32>
    %258 = vector.extract_strided_slice %256 {offsets = [0, 32], sizes = [2, 32], strides = [1, 1]} : vector<2x64xf32> to vector<2x32xf32>
    %259 = vector.extract_strided_slice %249 {offsets = [0, 64], sizes = [2, 32], strides = [1, 1]} : vector<2x96xf32> to vector<2x32xf32>
    %260 = arith.addf %259, %38 : vector<2x32xf32>
    %261 = arith.mulf %257, %260 : vector<2x32xf32>
    %262 = arith.addf %248, %261 : vector<2x32xf32>
    %263 = math.tanh %262 : vector<2x32xf32>
    %cst_62 = arith.constant 1.000000e+00 : f32
    %264 = vector.broadcast %cst_62 : f32 to vector<2x32xf32>
    %265 = arith.subf %264, %258 : vector<2x32xf32>
    %266 = arith.mulf %265, %263 : vector<2x32xf32>
    %267 = arith.mulf %258, %222 : vector<2x32xf32>
    %268 = arith.addf %266, %267 : vector<2x32xf32>
    %c8_63 = arith.constant 8 : index
    %c0_64 = arith.constant 0 : index
    %269 = vector.load %arg20[%c8_63, %c0_64] : memref<16x64xf32, #tpu.memory_space<vmem>>, vector<2x32xf32>
    tpu.vector_store %arg20[%c8_63, %c0_64], %246 {strides = array<i32>} : memref<16x64xf32, #tpu.memory_space<vmem>>, vector<2x32xf32>,
    %c6_65 = arith.constant 6 : index
    %c32_66 = arith.constant 32 : index
    %270 = vector.load %arg20[%c6_65, %c32_66] : memref<16x64xf32, #tpu.memory_space<vmem>>, vector<2x32xf32>
    tpu.vector_store %arg20[%c6_65, %c32_66], %268 {strides = array<i32>} : memref<16x64xf32, #tpu.memory_space<vmem>>, vector<2x32xf32>,
    %271 = vector.extract_strided_slice %19 {offsets = [10, 0], sizes = [2, 64], strides = [1, 1]} : vector<16x64xf32> to vector<2x64xf32>
    %272 = vector.extract_strided_slice %20 {offsets = [10, 0], sizes = [2, 32], strides = [1, 1]} : vector<16x32xf32> to vector<2x32xf32>
    %cst_67 = arith.constant dense<0.000000e+00> : vector<2x96xf32>
    %273 = tpu.matmul %246, %10, %cst_67 {dimension_numbers = #tpu.dot_dimension_numbers<[1], [0], [0], [1], [0, 0, 1, 1], [], []>} : vector<2x32xf32>, vector<32x96xf32>, vector<2x96xf32> -> vector<2x96xf32>
    %274 = vector.extract_strided_slice %273 {offsets = [0, 0], sizes = [2, 64], strides = [1, 1]} : vector<2x96xf32> to vector<2x64xf32>
    %275 = arith.addf %271, %274 : vector<2x64xf32>
    %276 = arith.negf %275 : vector<2x64xf32>
    %277 = math.exp %276 : vector<2x64xf32>
    %cst_68 = arith.constant 1.000000e+00 : f32
    %278 = vector.broadcast %cst_68 : f32 to vector<2x64xf32>
    %279 = arith.addf %278, %277 : vector<2x64xf32>
    %280 = arith.divf %278, %279 : vector<2x64xf32>
    %281 = vector.extract_strided_slice %280 {offsets = [0, 0], sizes = [2, 32], strides = [1, 1]} : vector<2x64xf32> to vector<2x32xf32>
    %282 = vector.extract_strided_slice %280 {offsets = [0, 32], sizes = [2, 32], strides = [1, 1]} : vector<2x64xf32> to vector<2x32xf32>
    %283 = vector.extract_strided_slice %273 {offsets = [0, 64], sizes = [2, 32], strides = [1, 1]} : vector<2x96xf32> to vector<2x32xf32>
    %284 = arith.addf %283, %23 : vector<2x32xf32>
    %285 = arith.mulf %281, %284 : vector<2x32xf32>
    %286 = arith.addf %272, %285 : vector<2x32xf32>
    %287 = math.tanh %286 : vector<2x32xf32>
    %cst_69 = arith.constant 1.000000e+00 : f32
    %288 = vector.broadcast %cst_69 : f32 to vector<2x32xf32>
    %289 = arith.subf %288, %282 : vector<2x32xf32>
    %290 = arith.mulf %289, %287 : vector<2x32xf32>
    %291 = arith.mulf %282, %246 : vector<2x32xf32>
    %292 = arith.addf %290, %291 : vector<2x32xf32>
    %293 = vector.extract_strided_slice %34 {offsets = [4, 0], sizes = [2, 64], strides = [1, 1]} : vector<16x64xf32> to vector<2x64xf32>
    %294 = vector.extract_strided_slice %35 {offsets = [4, 0], sizes = [2, 32], strides = [1, 1]} : vector<16x32xf32> to vector<2x32xf32>
    %cst_70 = arith.constant dense<0.000000e+00> : vector<2x96xf32>
    %295 = tpu.matmul %268, %25, %cst_70 {dimension_numbers = #tpu.dot_dimension_numbers<[1], [0], [0], [1], [0, 0, 1, 1], [], []>} : vector<2x32xf32>, vector<32x96xf32>, vector<2x96xf32> -> vector<2x96xf32>
    %296 = vector.extract_strided_slice %295 {offsets = [0, 0], sizes = [2, 64], strides = [1, 1]} : vector<2x96xf32> to vector<2x64xf32>
    %297 = arith.addf %293, %296 : vector<2x64xf32>
    %298 = arith.negf %297 : vector<2x64xf32>
    %299 = math.exp %298 : vector<2x64xf32>
    %cst_71 = arith.constant 1.000000e+00 : f32
    %300 = vector.broadcast %cst_71 : f32 to vector<2x64xf32>
    %301 = arith.addf %300, %299 : vector<2x64xf32>
    %302 = arith.divf %300, %301 : vector<2x64xf32>
    %303 = vector.extract_strided_slice %302 {offsets = [0, 0], sizes = [2, 32], strides = [1, 1]} : vector<2x64xf32> to vector<2x32xf32>
    %304 = vector.extract_strided_slice %302 {offsets = [0, 32], sizes = [2, 32], strides = [1, 1]} : vector<2x64xf32> to vector<2x32xf32>
    %305 = vector.extract_strided_slice %295 {offsets = [0, 64], sizes = [2, 32], strides = [1, 1]} : vector<2x96xf32> to vector<2x32xf32>
    %306 = arith.addf %305, %38 : vector<2x32xf32>
    %307 = arith.mulf %303, %306 : vector<2x32xf32>
    %308 = arith.addf %294, %307 : vector<2x32xf32>
    %309 = math.tanh %308 : vector<2x32xf32>
    %cst_72 = arith.constant 1.000000e+00 : f32
    %310 = vector.broadcast %cst_72 : f32 to vector<2x32xf32>
    %311 = arith.subf %310, %304 : vector<2x32xf32>
    %312 = arith.mulf %311, %309 : vector<2x32xf32>
    %313 = arith.mulf %304, %268 : vector<2x32xf32>
    %314 = arith.addf %312, %313 : vector<2x32xf32>
    %c10_73 = arith.constant 10 : index
    %c0_74 = arith.constant 0 : index
    %315 = vector.load %arg20[%c10_73, %c0_74] : memref<16x64xf32, #tpu.memory_space<vmem>>, vector<2x32xf32>
    tpu.vector_store %arg20[%c10_73, %c0_74], %292 {strides = array<i32>} : memref<16x64xf32, #tpu.memory_space<vmem>>, vector<2x32xf32>,
    %c4_75 = arith.constant 4 : index
    %c32_76 = arith.constant 32 : index
    %316 = vector.load %arg20[%c4_75, %c32_76] : memref<16x64xf32, #tpu.memory_space<vmem>>, vector<2x32xf32>
    tpu.vector_store %arg20[%c4_75, %c32_76], %314 {strides = array<i32>} : memref<16x64xf32, #tpu.memory_space<vmem>>, vector<2x32xf32>,
    %317 = vector.extract_strided_slice %19 {offsets = [12, 0], sizes = [2, 64], strides = [1, 1]} : vector<16x64xf32> to vector<2x64xf32>
    %318 = vector.extract_strided_slice %20 {offsets = [12, 0], sizes = [2, 32], strides = [1, 1]} : vector<16x32xf32> to vector<2x32xf32>
    %cst_77 = arith.constant dense<0.000000e+00> : vector<2x96xf32>
    %319 = tpu.matmul %292, %10, %cst_77 {dimension_numbers = #tpu.dot_dimension_numbers<[1], [0], [0], [1], [0, 0, 1, 1], [], []>} : vector<2x32xf32>, vector<32x96xf32>, vector<2x96xf32> -> vector<2x96xf32>
    %320 = vector.extract_strided_slice %319 {offsets = [0, 0], sizes = [2, 64], strides = [1, 1]} : vector<2x96xf32> to vector<2x64xf32>
    %321 = arith.addf %317, %320 : vector<2x64xf32>
    %322 = arith.negf %321 : vector<2x64xf32>
    %323 = math.exp %322 : vector<2x64xf32>
    %cst_78 = arith.constant 1.000000e+00 : f32
    %324 = vector.broadcast %cst_78 : f32 to vector<2x64xf32>
    %325 = arith.addf %324, %323 : vector<2x64xf32>
    %326 = arith.divf %324, %325 : vector<2x64xf32>
    %327 = vector.extract_strided_slice %326 {offsets = [0, 0], sizes = [2, 32], strides = [1, 1]} : vector<2x64xf32> to vector<2x32xf32>
    %328 = vector.extract_strided_slice %326 {offsets = [0, 32], sizes = [2, 32], strides = [1, 1]} : vector<2x64xf32> to vector<2x32xf32>
    %329 = vector.extract_strided_slice %319 {offsets = [0, 64], sizes = [2, 32], strides = [1, 1]} : vector<2x96xf32> to vector<2x32xf32>
    %330 = arith.addf %329, %23 : vector<2x32xf32>
    %331 = arith.mulf %327, %330 : vector<2x32xf32>
    %332 = arith.addf %318, %331 : vector<2x32xf32>
    %333 = math.tanh %332 : vector<2x32xf32>
    %cst_79 = arith.constant 1.000000e+00 : f32
    %334 = vector.broadcast %cst_79 : f32 to vector<2x32xf32>
    %335 = arith.subf %334, %328 : vector<2x32xf32>
    %336 = arith.mulf %335, %333 : vector<2x32xf32>
    %337 = arith.mulf %328, %292 : vector<2x32xf32>
    %338 = arith.addf %336, %337 : vector<2x32xf32>
    %339 = vector.extract_strided_slice %34 {offsets = [2, 0], sizes = [2, 64], strides = [1, 1]} : vector<16x64xf32> to vector<2x64xf32>
    %340 = vector.extract_strided_slice %35 {offsets = [2, 0], sizes = [2, 32], strides = [1, 1]} : vector<16x32xf32> to vector<2x32xf32>
    %cst_80 = arith.constant dense<0.000000e+00> : vector<2x96xf32>
    %341 = tpu.matmul %314, %25, %cst_80 {dimension_numbers = #tpu.dot_dimension_numbers<[1], [0], [0], [1], [0, 0, 1, 1], [], []>} : vector<2x32xf32>, vector<32x96xf32>, vector<2x96xf32> -> vector<2x96xf32>
    %342 = vector.extract_strided_slice %341 {offsets = [0, 0], sizes = [2, 64], strides = [1, 1]} : vector<2x96xf32> to vector<2x64xf32>
    %343 = arith.addf %339, %342 : vector<2x64xf32>
    %344 = arith.negf %343 : vector<2x64xf32>
    %345 = math.exp %344 : vector<2x64xf32>
    %cst_81 = arith.constant 1.000000e+00 : f32
    %346 = vector.broadcast %cst_81 : f32 to vector<2x64xf32>
    %347 = arith.addf %346, %345 : vector<2x64xf32>
    %348 = arith.divf %346, %347 : vector<2x64xf32>
    %349 = vector.extract_strided_slice %348 {offsets = [0, 0], sizes = [2, 32], strides = [1, 1]} : vector<2x64xf32> to vector<2x32xf32>
    %350 = vector.extract_strided_slice %348 {offsets = [0, 32], sizes = [2, 32], strides = [1, 1]} : vector<2x64xf32> to vector<2x32xf32>
    %351 = vector.extract_strided_slice %341 {offsets = [0, 64], sizes = [2, 32], strides = [1, 1]} : vector<2x96xf32> to vector<2x32xf32>
    %352 = arith.addf %351, %38 : vector<2x32xf32>
    %353 = arith.mulf %349, %352 : vector<2x32xf32>
    %354 = arith.addf %340, %353 : vector<2x32xf32>
    %355 = math.tanh %354 : vector<2x32xf32>
    %cst_82 = arith.constant 1.000000e+00 : f32
    %356 = vector.broadcast %cst_82 : f32 to vector<2x32xf32>
    %357 = arith.subf %356, %350 : vector<2x32xf32>
    %358 = arith.mulf %357, %355 : vector<2x32xf32>
    %359 = arith.mulf %350, %314 : vector<2x32xf32>
    %360 = arith.addf %358, %359 : vector<2x32xf32>
    %c12_83 = arith.constant 12 : index
    %c0_84 = arith.constant 0 : index
    %361 = vector.load %arg20[%c12_83, %c0_84] : memref<16x64xf32, #tpu.memory_space<vmem>>, vector<2x32xf32>
    tpu.vector_store %arg20[%c12_83, %c0_84], %338 {strides = array<i32>} : memref<16x64xf32, #tpu.memory_space<vmem>>, vector<2x32xf32>,
    %c2_85 = arith.constant 2 : index
    %c32_86 = arith.constant 32 : index
    %362 = vector.load %arg20[%c2_85, %c32_86] : memref<16x64xf32, #tpu.memory_space<vmem>>, vector<2x32xf32>
    tpu.vector_store %arg20[%c2_85, %c32_86], %360 {strides = array<i32>} : memref<16x64xf32, #tpu.memory_space<vmem>>, vector<2x32xf32>,
    %363 = vector.extract_strided_slice %19 {offsets = [14, 0], sizes = [2, 64], strides = [1, 1]} : vector<16x64xf32> to vector<2x64xf32>
    %364 = vector.extract_strided_slice %20 {offsets = [14, 0], sizes = [2, 32], strides = [1, 1]} : vector<16x32xf32> to vector<2x32xf32>
    %cst_87 = arith.constant dense<0.000000e+00> : vector<2x96xf32>
    %365 = tpu.matmul %338, %10, %cst_87 {dimension_numbers = #tpu.dot_dimension_numbers<[1], [0], [0], [1], [0, 0, 1, 1], [], []>} : vector<2x32xf32>, vector<32x96xf32>, vector<2x96xf32> -> vector<2x96xf32>
    %366 = vector.extract_strided_slice %365 {offsets = [0, 0], sizes = [2, 64], strides = [1, 1]} : vector<2x96xf32> to vector<2x64xf32>
    %367 = arith.addf %363, %366 : vector<2x64xf32>
    %368 = arith.negf %367 : vector<2x64xf32>
    %369 = math.exp %368 : vector<2x64xf32>
    %cst_88 = arith.constant 1.000000e+00 : f32
    %370 = vector.broadcast %cst_88 : f32 to vector<2x64xf32>
    %371 = arith.addf %370, %369 : vector<2x64xf32>
    %372 = arith.divf %370, %371 : vector<2x64xf32>
    %373 = vector.extract_strided_slice %372 {offsets = [0, 0], sizes = [2, 32], strides = [1, 1]} : vector<2x64xf32> to vector<2x32xf32>
    %374 = vector.extract_strided_slice %372 {offsets = [0, 32], sizes = [2, 32], strides = [1, 1]} : vector<2x64xf32> to vector<2x32xf32>
    %375 = vector.extract_strided_slice %365 {offsets = [0, 64], sizes = [2, 32], strides = [1, 1]} : vector<2x96xf32> to vector<2x32xf32>
    %376 = arith.addf %375, %23 : vector<2x32xf32>
    %377 = arith.mulf %373, %376 : vector<2x32xf32>
    %378 = arith.addf %364, %377 : vector<2x32xf32>
    %379 = math.tanh %378 : vector<2x32xf32>
    %cst_89 = arith.constant 1.000000e+00 : f32
    %380 = vector.broadcast %cst_89 : f32 to vector<2x32xf32>
    %381 = arith.subf %380, %374 : vector<2x32xf32>
    %382 = arith.mulf %381, %379 : vector<2x32xf32>
    %383 = arith.mulf %374, %338 : vector<2x32xf32>
    %384 = arith.addf %382, %383 : vector<2x32xf32>
    %385 = vector.extract_strided_slice %34 {offsets = [0, 0], sizes = [2, 64], strides = [1, 1]} : vector<16x64xf32> to vector<2x64xf32>
    %386 = vector.extract_strided_slice %35 {offsets = [0, 0], sizes = [2, 32], strides = [1, 1]} : vector<16x32xf32> to vector<2x32xf32>
    %cst_90 = arith.constant dense<0.000000e+00> : vector<2x96xf32>
    %387 = tpu.matmul %360, %25, %cst_90 {dimension_numbers = #tpu.dot_dimension_numbers<[1], [0], [0], [1], [0, 0, 1, 1], [], []>} : vector<2x32xf32>, vector<32x96xf32>, vector<2x96xf32> -> vector<2x96xf32>
    %388 = vector.extract_strided_slice %387 {offsets = [0, 0], sizes = [2, 64], strides = [1, 1]} : vector<2x96xf32> to vector<2x64xf32>
    %389 = arith.addf %385, %388 : vector<2x64xf32>
    %390 = arith.negf %389 : vector<2x64xf32>
    %391 = math.exp %390 : vector<2x64xf32>
    %cst_91 = arith.constant 1.000000e+00 : f32
    %392 = vector.broadcast %cst_91 : f32 to vector<2x64xf32>
    %393 = arith.addf %392, %391 : vector<2x64xf32>
    %394 = arith.divf %392, %393 : vector<2x64xf32>
    %395 = vector.extract_strided_slice %394 {offsets = [0, 0], sizes = [2, 32], strides = [1, 1]} : vector<2x64xf32> to vector<2x32xf32>
    %396 = vector.extract_strided_slice %394 {offsets = [0, 32], sizes = [2, 32], strides = [1, 1]} : vector<2x64xf32> to vector<2x32xf32>
    %397 = vector.extract_strided_slice %387 {offsets = [0, 64], sizes = [2, 32], strides = [1, 1]} : vector<2x96xf32> to vector<2x32xf32>
    %398 = arith.addf %397, %38 : vector<2x32xf32>
    %399 = arith.mulf %395, %398 : vector<2x32xf32>
    %400 = arith.addf %386, %399 : vector<2x32xf32>
    %401 = math.tanh %400 : vector<2x32xf32>
    %cst_92 = arith.constant 1.000000e+00 : f32
    %402 = vector.broadcast %cst_92 : f32 to vector<2x32xf32>
    %403 = arith.subf %402, %396 : vector<2x32xf32>
    %404 = arith.mulf %403, %401 : vector<2x32xf32>
    %405 = arith.mulf %396, %360 : vector<2x32xf32>
    %406 = arith.addf %404, %405 : vector<2x32xf32>
    %c14_93 = arith.constant 14 : index
    %c0_94 = arith.constant 0 : index
    %407 = vector.load %arg20[%c14_93, %c0_94] : memref<16x64xf32, #tpu.memory_space<vmem>>, vector<2x32xf32>
    tpu.vector_store %arg20[%c14_93, %c0_94], %384 {strides = array<i32>} : memref<16x64xf32, #tpu.memory_space<vmem>>, vector<2x32xf32>,
    %c0_95 = arith.constant 0 : index
    %c32_96 = arith.constant 32 : index
    %408 = vector.load %arg20[%c0_95, %c32_96] : memref<16x64xf32, #tpu.memory_space<vmem>>, vector<2x32xf32>
    tpu.vector_store %arg20[%c0_95, %c32_96], %406 {strides = array<i32>} : memref<16x64xf32, #tpu.memory_space<vmem>>, vector<2x32xf32>,
    %c0_97 = arith.constant 0 : index
    %c0_98 = arith.constant 0 : index
    %c0_99 = arith.constant 0 : index
    %409 = vector.load %arg19[%c0_97, %c0_98, %c0_99] : memref<4x2x32xf32, #tpu.memory_space<vmem>>, vector<1x2x32xf32>
    %410 = vector.shape_cast %409 : vector<1x2x32xf32> to vector<2x32xf32>
    %411 = vector.shape_cast %384 : vector<2x32xf32> to vector<1x2x32xf32>
    tpu.vector_store %arg19[%c0_97, %c0_98, %c0_99], %411 {strides = array<i32>} : memref<4x2x32xf32, #tpu.memory_space<vmem>>, vector<1x2x32xf32>,
    %c1 = arith.constant 1 : index
    %c0_100 = arith.constant 0 : index
    %c0_101 = arith.constant 0 : index
    %412 = vector.load %arg19[%c1, %c0_100, %c0_101] : memref<4x2x32xf32, #tpu.memory_space<vmem>>, vector<1x2x32xf32>
    %413 = vector.shape_cast %412 : vector<1x2x32xf32> to vector<2x32xf32>
    %414 = vector.shape_cast %406 : vector<2x32xf32> to vector<1x2x32xf32>
    tpu.vector_store %arg19[%c1, %c0_100, %c0_101], %414 {strides = array<i32>} : memref<4x2x32xf32, #tpu.memory_space<vmem>>, vector<1x2x32xf32>,
    %c0_102 = arith.constant 0 : index
    %c0_103 = arith.constant 0 : index
    %415 = vector.load %arg20[%c0_102, %c0_103] : memref<16x64xf32, #tpu.memory_space<vmem>>, vector<16x64xf32>
    %c0_104 = arith.constant 0 : index
    %c0_105 = arith.constant 0 : index
    %416 = vector.load %arg10[%c0_104, %c0_105] : memref<64x96xf32, #tpu.memory_space<vmem>>, vector<64x96xf32>
    %c0_106 = arith.constant 0 : index
    %c0_107 = arith.constant 0 : index
    %417 = vector.load %arg11[%c0_106, %c0_107] : memref<32x96xf32, #tpu.memory_space<vmem>>, vector<32x96xf32>
    %c0_108 = arith.constant 0 : index
    %c0_109 = arith.constant 0 : index
    %418 = vector.load %arg12[%c0_108, %c0_109] : memref<1x96xf32, #tpu.memory_space<vmem>>, vector<1x96xf32>
    %c0_110 = arith.constant 0 : index
    %c0_111 = arith.constant 0 : index
    %419 = vector.load %arg13[%c0_110, %c0_111] : memref<1x96xf32, #tpu.memory_space<vmem>>, vector<1x96xf32>
    %cst_112 = arith.constant dense<0.000000e+00> : vector<16x96xf32>
    %420 = tpu.matmul %415, %416, %cst_112 {dimension_numbers = #tpu.dot_dimension_numbers<[1], [0], [0], [1], [0, 0, 1, 1], [], []>} : vector<16x64xf32>, vector<64x96xf32>, vector<16x96xf32> -> vector<16x96xf32>
    %421 = vector.broadcast %418 : vector<1x96xf32> to vector<16x96xf32>
    %422 = arith.addf %420, %421 : vector<16x96xf32>
    %423 = vector.extract_strided_slice %422 {offsets = [0, 0], sizes = [16, 64], strides = [1, 1]} : vector<16x96xf32> to vector<16x64xf32>
    %424 = vector.extract_strided_slice %419 {offsets = [0, 0], sizes = [1, 64], strides = [1, 1]} : vector<1x96xf32> to vector<1x64xf32>
    %425 = vector.broadcast %424 : vector<1x64xf32> to vector<16x64xf32>
    %426 = arith.addf %423, %425 : vector<16x64xf32>
    %427 = vector.extract_strided_slice %422 {offsets = [0, 64], sizes = [16, 32], strides = [1, 1]} : vector<16x96xf32> to vector<16x32xf32>
    %428 = vector.extract_strided_slice %419 {offsets = [0, 64], sizes = [1, 32], strides = [1, 1]} : vector<1x96xf32> to vector<1x32xf32>
    %429 = vector.shape_cast %428 : vector<1x32xf32> to vector<1x32xf32>
    %430 = vector.broadcast %429 : vector<1x32xf32> to vector<2x32xf32>
    %c0_113 = arith.constant 0 : index
    %c0_114 = arith.constant 0 : index
    %431 = vector.load %arg14[%c0_113, %c0_114] : memref<64x96xf32, #tpu.memory_space<vmem>>, vector<64x96xf32>
    %c0_115 = arith.constant 0 : index
    %c0_116 = arith.constant 0 : index
    %432 = vector.load %arg15[%c0_115, %c0_116] : memref<32x96xf32, #tpu.memory_space<vmem>>, vector<32x96xf32>
    %c0_117 = arith.constant 0 : index
    %c0_118 = arith.constant 0 : index
    %433 = vector.load %arg16[%c0_117, %c0_118] : memref<1x96xf32, #tpu.memory_space<vmem>>, vector<1x96xf32>
    %c0_119 = arith.constant 0 : index
    %c0_120 = arith.constant 0 : index
    %434 = vector.load %arg17[%c0_119, %c0_120] : memref<1x96xf32, #tpu.memory_space<vmem>>, vector<1x96xf32>
    %cst_121 = arith.constant dense<0.000000e+00> : vector<16x96xf32>
    %435 = tpu.matmul %415, %431, %cst_121 {dimension_numbers = #tpu.dot_dimension_numbers<[1], [0], [0], [1], [0, 0, 1, 1], [], []>} : vector<16x64xf32>, vector<64x96xf32>, vector<16x96xf32> -> vector<16x96xf32>
    %436 = vector.broadcast %433 : vector<1x96xf32> to vector<16x96xf32>
    %437 = arith.addf %435, %436 : vector<16x96xf32>
    %438 = vector.extract_strided_slice %437 {offsets = [0, 0], sizes = [16, 64], strides = [1, 1]} : vector<16x96xf32> to vector<16x64xf32>
    %439 = vector.extract_strided_slice %434 {offsets = [0, 0], sizes = [1, 64], strides = [1, 1]} : vector<1x96xf32> to vector<1x64xf32>
    %440 = vector.broadcast %439 : vector<1x64xf32> to vector<16x64xf32>
    %441 = arith.addf %438, %440 : vector<16x64xf32>
    %442 = vector.extract_strided_slice %437 {offsets = [0, 64], sizes = [16, 32], strides = [1, 1]} : vector<16x96xf32> to vector<16x32xf32>
    %443 = vector.extract_strided_slice %434 {offsets = [0, 64], sizes = [1, 32], strides = [1, 1]} : vector<1x96xf32> to vector<1x32xf32>
    %444 = vector.shape_cast %443 : vector<1x32xf32> to vector<1x32xf32>
    %445 = vector.broadcast %444 : vector<1x32xf32> to vector<2x32xf32>
    %cst_122 = arith.constant 0.000000e+00 : f32
    %446 = vector.broadcast %cst_122 : f32 to vector<2x32xf32>
    %cst_123 = arith.constant 0.000000e+00 : f32
    %447 = vector.broadcast %cst_123 : f32 to vector<2x32xf32>
    %448 = vector.extract_strided_slice %426 {offsets = [0, 0], sizes = [2, 64], strides = [1, 1]} : vector<16x64xf32> to vector<2x64xf32>
    %449 = vector.extract_strided_slice %427 {offsets = [0, 0], sizes = [2, 32], strides = [1, 1]} : vector<16x32xf32> to vector<2x32xf32>
    %cst_124 = arith.constant dense<0.000000e+00> : vector<2x96xf32>
    %450 = tpu.matmul %446, %417, %cst_124 {dimension_numbers = #tpu.dot_dimension_numbers<[1], [0], [0], [1], [0, 0, 1, 1], [], []>} : vector<2x32xf32>, vector<32x96xf32>, vector<2x96xf32> -> vector<2x96xf32>
    %451 = vector.extract_strided_slice %450 {offsets = [0, 0], sizes = [2, 64], strides = [1, 1]} : vector<2x96xf32> to vector<2x64xf32>
    %452 = arith.addf %448, %451 : vector<2x64xf32>
    %453 = arith.negf %452 : vector<2x64xf32>
    %454 = math.exp %453 : vector<2x64xf32>
    %cst_125 = arith.constant 1.000000e+00 : f32
    %455 = vector.broadcast %cst_125 : f32 to vector<2x64xf32>
    %456 = arith.addf %455, %454 : vector<2x64xf32>
    %457 = arith.divf %455, %456 : vector<2x64xf32>
    %458 = vector.extract_strided_slice %457 {offsets = [0, 0], sizes = [2, 32], strides = [1, 1]} : vector<2x64xf32> to vector<2x32xf32>
    %459 = vector.extract_strided_slice %457 {offsets = [0, 32], sizes = [2, 32], strides = [1, 1]} : vector<2x64xf32> to vector<2x32xf32>
    %460 = vector.extract_strided_slice %450 {offsets = [0, 64], sizes = [2, 32], strides = [1, 1]} : vector<2x96xf32> to vector<2x32xf32>
    %461 = arith.addf %460, %430 : vector<2x32xf32>
    %462 = arith.mulf %458, %461 : vector<2x32xf32>
    %463 = arith.addf %449, %462 : vector<2x32xf32>
    %464 = math.tanh %463 : vector<2x32xf32>
    %cst_126 = arith.constant 1.000000e+00 : f32
    %465 = vector.broadcast %cst_126 : f32 to vector<2x32xf32>
    %466 = arith.subf %465, %459 : vector<2x32xf32>
    %467 = arith.mulf %466, %464 : vector<2x32xf32>
    %468 = arith.mulf %459, %446 : vector<2x32xf32>
    %469 = arith.addf %467, %468 : vector<2x32xf32>
    %470 = vector.extract_strided_slice %441 {offsets = [14, 0], sizes = [2, 64], strides = [1, 1]} : vector<16x64xf32> to vector<2x64xf32>
    %471 = vector.extract_strided_slice %442 {offsets = [14, 0], sizes = [2, 32], strides = [1, 1]} : vector<16x32xf32> to vector<2x32xf32>
    %cst_127 = arith.constant dense<0.000000e+00> : vector<2x96xf32>
    %472 = tpu.matmul %447, %432, %cst_127 {dimension_numbers = #tpu.dot_dimension_numbers<[1], [0], [0], [1], [0, 0, 1, 1], [], []>} : vector<2x32xf32>, vector<32x96xf32>, vector<2x96xf32> -> vector<2x96xf32>
    %473 = vector.extract_strided_slice %472 {offsets = [0, 0], sizes = [2, 64], strides = [1, 1]} : vector<2x96xf32> to vector<2x64xf32>
    %474 = arith.addf %470, %473 : vector<2x64xf32>
    %475 = arith.negf %474 : vector<2x64xf32>
    %476 = math.exp %475 : vector<2x64xf32>
    %cst_128 = arith.constant 1.000000e+00 : f32
    %477 = vector.broadcast %cst_128 : f32 to vector<2x64xf32>
    %478 = arith.addf %477, %476 : vector<2x64xf32>
    %479 = arith.divf %477, %478 : vector<2x64xf32>
    %480 = vector.extract_strided_slice %479 {offsets = [0, 0], sizes = [2, 32], strides = [1, 1]} : vector<2x64xf32> to vector<2x32xf32>
    %481 = vector.extract_strided_slice %479 {offsets = [0, 32], sizes = [2, 32], strides = [1, 1]} : vector<2x64xf32> to vector<2x32xf32>
    %482 = vector.extract_strided_slice %472 {offsets = [0, 64], sizes = [2, 32], strides = [1, 1]} : vector<2x96xf32> to vector<2x32xf32>
    %483 = arith.addf %482, %445 : vector<2x32xf32>
    %484 = arith.mulf %480, %483 : vector<2x32xf32>
    %485 = arith.addf %471, %484 : vector<2x32xf32>
    %486 = math.tanh %485 : vector<2x32xf32>
    %cst_129 = arith.constant 1.000000e+00 : f32
    %487 = vector.broadcast %cst_129 : f32 to vector<2x32xf32>
    %488 = arith.subf %487, %481 : vector<2x32xf32>
    %489 = arith.mulf %488, %486 : vector<2x32xf32>
    %490 = arith.mulf %481, %447 : vector<2x32xf32>
    %491 = arith.addf %489, %490 : vector<2x32xf32>
    %c0_130 = arith.constant 0 : index
    %c0_131 = arith.constant 0 : index
    %492 = vector.load %arg18[%c0_130, %c0_131] : memref<16x64xf32, #tpu.memory_space<vmem>>, vector<2x32xf32>
    tpu.vector_store %arg18[%c0_130, %c0_131], %469 {strides = array<i32>} : memref<16x64xf32, #tpu.memory_space<vmem>>, vector<2x32xf32>,
    %c14_132 = arith.constant 14 : index
    %c32_133 = arith.constant 32 : index
    %493 = vector.load %arg18[%c14_132, %c32_133] : memref<16x64xf32, #tpu.memory_space<vmem>>, vector<2x32xf32>
    tpu.vector_store %arg18[%c14_132, %c32_133], %491 {strides = array<i32>} : memref<16x64xf32, #tpu.memory_space<vmem>>, vector<2x32xf32>,
    %494 = vector.extract_strided_slice %426 {offsets = [2, 0], sizes = [2, 64], strides = [1, 1]} : vector<16x64xf32> to vector<2x64xf32>
    %495 = vector.extract_strided_slice %427 {offsets = [2, 0], sizes = [2, 32], strides = [1, 1]} : vector<16x32xf32> to vector<2x32xf32>
    %cst_134 = arith.constant dense<0.000000e+00> : vector<2x96xf32>
    %496 = tpu.matmul %469, %417, %cst_134 {dimension_numbers = #tpu.dot_dimension_numbers<[1], [0], [0], [1], [0, 0, 1, 1], [], []>} : vector<2x32xf32>, vector<32x96xf32>, vector<2x96xf32> -> vector<2x96xf32>
    %497 = vector.extract_strided_slice %496 {offsets = [0, 0], sizes = [2, 64], strides = [1, 1]} : vector<2x96xf32> to vector<2x64xf32>
    %498 = arith.addf %494, %497 : vector<2x64xf32>
    %499 = arith.negf %498 : vector<2x64xf32>
    %500 = math.exp %499 : vector<2x64xf32>
    %cst_135 = arith.constant 1.000000e+00 : f32
    %501 = vector.broadcast %cst_135 : f32 to vector<2x64xf32>
    %502 = arith.addf %501, %500 : vector<2x64xf32>
    %503 = arith.divf %501, %502 : vector<2x64xf32>
    %504 = vector.extract_strided_slice %503 {offsets = [0, 0], sizes = [2, 32], strides = [1, 1]} : vector<2x64xf32> to vector<2x32xf32>
    %505 = vector.extract_strided_slice %503 {offsets = [0, 32], sizes = [2, 32], strides = [1, 1]} : vector<2x64xf32> to vector<2x32xf32>
    %506 = vector.extract_strided_slice %496 {offsets = [0, 64], sizes = [2, 32], strides = [1, 1]} : vector<2x96xf32> to vector<2x32xf32>
    %507 = arith.addf %506, %430 : vector<2x32xf32>
    %508 = arith.mulf %504, %507 : vector<2x32xf32>
    %509 = arith.addf %495, %508 : vector<2x32xf32>
    %510 = math.tanh %509 : vector<2x32xf32>
    %cst_136 = arith.constant 1.000000e+00 : f32
    %511 = vector.broadcast %cst_136 : f32 to vector<2x32xf32>
    %512 = arith.subf %511, %505 : vector<2x32xf32>
    %513 = arith.mulf %512, %510 : vector<2x32xf32>
    %514 = arith.mulf %505, %469 : vector<2x32xf32>
    %515 = arith.addf %513, %514 : vector<2x32xf32>
    %516 = vector.extract_strided_slice %441 {offsets = [12, 0], sizes = [2, 64], strides = [1, 1]} : vector<16x64xf32> to vector<2x64xf32>
    %517 = vector.extract_strided_slice %442 {offsets = [12, 0], sizes = [2, 32], strides = [1, 1]} : vector<16x32xf32> to vector<2x32xf32>
    %cst_137 = arith.constant dense<0.000000e+00> : vector<2x96xf32>
    %518 = tpu.matmul %491, %432, %cst_137 {dimension_numbers = #tpu.dot_dimension_numbers<[1], [0], [0], [1], [0, 0, 1, 1], [], []>} : vector<2x32xf32>, vector<32x96xf32>, vector<2x96xf32> -> vector<2x96xf32>
    %519 = vector.extract_strided_slice %518 {offsets = [0, 0], sizes = [2, 64], strides = [1, 1]} : vector<2x96xf32> to vector<2x64xf32>
    %520 = arith.addf %516, %519 : vector<2x64xf32>
    %521 = arith.negf %520 : vector<2x64xf32>
    %522 = math.exp %521 : vector<2x64xf32>
    %cst_138 = arith.constant 1.000000e+00 : f32
    %523 = vector.broadcast %cst_138 : f32 to vector<2x64xf32>
    %524 = arith.addf %523, %522 : vector<2x64xf32>
    %525 = arith.divf %523, %524 : vector<2x64xf32>
    %526 = vector.extract_strided_slice %525 {offsets = [0, 0], sizes = [2, 32], strides = [1, 1]} : vector<2x64xf32> to vector<2x32xf32>
    %527 = vector.extract_strided_slice %525 {offsets = [0, 32], sizes = [2, 32], strides = [1, 1]} : vector<2x64xf32> to vector<2x32xf32>
    %528 = vector.extract_strided_slice %518 {offsets = [0, 64], sizes = [2, 32], strides = [1, 1]} : vector<2x96xf32> to vector<2x32xf32>
    %529 = arith.addf %528, %445 : vector<2x32xf32>
    %530 = arith.mulf %526, %529 : vector<2x32xf32>
    %531 = arith.addf %517, %530 : vector<2x32xf32>
    %532 = math.tanh %531 : vector<2x32xf32>
    %cst_139 = arith.constant 1.000000e+00 : f32
    %533 = vector.broadcast %cst_139 : f32 to vector<2x32xf32>
    %534 = arith.subf %533, %527 : vector<2x32xf32>
    %535 = arith.mulf %534, %532 : vector<2x32xf32>
    %536 = arith.mulf %527, %491 : vector<2x32xf32>
    %537 = arith.addf %535, %536 : vector<2x32xf32>
    %c2_140 = arith.constant 2 : index
    %c0_141 = arith.constant 0 : index
    %538 = vector.load %arg18[%c2_140, %c0_141] : memref<16x64xf32, #tpu.memory_space<vmem>>, vector<2x32xf32>
    tpu.vector_store %arg18[%c2_140, %c0_141], %515 {strides = array<i32>} : memref<16x64xf32, #tpu.memory_space<vmem>>, vector<2x32xf32>,
    %c12_142 = arith.constant 12 : index
    %c32_143 = arith.constant 32 : index
    %539 = vector.load %arg18[%c12_142, %c32_143] : memref<16x64xf32, #tpu.memory_space<vmem>>, vector<2x32xf32>
    tpu.vector_store %arg18[%c12_142, %c32_143], %537 {strides = array<i32>} : memref<16x64xf32, #tpu.memory_space<vmem>>, vector<2x32xf32>,
    %540 = vector.extract_strided_slice %426 {offsets = [4, 0], sizes = [2, 64], strides = [1, 1]} : vector<16x64xf32> to vector<2x64xf32>
    %541 = vector.extract_strided_slice %427 {offsets = [4, 0], sizes = [2, 32], strides = [1, 1]} : vector<16x32xf32> to vector<2x32xf32>
    %cst_144 = arith.constant dense<0.000000e+00> : vector<2x96xf32>
    %542 = tpu.matmul %515, %417, %cst_144 {dimension_numbers = #tpu.dot_dimension_numbers<[1], [0], [0], [1], [0, 0, 1, 1], [], []>} : vector<2x32xf32>, vector<32x96xf32>, vector<2x96xf32> -> vector<2x96xf32>
    %543 = vector.extract_strided_slice %542 {offsets = [0, 0], sizes = [2, 64], strides = [1, 1]} : vector<2x96xf32> to vector<2x64xf32>
    %544 = arith.addf %540, %543 : vector<2x64xf32>
    %545 = arith.negf %544 : vector<2x64xf32>
    %546 = math.exp %545 : vector<2x64xf32>
    %cst_145 = arith.constant 1.000000e+00 : f32
    %547 = vector.broadcast %cst_145 : f32 to vector<2x64xf32>
    %548 = arith.addf %547, %546 : vector<2x64xf32>
    %549 = arith.divf %547, %548 : vector<2x64xf32>
    %550 = vector.extract_strided_slice %549 {offsets = [0, 0], sizes = [2, 32], strides = [1, 1]} : vector<2x64xf32> to vector<2x32xf32>
    %551 = vector.extract_strided_slice %549 {offsets = [0, 32], sizes = [2, 32], strides = [1, 1]} : vector<2x64xf32> to vector<2x32xf32>
    %552 = vector.extract_strided_slice %542 {offsets = [0, 64], sizes = [2, 32], strides = [1, 1]} : vector<2x96xf32> to vector<2x32xf32>
    %553 = arith.addf %552, %430 : vector<2x32xf32>
    %554 = arith.mulf %550, %553 : vector<2x32xf32>
    %555 = arith.addf %541, %554 : vector<2x32xf32>
    %556 = math.tanh %555 : vector<2x32xf32>
    %cst_146 = arith.constant 1.000000e+00 : f32
    %557 = vector.broadcast %cst_146 : f32 to vector<2x32xf32>
    %558 = arith.subf %557, %551 : vector<2x32xf32>
    %559 = arith.mulf %558, %556 : vector<2x32xf32>
    %560 = arith.mulf %551, %515 : vector<2x32xf32>
    %561 = arith.addf %559, %560 : vector<2x32xf32>
    %562 = vector.extract_strided_slice %441 {offsets = [10, 0], sizes = [2, 64], strides = [1, 1]} : vector<16x64xf32> to vector<2x64xf32>
    %563 = vector.extract_strided_slice %442 {offsets = [10, 0], sizes = [2, 32], strides = [1, 1]} : vector<16x32xf32> to vector<2x32xf32>
    %cst_147 = arith.constant dense<0.000000e+00> : vector<2x96xf32>
    %564 = tpu.matmul %537, %432, %cst_147 {dimension_numbers = #tpu.dot_dimension_numbers<[1], [0], [0], [1], [0, 0, 1, 1], [], []>} : vector<2x32xf32>, vector<32x96xf32>, vector<2x96xf32> -> vector<2x96xf32>
    %565 = vector.extract_strided_slice %564 {offsets = [0, 0], sizes = [2, 64], strides = [1, 1]} : vector<2x96xf32> to vector<2x64xf32>
    %566 = arith.addf %562, %565 : vector<2x64xf32>
    %567 = arith.negf %566 : vector<2x64xf32>
    %568 = math.exp %567 : vector<2x64xf32>
    %cst_148 = arith.constant 1.000000e+00 : f32
    %569 = vector.broadcast %cst_148 : f32 to vector<2x64xf32>
    %570 = arith.addf %569, %568 : vector<2x64xf32>
    %571 = arith.divf %569, %570 : vector<2x64xf32>
    %572 = vector.extract_strided_slice %571 {offsets = [0, 0], sizes = [2, 32], strides = [1, 1]} : vector<2x64xf32> to vector<2x32xf32>
    %573 = vector.extract_strided_slice %571 {offsets = [0, 32], sizes = [2, 32], strides = [1, 1]} : vector<2x64xf32> to vector<2x32xf32>
    %574 = vector.extract_strided_slice %564 {offsets = [0, 64], sizes = [2, 32], strides = [1, 1]} : vector<2x96xf32> to vector<2x32xf32>
    %575 = arith.addf %574, %445 : vector<2x32xf32>
    %576 = arith.mulf %572, %575 : vector<2x32xf32>
    %577 = arith.addf %563, %576 : vector<2x32xf32>
    %578 = math.tanh %577 : vector<2x32xf32>
    %cst_149 = arith.constant 1.000000e+00 : f32
    %579 = vector.broadcast %cst_149 : f32 to vector<2x32xf32>
    %580 = arith.subf %579, %573 : vector<2x32xf32>
    %581 = arith.mulf %580, %578 : vector<2x32xf32>
    %582 = arith.mulf %573, %537 : vector<2x32xf32>
    %583 = arith.addf %581, %582 : vector<2x32xf32>
    %c4_150 = arith.constant 4 : index
    %c0_151 = arith.constant 0 : index
    %584 = vector.load %arg18[%c4_150, %c0_151] : memref<16x64xf32, #tpu.memory_space<vmem>>, vector<2x32xf32>
    tpu.vector_store %arg18[%c4_150, %c0_151], %561 {strides = array<i32>} : memref<16x64xf32, #tpu.memory_space<vmem>>, vector<2x32xf32>,
    %c10_152 = arith.constant 10 : index
    %c32_153 = arith.constant 32 : index
    %585 = vector.load %arg18[%c10_152, %c32_153] : memref<16x64xf32, #tpu.memory_space<vmem>>, vector<2x32xf32>
    tpu.vector_store %arg18[%c10_152, %c32_153], %583 {strides = array<i32>} : memref<16x64xf32, #tpu.memory_space<vmem>>, vector<2x32xf32>,
    %586 = vector.extract_strided_slice %426 {offsets = [6, 0], sizes = [2, 64], strides = [1, 1]} : vector<16x64xf32> to vector<2x64xf32>
    %587 = vector.extract_strided_slice %427 {offsets = [6, 0], sizes = [2, 32], strides = [1, 1]} : vector<16x32xf32> to vector<2x32xf32>
    %cst_154 = arith.constant dense<0.000000e+00> : vector<2x96xf32>
    %588 = tpu.matmul %561, %417, %cst_154 {dimension_numbers = #tpu.dot_dimension_numbers<[1], [0], [0], [1], [0, 0, 1, 1], [], []>} : vector<2x32xf32>, vector<32x96xf32>, vector<2x96xf32> -> vector<2x96xf32>
    %589 = vector.extract_strided_slice %588 {offsets = [0, 0], sizes = [2, 64], strides = [1, 1]} : vector<2x96xf32> to vector<2x64xf32>
    %590 = arith.addf %586, %589 : vector<2x64xf32>
    %591 = arith.negf %590 : vector<2x64xf32>
    %592 = math.exp %591 : vector<2x64xf32>
    %cst_155 = arith.constant 1.000000e+00 : f32
    %593 = vector.broadcast %cst_155 : f32 to vector<2x64xf32>
    %594 = arith.addf %593, %592 : vector<2x64xf32>
    %595 = arith.divf %593, %594 : vector<2x64xf32>
    %596 = vector.extract_strided_slice %595 {offsets = [0, 0], sizes = [2, 32], strides = [1, 1]} : vector<2x64xf32> to vector<2x32xf32>
    %597 = vector.extract_strided_slice %595 {offsets = [0, 32], sizes = [2, 32], strides = [1, 1]} : vector<2x64xf32> to vector<2x32xf32>
    %598 = vector.extract_strided_slice %588 {offsets = [0, 64], sizes = [2, 32], strides = [1, 1]} : vector<2x96xf32> to vector<2x32xf32>
    %599 = arith.addf %598, %430 : vector<2x32xf32>
    %600 = arith.mulf %596, %599 : vector<2x32xf32>
    %601 = arith.addf %587, %600 : vector<2x32xf32>
    %602 = math.tanh %601 : vector<2x32xf32>
    %cst_156 = arith.constant 1.000000e+00 : f32
    %603 = vector.broadcast %cst_156 : f32 to vector<2x32xf32>
    %604 = arith.subf %603, %597 : vector<2x32xf32>
    %605 = arith.mulf %604, %602 : vector<2x32xf32>
    %606 = arith.mulf %597, %561 : vector<2x32xf32>
    %607 = arith.addf %605, %606 : vector<2x32xf32>
    %608 = vector.extract_strided_slice %441 {offsets = [8, 0], sizes = [2, 64], strides = [1, 1]} : vector<16x64xf32> to vector<2x64xf32>
    %609 = vector.extract_strided_slice %442 {offsets = [8, 0], sizes = [2, 32], strides = [1, 1]} : vector<16x32xf32> to vector<2x32xf32>
    %cst_157 = arith.constant dense<0.000000e+00> : vector<2x96xf32>
    %610 = tpu.matmul %583, %432, %cst_157 {dimension_numbers = #tpu.dot_dimension_numbers<[1], [0], [0], [1], [0, 0, 1, 1], [], []>} : vector<2x32xf32>, vector<32x96xf32>, vector<2x96xf32> -> vector<2x96xf32>
    %611 = vector.extract_strided_slice %610 {offsets = [0, 0], sizes = [2, 64], strides = [1, 1]} : vector<2x96xf32> to vector<2x64xf32>
    %612 = arith.addf %608, %611 : vector<2x64xf32>
    %613 = arith.negf %612 : vector<2x64xf32>
    %614 = math.exp %613 : vector<2x64xf32>
    %cst_158 = arith.constant 1.000000e+00 : f32
    %615 = vector.broadcast %cst_158 : f32 to vector<2x64xf32>
    %616 = arith.addf %615, %614 : vector<2x64xf32>
    %617 = arith.divf %615, %616 : vector<2x64xf32>
    %618 = vector.extract_strided_slice %617 {offsets = [0, 0], sizes = [2, 32], strides = [1, 1]} : vector<2x64xf32> to vector<2x32xf32>
    %619 = vector.extract_strided_slice %617 {offsets = [0, 32], sizes = [2, 32], strides = [1, 1]} : vector<2x64xf32> to vector<2x32xf32>
    %620 = vector.extract_strided_slice %610 {offsets = [0, 64], sizes = [2, 32], strides = [1, 1]} : vector<2x96xf32> to vector<2x32xf32>
    %621 = arith.addf %620, %445 : vector<2x32xf32>
    %622 = arith.mulf %618, %621 : vector<2x32xf32>
    %623 = arith.addf %609, %622 : vector<2x32xf32>
    %624 = math.tanh %623 : vector<2x32xf32>
    %cst_159 = arith.constant 1.000000e+00 : f32
    %625 = vector.broadcast %cst_159 : f32 to vector<2x32xf32>
    %626 = arith.subf %625, %619 : vector<2x32xf32>
    %627 = arith.mulf %626, %624 : vector<2x32xf32>
    %628 = arith.mulf %619, %583 : vector<2x32xf32>
    %629 = arith.addf %627, %628 : vector<2x32xf32>
    %c6_160 = arith.constant 6 : index
    %c0_161 = arith.constant 0 : index
    %630 = vector.load %arg18[%c6_160, %c0_161] : memref<16x64xf32, #tpu.memory_space<vmem>>, vector<2x32xf32>
    tpu.vector_store %arg18[%c6_160, %c0_161], %607 {strides = array<i32>} : memref<16x64xf32, #tpu.memory_space<vmem>>, vector<2x32xf32>,
    %c8_162 = arith.constant 8 : index
    %c32_163 = arith.constant 32 : index
    %631 = vector.load %arg18[%c8_162, %c32_163] : memref<16x64xf32, #tpu.memory_space<vmem>>, vector<2x32xf32>
    tpu.vector_store %arg18[%c8_162, %c32_163], %629 {strides = array<i32>} : memref<16x64xf32, #tpu.memory_space<vmem>>, vector<2x32xf32>,
    %632 = vector.extract_strided_slice %426 {offsets = [8, 0], sizes = [2, 64], strides = [1, 1]} : vector<16x64xf32> to vector<2x64xf32>
    %633 = vector.extract_strided_slice %427 {offsets = [8, 0], sizes = [2, 32], strides = [1, 1]} : vector<16x32xf32> to vector<2x32xf32>
    %cst_164 = arith.constant dense<0.000000e+00> : vector<2x96xf32>
    %634 = tpu.matmul %607, %417, %cst_164 {dimension_numbers = #tpu.dot_dimension_numbers<[1], [0], [0], [1], [0, 0, 1, 1], [], []>} : vector<2x32xf32>, vector<32x96xf32>, vector<2x96xf32> -> vector<2x96xf32>
    %635 = vector.extract_strided_slice %634 {offsets = [0, 0], sizes = [2, 64], strides = [1, 1]} : vector<2x96xf32> to vector<2x64xf32>
    %636 = arith.addf %632, %635 : vector<2x64xf32>
    %637 = arith.negf %636 : vector<2x64xf32>
    %638 = math.exp %637 : vector<2x64xf32>
    %cst_165 = arith.constant 1.000000e+00 : f32
    %639 = vector.broadcast %cst_165 : f32 to vector<2x64xf32>
    %640 = arith.addf %639, %638 : vector<2x64xf32>
    %641 = arith.divf %639, %640 : vector<2x64xf32>
    %642 = vector.extract_strided_slice %641 {offsets = [0, 0], sizes = [2, 32], strides = [1, 1]} : vector<2x64xf32> to vector<2x32xf32>
    %643 = vector.extract_strided_slice %641 {offsets = [0, 32], sizes = [2, 32], strides = [1, 1]} : vector<2x64xf32> to vector<2x32xf32>
    %644 = vector.extract_strided_slice %634 {offsets = [0, 64], sizes = [2, 32], strides = [1, 1]} : vector<2x96xf32> to vector<2x32xf32>
    %645 = arith.addf %644, %430 : vector<2x32xf32>
    %646 = arith.mulf %642, %645 : vector<2x32xf32>
    %647 = arith.addf %633, %646 : vector<2x32xf32>
    %648 = math.tanh %647 : vector<2x32xf32>
    %cst_166 = arith.constant 1.000000e+00 : f32
    %649 = vector.broadcast %cst_166 : f32 to vector<2x32xf32>
    %650 = arith.subf %649, %643 : vector<2x32xf32>
    %651 = arith.mulf %650, %648 : vector<2x32xf32>
    %652 = arith.mulf %643, %607 : vector<2x32xf32>
    %653 = arith.addf %651, %652 : vector<2x32xf32>
    %654 = vector.extract_strided_slice %441 {offsets = [6, 0], sizes = [2, 64], strides = [1, 1]} : vector<16x64xf32> to vector<2x64xf32>
    %655 = vector.extract_strided_slice %442 {offsets = [6, 0], sizes = [2, 32], strides = [1, 1]} : vector<16x32xf32> to vector<2x32xf32>
    %cst_167 = arith.constant dense<0.000000e+00> : vector<2x96xf32>
    %656 = tpu.matmul %629, %432, %cst_167 {dimension_numbers = #tpu.dot_dimension_numbers<[1], [0], [0], [1], [0, 0, 1, 1], [], []>} : vector<2x32xf32>, vector<32x96xf32>, vector<2x96xf32> -> vector<2x96xf32>
    %657 = vector.extract_strided_slice %656 {offsets = [0, 0], sizes = [2, 64], strides = [1, 1]} : vector<2x96xf32> to vector<2x64xf32>
    %658 = arith.addf %654, %657 : vector<2x64xf32>
    %659 = arith.negf %658 : vector<2x64xf32>
    %660 = math.exp %659 : vector<2x64xf32>
    %cst_168 = arith.constant 1.000000e+00 : f32
    %661 = vector.broadcast %cst_168 : f32 to vector<2x64xf32>
    %662 = arith.addf %661, %660 : vector<2x64xf32>
    %663 = arith.divf %661, %662 : vector<2x64xf32>
    %664 = vector.extract_strided_slice %663 {offsets = [0, 0], sizes = [2, 32], strides = [1, 1]} : vector<2x64xf32> to vector<2x32xf32>
    %665 = vector.extract_strided_slice %663 {offsets = [0, 32], sizes = [2, 32], strides = [1, 1]} : vector<2x64xf32> to vector<2x32xf32>
    %666 = vector.extract_strided_slice %656 {offsets = [0, 64], sizes = [2, 32], strides = [1, 1]} : vector<2x96xf32> to vector<2x32xf32>
    %667 = arith.addf %666, %445 : vector<2x32xf32>
    %668 = arith.mulf %664, %667 : vector<2x32xf32>
    %669 = arith.addf %655, %668 : vector<2x32xf32>
    %670 = math.tanh %669 : vector<2x32xf32>
    %cst_169 = arith.constant 1.000000e+00 : f32
    %671 = vector.broadcast %cst_169 : f32 to vector<2x32xf32>
    %672 = arith.subf %671, %665 : vector<2x32xf32>
    %673 = arith.mulf %672, %670 : vector<2x32xf32>
    %674 = arith.mulf %665, %629 : vector<2x32xf32>
    %675 = arith.addf %673, %674 : vector<2x32xf32>
    %c8_170 = arith.constant 8 : index
    %c0_171 = arith.constant 0 : index
    %676 = vector.load %arg18[%c8_170, %c0_171] : memref<16x64xf32, #tpu.memory_space<vmem>>, vector<2x32xf32>
    tpu.vector_store %arg18[%c8_170, %c0_171], %653 {strides = array<i32>} : memref<16x64xf32, #tpu.memory_space<vmem>>, vector<2x32xf32>,
    %c6_172 = arith.constant 6 : index
    %c32_173 = arith.constant 32 : index
    %677 = vector.load %arg18[%c6_172, %c32_173] : memref<16x64xf32, #tpu.memory_space<vmem>>, vector<2x32xf32>
    tpu.vector_store %arg18[%c6_172, %c32_173], %675 {strides = array<i32>} : memref<16x64xf32, #tpu.memory_space<vmem>>, vector<2x32xf32>,
    %678 = vector.extract_strided_slice %426 {offsets = [10, 0], sizes = [2, 64], strides = [1, 1]} : vector<16x64xf32> to vector<2x64xf32>
    %679 = vector.extract_strided_slice %427 {offsets = [10, 0], sizes = [2, 32], strides = [1, 1]} : vector<16x32xf32> to vector<2x32xf32>
    %cst_174 = arith.constant dense<0.000000e+00> : vector<2x96xf32>
    %680 = tpu.matmul %653, %417, %cst_174 {dimension_numbers = #tpu.dot_dimension_numbers<[1], [0], [0], [1], [0, 0, 1, 1], [], []>} : vector<2x32xf32>, vector<32x96xf32>, vector<2x96xf32> -> vector<2x96xf32>
    %681 = vector.extract_strided_slice %680 {offsets = [0, 0], sizes = [2, 64], strides = [1, 1]} : vector<2x96xf32> to vector<2x64xf32>
    %682 = arith.addf %678, %681 : vector<2x64xf32>
    %683 = arith.negf %682 : vector<2x64xf32>
    %684 = math.exp %683 : vector<2x64xf32>
    %cst_175 = arith.constant 1.000000e+00 : f32
    %685 = vector.broadcast %cst_175 : f32 to vector<2x64xf32>
    %686 = arith.addf %685, %684 : vector<2x64xf32>
    %687 = arith.divf %685, %686 : vector<2x64xf32>
    %688 = vector.extract_strided_slice %687 {offsets = [0, 0], sizes = [2, 32], strides = [1, 1]} : vector<2x64xf32> to vector<2x32xf32>
    %689 = vector.extract_strided_slice %687 {offsets = [0, 32], sizes = [2, 32], strides = [1, 1]} : vector<2x64xf32> to vector<2x32xf32>
    %690 = vector.extract_strided_slice %680 {offsets = [0, 64], sizes = [2, 32], strides = [1, 1]} : vector<2x96xf32> to vector<2x32xf32>
    %691 = arith.addf %690, %430 : vector<2x32xf32>
    %692 = arith.mulf %688, %691 : vector<2x32xf32>
    %693 = arith.addf %679, %692 : vector<2x32xf32>
    %694 = math.tanh %693 : vector<2x32xf32>
    %cst_176 = arith.constant 1.000000e+00 : f32
    %695 = vector.broadcast %cst_176 : f32 to vector<2x32xf32>
    %696 = arith.subf %695, %689 : vector<2x32xf32>
    %697 = arith.mulf %696, %694 : vector<2x32xf32>
    %698 = arith.mulf %689, %653 : vector<2x32xf32>
    %699 = arith.addf %697, %698 : vector<2x32xf32>
    %700 = vector.extract_strided_slice %441 {offsets = [4, 0], sizes = [2, 64], strides = [1, 1]} : vector<16x64xf32> to vector<2x64xf32>
    %701 = vector.extract_strided_slice %442 {offsets = [4, 0], sizes = [2, 32], strides = [1, 1]} : vector<16x32xf32> to vector<2x32xf32>
    %cst_177 = arith.constant dense<0.000000e+00> : vector<2x96xf32>
    %702 = tpu.matmul %675, %432, %cst_177 {dimension_numbers = #tpu.dot_dimension_numbers<[1], [0], [0], [1], [0, 0, 1, 1], [], []>} : vector<2x32xf32>, vector<32x96xf32>, vector<2x96xf32> -> vector<2x96xf32>
    %703 = vector.extract_strided_slice %702 {offsets = [0, 0], sizes = [2, 64], strides = [1, 1]} : vector<2x96xf32> to vector<2x64xf32>
    %704 = arith.addf %700, %703 : vector<2x64xf32>
    %705 = arith.negf %704 : vector<2x64xf32>
    %706 = math.exp %705 : vector<2x64xf32>
    %cst_178 = arith.constant 1.000000e+00 : f32
    %707 = vector.broadcast %cst_178 : f32 to vector<2x64xf32>
    %708 = arith.addf %707, %706 : vector<2x64xf32>
    %709 = arith.divf %707, %708 : vector<2x64xf32>
    %710 = vector.extract_strided_slice %709 {offsets = [0, 0], sizes = [2, 32], strides = [1, 1]} : vector<2x64xf32> to vector<2x32xf32>
    %711 = vector.extract_strided_slice %709 {offsets = [0, 32], sizes = [2, 32], strides = [1, 1]} : vector<2x64xf32> to vector<2x32xf32>
    %712 = vector.extract_strided_slice %702 {offsets = [0, 64], sizes = [2, 32], strides = [1, 1]} : vector<2x96xf32> to vector<2x32xf32>
    %713 = arith.addf %712, %445 : vector<2x32xf32>
    %714 = arith.mulf %710, %713 : vector<2x32xf32>
    %715 = arith.addf %701, %714 : vector<2x32xf32>
    %716 = math.tanh %715 : vector<2x32xf32>
    %cst_179 = arith.constant 1.000000e+00 : f32
    %717 = vector.broadcast %cst_179 : f32 to vector<2x32xf32>
    %718 = arith.subf %717, %711 : vector<2x32xf32>
    %719 = arith.mulf %718, %716 : vector<2x32xf32>
    %720 = arith.mulf %711, %675 : vector<2x32xf32>
    %721 = arith.addf %719, %720 : vector<2x32xf32>
    %c10_180 = arith.constant 10 : index
    %c0_181 = arith.constant 0 : index
    %722 = vector.load %arg18[%c10_180, %c0_181] : memref<16x64xf32, #tpu.memory_space<vmem>>, vector<2x32xf32>
    tpu.vector_store %arg18[%c10_180, %c0_181], %699 {strides = array<i32>} : memref<16x64xf32, #tpu.memory_space<vmem>>, vector<2x32xf32>,
    %c4_182 = arith.constant 4 : index
    %c32_183 = arith.constant 32 : index
    %723 = vector.load %arg18[%c4_182, %c32_183] : memref<16x64xf32, #tpu.memory_space<vmem>>, vector<2x32xf32>
    tpu.vector_store %arg18[%c4_182, %c32_183], %721 {strides = array<i32>} : memref<16x64xf32, #tpu.memory_space<vmem>>, vector<2x32xf32>,
    %724 = vector.extract_strided_slice %426 {offsets = [12, 0], sizes = [2, 64], strides = [1, 1]} : vector<16x64xf32> to vector<2x64xf32>
    %725 = vector.extract_strided_slice %427 {offsets = [12, 0], sizes = [2, 32], strides = [1, 1]} : vector<16x32xf32> to vector<2x32xf32>
    %cst_184 = arith.constant dense<0.000000e+00> : vector<2x96xf32>
    %726 = tpu.matmul %699, %417, %cst_184 {dimension_numbers = #tpu.dot_dimension_numbers<[1], [0], [0], [1], [0, 0, 1, 1], [], []>} : vector<2x32xf32>, vector<32x96xf32>, vector<2x96xf32> -> vector<2x96xf32>
    %727 = vector.extract_strided_slice %726 {offsets = [0, 0], sizes = [2, 64], strides = [1, 1]} : vector<2x96xf32> to vector<2x64xf32>
    %728 = arith.addf %724, %727 : vector<2x64xf32>
    %729 = arith.negf %728 : vector<2x64xf32>
    %730 = math.exp %729 : vector<2x64xf32>
    %cst_185 = arith.constant 1.000000e+00 : f32
    %731 = vector.broadcast %cst_185 : f32 to vector<2x64xf32>
    %732 = arith.addf %731, %730 : vector<2x64xf32>
    %733 = arith.divf %731, %732 : vector<2x64xf32>
    %734 = vector.extract_strided_slice %733 {offsets = [0, 0], sizes = [2, 32], strides = [1, 1]} : vector<2x64xf32> to vector<2x32xf32>
    %735 = vector.extract_strided_slice %733 {offsets = [0, 32], sizes = [2, 32], strides = [1, 1]} : vector<2x64xf32> to vector<2x32xf32>
    %736 = vector.extract_strided_slice %726 {offsets = [0, 64], sizes = [2, 32], strides = [1, 1]} : vector<2x96xf32> to vector<2x32xf32>
    %737 = arith.addf %736, %430 : vector<2x32xf32>
    %738 = arith.mulf %734, %737 : vector<2x32xf32>
    %739 = arith.addf %725, %738 : vector<2x32xf32>
    %740 = math.tanh %739 : vector<2x32xf32>
    %cst_186 = arith.constant 1.000000e+00 : f32
    %741 = vector.broadcast %cst_186 : f32 to vector<2x32xf32>
    %742 = arith.subf %741, %735 : vector<2x32xf32>
    %743 = arith.mulf %742, %740 : vector<2x32xf32>
    %744 = arith.mulf %735, %699 : vector<2x32xf32>
    %745 = arith.addf %743, %744 : vector<2x32xf32>
    %746 = vector.extract_strided_slice %441 {offsets = [2, 0], sizes = [2, 64], strides = [1, 1]} : vector<16x64xf32> to vector<2x64xf32>
    %747 = vector.extract_strided_slice %442 {offsets = [2, 0], sizes = [2, 32], strides = [1, 1]} : vector<16x32xf32> to vector<2x32xf32>
    %cst_187 = arith.constant dense<0.000000e+00> : vector<2x96xf32>
    %748 = tpu.matmul %721, %432, %cst_187 {dimension_numbers = #tpu.dot_dimension_numbers<[1], [0], [0], [1], [0, 0, 1, 1], [], []>} : vector<2x32xf32>, vector<32x96xf32>, vector<2x96xf32> -> vector<2x96xf32>
    %749 = vector.extract_strided_slice %748 {offsets = [0, 0], sizes = [2, 64], strides = [1, 1]} : vector<2x96xf32> to vector<2x64xf32>
    %750 = arith.addf %746, %749 : vector<2x64xf32>
    %751 = arith.negf %750 : vector<2x64xf32>
    %752 = math.exp %751 : vector<2x64xf32>
    %cst_188 = arith.constant 1.000000e+00 : f32
    %753 = vector.broadcast %cst_188 : f32 to vector<2x64xf32>
    %754 = arith.addf %753, %752 : vector<2x64xf32>
    %755 = arith.divf %753, %754 : vector<2x64xf32>
    %756 = vector.extract_strided_slice %755 {offsets = [0, 0], sizes = [2, 32], strides = [1, 1]} : vector<2x64xf32> to vector<2x32xf32>
    %757 = vector.extract_strided_slice %755 {offsets = [0, 32], sizes = [2, 32], strides = [1, 1]} : vector<2x64xf32> to vector<2x32xf32>
    %758 = vector.extract_strided_slice %748 {offsets = [0, 64], sizes = [2, 32], strides = [1, 1]} : vector<2x96xf32> to vector<2x32xf32>
    %759 = arith.addf %758, %445 : vector<2x32xf32>
    %760 = arith.mulf %756, %759 : vector<2x32xf32>
    %761 = arith.addf %747, %760 : vector<2x32xf32>
    %762 = math.tanh %761 : vector<2x32xf32>
    %cst_189 = arith.constant 1.000000e+00 : f32
    %763 = vector.broadcast %cst_189 : f32 to vector<2x32xf32>
    %764 = arith.subf %763, %757 : vector<2x32xf32>
    %765 = arith.mulf %764, %762 : vector<2x32xf32>
    %766 = arith.mulf %757, %721 : vector<2x32xf32>
    %767 = arith.addf %765, %766 : vector<2x32xf32>
    %c12_190 = arith.constant 12 : index
    %c0_191 = arith.constant 0 : index
    %768 = vector.load %arg18[%c12_190, %c0_191] : memref<16x64xf32, #tpu.memory_space<vmem>>, vector<2x32xf32>
    tpu.vector_store %arg18[%c12_190, %c0_191], %745 {strides = array<i32>} : memref<16x64xf32, #tpu.memory_space<vmem>>, vector<2x32xf32>,
    %c2_192 = arith.constant 2 : index
    %c32_193 = arith.constant 32 : index
    %769 = vector.load %arg18[%c2_192, %c32_193] : memref<16x64xf32, #tpu.memory_space<vmem>>, vector<2x32xf32>
    tpu.vector_store %arg18[%c2_192, %c32_193], %767 {strides = array<i32>} : memref<16x64xf32, #tpu.memory_space<vmem>>, vector<2x32xf32>,
    %770 = vector.extract_strided_slice %426 {offsets = [14, 0], sizes = [2, 64], strides = [1, 1]} : vector<16x64xf32> to vector<2x64xf32>
    %771 = vector.extract_strided_slice %427 {offsets = [14, 0], sizes = [2, 32], strides = [1, 1]} : vector<16x32xf32> to vector<2x32xf32>
    %cst_194 = arith.constant dense<0.000000e+00> : vector<2x96xf32>
    %772 = tpu.matmul %745, %417, %cst_194 {dimension_numbers = #tpu.dot_dimension_numbers<[1], [0], [0], [1], [0, 0, 1, 1], [], []>} : vector<2x32xf32>, vector<32x96xf32>, vector<2x96xf32> -> vector<2x96xf32>
    %773 = vector.extract_strided_slice %772 {offsets = [0, 0], sizes = [2, 64], strides = [1, 1]} : vector<2x96xf32> to vector<2x64xf32>
    %774 = arith.addf %770, %773 : vector<2x64xf32>
    %775 = arith.negf %774 : vector<2x64xf32>
    %776 = math.exp %775 : vector<2x64xf32>
    %cst_195 = arith.constant 1.000000e+00 : f32
    %777 = vector.broadcast %cst_195 : f32 to vector<2x64xf32>
    %778 = arith.addf %777, %776 : vector<2x64xf32>
    %779 = arith.divf %777, %778 : vector<2x64xf32>
    %780 = vector.extract_strided_slice %779 {offsets = [0, 0], sizes = [2, 32], strides = [1, 1]} : vector<2x64xf32> to vector<2x32xf32>
    %781 = vector.extract_strided_slice %779 {offsets = [0, 32], sizes = [2, 32], strides = [1, 1]} : vector<2x64xf32> to vector<2x32xf32>
    %782 = vector.extract_strided_slice %772 {offsets = [0, 64], sizes = [2, 32], strides = [1, 1]} : vector<2x96xf32> to vector<2x32xf32>
    %783 = arith.addf %782, %430 : vector<2x32xf32>
    %784 = arith.mulf %780, %783 : vector<2x32xf32>
    %785 = arith.addf %771, %784 : vector<2x32xf32>
    %786 = math.tanh %785 : vector<2x32xf32>
    %cst_196 = arith.constant 1.000000e+00 : f32
    %787 = vector.broadcast %cst_196 : f32 to vector<2x32xf32>
    %788 = arith.subf %787, %781 : vector<2x32xf32>
    %789 = arith.mulf %788, %786 : vector<2x32xf32>
    %790 = arith.mulf %781, %745 : vector<2x32xf32>
    %791 = arith.addf %789, %790 : vector<2x32xf32>
    %792 = vector.extract_strided_slice %441 {offsets = [0, 0], sizes = [2, 64], strides = [1, 1]} : vector<16x64xf32> to vector<2x64xf32>
    %793 = vector.extract_strided_slice %442 {offsets = [0, 0], sizes = [2, 32], strides = [1, 1]} : vector<16x32xf32> to vector<2x32xf32>
    %cst_197 = arith.constant dense<0.000000e+00> : vector<2x96xf32>
    %794 = tpu.matmul %767, %432, %cst_197 {dimension_numbers = #tpu.dot_dimension_numbers<[1], [0], [0], [1], [0, 0, 1, 1], [], []>} : vector<2x32xf32>, vector<32x96xf32>, vector<2x96xf32> -> vector<2x96xf32>
    %795 = vector.extract_strided_slice %794 {offsets = [0, 0], sizes = [2, 64], strides = [1, 1]} : vector<2x96xf32> to vector<2x64xf32>
    %796 = arith.addf %792, %795 : vector<2x64xf32>
    %797 = arith.negf %796 : vector<2x64xf32>
    %798 = math.exp %797 : vector<2x64xf32>
    %cst_198 = arith.constant 1.000000e+00 : f32
    %799 = vector.broadcast %cst_198 : f32 to vector<2x64xf32>
    %800 = arith.addf %799, %798 : vector<2x64xf32>
    %801 = arith.divf %799, %800 : vector<2x64xf32>
    %802 = vector.extract_strided_slice %801 {offsets = [0, 0], sizes = [2, 32], strides = [1, 1]} : vector<2x64xf32> to vector<2x32xf32>
    %803 = vector.extract_strided_slice %801 {offsets = [0, 32], sizes = [2, 32], strides = [1, 1]} : vector<2x64xf32> to vector<2x32xf32>
    %804 = vector.extract_strided_slice %794 {offsets = [0, 64], sizes = [2, 32], strides = [1, 1]} : vector<2x96xf32> to vector<2x32xf32>
    %805 = arith.addf %804, %445 : vector<2x32xf32>
    %806 = arith.mulf %802, %805 : vector<2x32xf32>
    %807 = arith.addf %793, %806 : vector<2x32xf32>
    %808 = math.tanh %807 : vector<2x32xf32>
    %cst_199 = arith.constant 1.000000e+00 : f32
    %809 = vector.broadcast %cst_199 : f32 to vector<2x32xf32>
    %810 = arith.subf %809, %803 : vector<2x32xf32>
    %811 = arith.mulf %810, %808 : vector<2x32xf32>
    %812 = arith.mulf %803, %767 : vector<2x32xf32>
    %813 = arith.addf %811, %812 : vector<2x32xf32>
    %c14_200 = arith.constant 14 : index
    %c0_201 = arith.constant 0 : index
    %814 = vector.load %arg18[%c14_200, %c0_201] : memref<16x64xf32, #tpu.memory_space<vmem>>, vector<2x32xf32>
    tpu.vector_store %arg18[%c14_200, %c0_201], %791 {strides = array<i32>} : memref<16x64xf32, #tpu.memory_space<vmem>>, vector<2x32xf32>,
    %c0_202 = arith.constant 0 : index
    %c32_203 = arith.constant 32 : index
    %815 = vector.load %arg18[%c0_202, %c32_203] : memref<16x64xf32, #tpu.memory_space<vmem>>, vector<2x32xf32>
    tpu.vector_store %arg18[%c0_202, %c32_203], %813 {strides = array<i32>} : memref<16x64xf32, #tpu.memory_space<vmem>>, vector<2x32xf32>,
    %c2_204 = arith.constant 2 : index
    %c0_205 = arith.constant 0 : index
    %c0_206 = arith.constant 0 : index
    %816 = vector.load %arg19[%c2_204, %c0_205, %c0_206] : memref<4x2x32xf32, #tpu.memory_space<vmem>>, vector<1x2x32xf32>
    %817 = vector.shape_cast %816 : vector<1x2x32xf32> to vector<2x32xf32>
    %818 = vector.shape_cast %791 : vector<2x32xf32> to vector<1x2x32xf32>
    tpu.vector_store %arg19[%c2_204, %c0_205, %c0_206], %818 {strides = array<i32>} : memref<4x2x32xf32, #tpu.memory_space<vmem>>, vector<1x2x32xf32>,
    %c3 = arith.constant 3 : index
    %c0_207 = arith.constant 0 : index
    %c0_208 = arith.constant 0 : index
    %819 = vector.load %arg19[%c3, %c0_207, %c0_208] : memref<4x2x32xf32, #tpu.memory_space<vmem>>, vector<1x2x32xf32>
    %820 = vector.shape_cast %819 : vector<1x2x32xf32> to vector<2x32xf32>
    %821 = vector.shape_cast %813 : vector<2x32xf32> to vector<1x2x32xf32>
    tpu.vector_store %arg19[%c3, %c0_207, %c0_208], %821 {strides = array<i32>} : memref<4x2x32xf32, #tpu.memory_space<vmem>>, vector<1x2x32xf32>,
    return
  }
}

</mosaic_0001>

<llo_original>
// kernel: encoder_forward.1
$region0: #{encoder_forward.1}
  #allocation0 [shape = 'u32[]', space=smem, size = 0x4, offset = 0x4, fixed_abs, tag = 'smem constant byte address 0x4 - core index']
  #allocation1 [shape = 'u32[144,128]{1,0:T(1,128)}', space=vmem, size = 0x12000, scoped, tag = 'internal scratch']
  #allocation2 [shape = 'f32[16,64]{1,0:T(8,128)}', space=vmem, size = 0x2000, scoped, tag = 'scratch operand']
  %s0 = inlined_call_operand.vmem [shape: s32[16,1], index: 0, kind: input, shape index: {}]
  %s1 = inlined_call_operand.vmem [shape: f32[128,16], index: 1, kind: input, shape index: {}]
  %s2 = inlined_call_operand.vmem [shape: f32[16,96], index: 2, kind: input, shape index: {}]
  %s3 = inlined_call_operand.vmem [shape: f32[32,96], index: 3, kind: input, shape index: {}]
  %s4 = inlined_call_operand.vmem [shape: f32[1,96], index: 4, kind: input, shape index: {}]
  %s5 = inlined_call_operand.vmem [shape: f32[1,96], index: 5, kind: input, shape index: {}]
  %s6 = inlined_call_operand.vmem [shape: f32[16,96], index: 6, kind: input, shape index: {}]
  %s7 = inlined_call_operand.vmem [shape: f32[32,96], index: 7, kind: input, shape index: {}]
  %s8 = inlined_call_operand.vmem [shape: f32[1,96], index: 8, kind: input, shape index: {}]
  %s9 = inlined_call_operand.vmem [shape: f32[1,96], index: 9, kind: input, shape index: {}]
  %s10 = inlined_call_operand.vmem [shape: f32[64,96], index: 10, kind: input, shape index: {}]
  %s11 = inlined_call_operand.vmem [shape: f32[32,96], index: 11, kind: input, shape index: {}]
  %s12 = inlined_call_operand.vmem [shape: f32[1,96], index: 12, kind: input, shape index: {}]
  %s13 = inlined_call_operand.vmem [shape: f32[1,96], index: 13, kind: input, shape index: {}]
  %s14 = inlined_call_operand.vmem [shape: f32[64,96], index: 14, kind: input, shape index: {}]
  %s15 = inlined_call_operand.vmem [shape: f32[32,96], index: 15, kind: input, shape index: {}]
  %s16 = inlined_call_operand.vmem [shape: f32[1,96], index: 16, kind: input, shape index: {}]
  %s17 = inlined_call_operand.hbm [shape: f32[1,96], index: 17, kind: input, shape index: {}]
  %s18 = inlined_call_operand.vmem [shape: f32[16,64], index: 18, kind: output, shape index: {0}]
  %s19 = inlined_call_operand.hbm [shape: f32[4,2,32], index: 19, kind: output, shape index: {1}]
  %20 = xla_tuple %s18, %s19
  %s21 = sld [smem:[#allocation0]]
  $region94: #{encoder_forward.1} parent=0
    _
  %s23 = ssub.s32 1, %s21
  %s24 = scalar_select 0, %s23, %s21
  $region1: #{encoder_forward.1} parent=0
    #allocation3 [shape = 'u8[512]{0}', space=vmem, size = 0x400, scoped, tag = 'input window, operand 17, single buffered']
    #allocation4 [shape = 's32[1]{0}', space=sflag, size = 0x4, scoped, tag = 'scoped memory for encoder_forward.1']
    #allocation5 [shape = 's32[1]{0}', space=sflag, size = 0x4, scoped, tag = 'scoped memory for encoder_forward.1']
    #allocation6 [shape = 'u8[4096]{0}', space=vmem, size = 0x1000, scoped, tag = 'output window, operand 1, single buffered']
    %25 = vsyncpa [#allocation4], 0
    %26 = vsyncpa [#allocation5], 0
    // Predicated region
    $region2: #{encoder_forward.1} parent=1 // pred_check
      _
    $region3: #{encoder_forward.1} parent=1 // pred_check_branch
      %28 = sbr.rel (0) target = $region5
    $region4: #{encoder_forward.1} parent=1 // pred_region
      _
    $region5: #{encoder_forward.1} parent=1 // pred_fallthru
      _
    // Predicated region
    $region6: #{encoder_forward.1} parent=1 // pred_check
      _
    $region7: #{encoder_forward.1} parent=1 // pred_check_branch
      %30 = sbr.rel (0) target = $region9
    $region8: #{encoder_forward.1} parent=1 // pred_region
      _
    $region9: #{encoder_forward.1} parent=1 // pred_fallthru
      _
    // Predicated region
    $region10: #{encoder_forward.1} parent=1 // pred_check
      _
    $region11: #{encoder_forward.1} parent=1 // pred_check_branch
      %32 = sbr.rel (0) target = $region13
    $region12: #{encoder_forward.1} parent=1 // pred_region
      _
    $region13: #{encoder_forward.1} parent=1 // pred_fallthru
      _
    // Predicated region
    $region14: #{encoder_forward.1} parent=1 // pred_check
      _
    $region15: #{encoder_forward.1} parent=1 // pred_check_branch
      %34 = sbr.rel (0) target = $region17
    $region16: #{encoder_forward.1} parent=1 // pred_region
      _
    $region17: #{encoder_forward.1} parent=1 // pred_fallthru
      _
    // Predicated region
    $region18: #{encoder_forward.1} parent=1 // pred_check
      _
    $region19: #{encoder_forward.1} parent=1 // pred_check_branch
      %36 = sbr.rel (0) target = $region21
    $region20: #{encoder_forward.1} parent=1 // pred_region
      _
    $region21: #{encoder_forward.1} parent=1 // pred_fallthru
      _
    // Predicated region
    $region22: #{encoder_forward.1} parent=1 // pred_check
      _
    $region23: #{encoder_forward.1} parent=1 // pred_check_branch
      %38 = sbr.rel (0) target = $region25
    $region24: #{encoder_forward.1} parent=1 // pred_region
      _
    $region25: #{encoder_forward.1} parent=1 // pred_fallthru
      _
    // Predicated region
    $region26: #{encoder_forward.1} parent=1 // pred_check
      _
    $region27: #{encoder_forward.1} parent=1 // pred_check_branch
      %40 = sbr.rel (0) target = $region29
    $region28: #{encoder_forward.1} parent=1 // pred_region
      _
    $region29: #{encoder_forward.1} parent=1 // pred_fallthru
      _
    // Predicated region
    $region30: #{encoder_forward.1} parent=1 // pred_check
      _
    $region31: #{encoder_forward.1} parent=1 // pred_check_branch
      %42 = sbr.rel (0) target = $region33
    $region32: #{encoder_forward.1} parent=1 // pred_region
      _
    $region33: #{encoder_forward.1} parent=1 // pred_fallthru
      _
    // Predicated region
    $region34: #{encoder_forward.1} parent=1 // pred_check
      _
    $region35: #{encoder_forward.1} parent=1 // pred_check_branch
      %44 = sbr.rel (0) target = $region37
    $region36: #{encoder_forward.1} parent=1 // pred_region
      _
    $region37: #{encoder_forward.1} parent=1 // pred_fallthru
      _
    // Predicated region
    $region38: #{encoder_forward.1} parent=1 // pred_check
      _
    $region39: #{encoder_forward.1} parent=1 // pred_check_branch
      %46 = sbr.rel (0) target = $region41
    $region40: #{encoder_forward.1} parent=1 // pred_region
      _
    $region41: #{encoder_forward.1} parent=1 // pred_fallthru
      _
    // Predicated region
    $region42: #{encoder_forward.1} parent=1 // pred_check
      _
    $region43: #{encoder_forward.1} parent=1 // pred_check_branch
      %48 = sbr.rel (0) target = $region45
    $region44: #{encoder_forward.1} parent=1 // pred_region
      _
    $region45: #{encoder_forward.1} parent=1 // pred_fallthru
      _
    // Predicated region
    $region46: #{encoder_forward.1} parent=1 // pred_check
      _
    $region47: #{encoder_forward.1} parent=1 // pred_check_branch
      %50 = sbr.rel (0) target = $region49
    $region48: #{encoder_forward.1} parent=1 // pred_region
      _
    $region49: #{encoder_forward.1} parent=1 // pred_fallthru
      _
    // Predicated region
    $region50: #{encoder_forward.1} parent=1 // pred_check
      _
    $region51: #{encoder_forward.1} parent=1 // pred_check_branch
      %52 = sbr.rel (0) target = $region53
    $region52: #{encoder_forward.1} parent=1 // pred_region
      _
    $region53: #{encoder_forward.1} parent=1 // pred_fallthru
      _
    // Predicated region
    $region54: #{encoder_forward.1} parent=1 // pred_check
      _
    $region55: #{encoder_forward.1} parent=1 // pred_check_branch
      %54 = sbr.rel (0) target = $region57
    $region56: #{encoder_forward.1} parent=1 // pred_region
      _
    $region57: #{encoder_forward.1} parent=1 // pred_fallthru
      _
    // Predicated region
    $region58: #{encoder_forward.1} parent=1 // pred_check
      _
    $region59: #{encoder_forward.1} parent=1 // pred_check_branch
      %56 = sbr.rel (0) target = $region61
    $region60: #{encoder_forward.1} parent=1 // pred_region
      _
    $region61: #{encoder_forward.1} parent=1 // pred_fallthru
      _
    // Predicated region
    $region62: #{encoder_forward.1} parent=1 // pred_check
      _
    $region63: #{encoder_forward.1} parent=1 // pred_check_branch
      %58 = sbr.rel (0) target = $region65
    $region64: #{encoder_forward.1} parent=1 // pred_region
      _
    $region65: #{encoder_forward.1} parent=1 // pred_fallthru
      _
    // Predicated region
    $region66: #{encoder_forward.1} parent=1 // pred_check
      _
    $region67: #{encoder_forward.1} parent=1 // pred_check_branch
      %60 = sbr.rel (0) target = $region69
    $region68: #{encoder_forward.1} parent=1 // pred_region
      _
    $region69: #{encoder_forward.1} parent=1 // pred_fallthru
      _
    // Predicated region
    $region70: #{encoder_forward.1} parent=1 // pred_check
      _
    $region71: #{encoder_forward.1} parent=1 // pred_check_branch
      %62 = sbr.rel (0) target = $region73
    $region72: #{encoder_forward.1} parent=1 // pred_region
      %s64 = ssub.s32 16, 16
      %65 = vsyncadd [#allocation4], %s64
      %s67 = sshll.u32 [#allocation3], 4
      %s68 = int_to_ptr.vmem [resolvable:$true] %s67
      %70 = dma.hbm_to_vmem [thread:$0]  %s17, 16, %s68, [#allocation4]
    $region73: #{encoder_forward.1} parent=1 // pred_fallthru
      _
    // Predicated region
    $region74: #{encoder_forward.1} parent=1 // pred_check
      _
    $region75: #{encoder_forward.1} parent=1 // pred_check_branch
      %72 = sbr.rel (0) target = $region77
    $region76: #{encoder_forward.1} parent=1 // pred_region
      %73 = dma.done [#allocation4], 16
    $region77: #{encoder_forward.1} parent=1 // pred_fallthru
      _
    %v74 = vld [vmem:[%s0] sm:$0xff]
    %v75 = vld [vmem:[%s0 + $0x8] sm:$0xff]
    %v76 = vlaneseq
    %v77 = vand.u32 %v76, 127
    %78 = vset.pattern.permute.xlu0 0
    %79 = vperm.xlu0 %78, %v74
    %v80 = vpop.permute.xlu0 %79
    %81 = vset.pattern.permute.xlu0 0
    %82 = vperm.xlu0 %81, %v75
    %v83 = vpop.permute.xlu0 %82
    %vm84 = vcmp.eq.s32.totalorder %v77, %v80
    %vm85 = vcmp.eq.s32.totalorder %v77, %v83
    %v86 = vsel %vm84, 1.0, 0.0
    %v87 = vsel %vm85, 1.0, 0.0
    %v88 = vld [vmem:[%s1] sm:$0xff]
    %v89 = vld [vmem:[%s1 + $0x8] sm:$0xff]
    %v90 = vld [vmem:[%s1 + $0x10] sm:$0xff]
    %v91 = vld [vmem:[%s1 + $0x18] sm:$0xff]
    %v92 = vld [vmem:[%s1 + $0x20] sm:$0xff]
    %v93 = vld [vmem:[%s1 + $0x28] sm:$0xff]
    %v94 = vld [vmem:[%s1 + $0x30] sm:$0xff]
    %v95 = vld [vmem:[%s1 + $0x38] sm:$0xff]
    %v96 = vld [vmem:[%s1 + $0x40] sm:$0xff]
    %v97 = vld [vmem:[%s1 + $0x48] sm:$0xff]
    %v98 = vld [vmem:[%s1 + $0x50] sm:$0xff]
    %v99 = vld [vmem:[%s1 + $0x58] sm:$0xff]
    %v100 = vld [vmem:[%s1 + $0x60] sm:$0xff]
    %v101 = vld [vmem:[%s1 + $0x68] sm:$0xff]
    %v102 = vld [vmem:[%s1 + $0x70] sm:$0xff]
    %v103 = vld [vmem:[%s1 + $0x78] sm:$0xff]
    %104 = vmatprep.subr.mxu0 0.0
    %105 = vmatpush1.msra.mxu0 %v88
    %106 = vmatprep.subr.mxu0 0.0
    %107 = vmatpush1.msra.mxu0 %v89
    %108 = vmatprep.subr.mxu0 0.0
    %109 = vmatpush1.msra.mxu0 %v90
    %110 = vmatprep.subr.mxu0 0.0
    %111 = vmatpush1.msra.mxu0 %v91
    %112 = vmatprep.subr.mxu0 0.0
    %113 = vmatpush1.msra.mxu0 %v92
    %114 = vmatprep.subr.mxu0 0.0
    %115 = vmatpush1.msra.mxu0 %v93
    %116 = vmatprep.subr.mxu0 0.0
    %117 = vmatpush1.msra.mxu0 %v94
    %118 = vmatprep.subr.mxu0 0.0
    %119 = vmatpush1.msra.mxu0 %v95
    %120 = vmatprep.subr.mxu0 0.0
    %121 = vmatpush1.msra.mxu0 %v96
    %122 = vmatprep.subr.mxu0 0.0
    %123 = vmatpush1.msra.mxu0 %v97
    %124 = vmatprep.subr.mxu0 0.0
    %125 = vmatpush1.msra.mxu0 %v98
    %126 = vmatprep.subr.mxu0 0.0
    %127 = vmatpush1.msra.mxu0 %v99
    %128 = vmatprep.subr.mxu0 0.0
    %129 = vmatpush1.msra.mxu0 %v100
    %130 = vmatprep.subr.mxu0 0.0
    %131 = vmatpush1.msra.mxu0 %v101
    %132 = vmatprep.subr.mxu0 0.0
    %133 = vmatpush1.msra.mxu0 %v102
    %134 = vmatprep.subr.mxu0 0.0
    %135 = vmatpush1.msra.mxu0 %v103
    %136 = vmatprep.subr.mxu0 0.0
    %137 = vmatpush1.msra.mxu0 0.0
    %138 = vmatprep.subr.mxu0 0.0
    %139 = vmatpush1.msra.mxu0 0.0
    %140 = vmatprep.subr.mxu0 0.0
    %141 = vmatpush1.msra.mxu0 0.0
    %142 = vmatprep.subr.mxu0 0.0
    %143 = vmatpush1.msra.mxu0 0.0
    %144 = vmatprep.subr.mxu0 0.0
    %145 = vmatpush1.msra.mxu0 0.0
    %146 = vmatprep.subr.mxu0 0.0
    %147 = vmatpush1.msra.mxu0 0.0
    %148 = vmatprep.subr.mxu0 0.0
    %149 = vmatpush1.msra.mxu0 0.0
    %150 = vmatprep.subr.mxu0 0.0
    %151 = vmatpush1.msra.mxu0 0.0
    %152 = vmatprep.subr.mxu0 0.0
    %153 = vmatpush1.msra.mxu0 0.0
    %154 = vmatprep.subr.mxu0 0.0
    %155 = vmatpush1.msra.mxu0 0.0
    %156 = vmatprep.subr.mxu0 0.0
    %157 = vmatpush1.msra.mxu0 0.0
    %158 = vmatprep.subr.mxu0 0.0
    %159 = vmatpush1.msra.mxu0 0.0
    %160 = vmatprep.subr.mxu0 0.0
    %161 = vmatpush1.msra.mxu0 0.0
    %162 = vmatprep.subr.mxu0 0.0
    %163 = vmatpush1.msra.mxu0 0.0
    %164 = vmatprep.subr.mxu0 0.0
    %165 = vmatpush1.msra.mxu0 0.0
    %166 = vmatprep.subr.mxu0 0.0
    %167 = vmatpush1.msra.mxu0 0.0
    %168 = vmatprep.mubr.f32.mxu0 0.0
    %169 = vmatmul.mubr.f32.gmra.mrb[0].mxu0 %v86
    %v170 = vpop.f32.mrb[0].mxu0
    %v171 = vadd.f32 0.0, %v170
    %v172 = vpop.f32.mrb[0].mxu0
    %173 = vmatprep.mubr.f32.mxu0 0.0
    %174 = vmatmul.mubr.f32.gmra.mrb[0].mxu0 %v87
    %v175 = vpop.f32.mrb[0].mxu0
    %v176 = vadd.f32 0.0, %v175
    %v177 = vpop.f32.mrb[0].mxu0
    %178 = vdwg.mxu0
    %v179 = vld [vmem:[%s2] sm:$0xff]
    %v180 = vld [vmem:[%s2 + $0x8] sm:$0xff]
    %v181 = vld [vmem:[%s3] sm:$0xff]
    %v182 = vld [vmem:[%s3 + $0x8] sm:$0xff]
    %v183 = vld [vmem:[%s3 + $0x10] sm:$0xff]
    %v184 = vld [vmem:[%s3 + $0x18] sm:$0xff]
    %v185 = vld [vmem:[%s4] sm:$0x1]
    %v186 = vld [vmem:[%s5] sm:$0x1]
    %v188 = vlaneseq
    %v189 = vshrl.u32 %v188, 7
    %v190 = vsub.s32 0, %v189
    %v191 = vrot.slane %v185, %v190
    %vm193 = vcmask 130048
    %v195 = vsel %vm193, %v171, 0
    %v198 = vsel %vm193, %v176, 0
    %200 = vmatprep.subr.mxu0 0.0
    %201 = vmatpush1.msra.mxu0 %v179
    %202 = vmatprep.subr.mxu0 0.0
    %203 = vmatpush1.msra.mxu0 %v180
    %204 = vmatprep.subr.mxu0 0.0
    %205 = vmatpush1.msra.mxu0 0.0
    %206 = vmatprep.subr.mxu0 0.0
    %207 = vmatpush1.msra.mxu0 0.0
    %208 = vmatprep.subr.mxu0 0.0
    %209 = vmatpush1.msra.mxu0 0.0
    %210 = vmatprep.subr.mxu0 0.0
    %211 = vmatpush1.msra.mxu0 0.0
    %212 = vmatprep.subr.mxu0 0.0
    %213 = vmatpush1.msra.mxu0 0.0
    %214 = vmatprep.subr.mxu0 0.0
    %215 = vmatpush1.msra.mxu0 0.0
    %216 = vmatprep.subr.mxu0 0.0
    %217 = vmatpush1.msra.mxu0 0.0
    %218 = vmatprep.subr.mxu0 0.0
    %219 = vmatpush1.msra.mxu0 0.0
    %220 = vmatprep.subr.mxu0 0.0
    %221 = vmatpush1.msra.mxu0 0.0
    %222 = vmatprep.subr.mxu0 0.0
    %223 = vmatpush1.msra.mxu0 0.0
    %224 = vmatprep.subr.mxu0 0.0
    %225 = vmatpush1.msra.mxu0 0.0
    %226 = vmatprep.subr.mxu0 0.0
    %227 = vmatpush1.msra.mxu0 0.0
    %228 = vmatprep.subr.mxu0 0.0
    %229 = vmatpush1.msra.mxu0 0.0
    %230 = vmatprep.subr.mxu0 0.0
    %231 = vmatpush1.msra.mxu0 0.0
    %232 = vmatprep.subr.mxu0 0.0
    %233 = vmatpush1.msra.mxu0 0.0
    %234 = vmatprep.subr.mxu0 0.0
    %235 = vmatpush1.msra.mxu0 0.0
    %236 = vmatprep.subr.mxu0 0.0
    %237 = vmatpush1.msra.mxu0 0.0
    %238 = vmatprep.subr.mxu0 0.0
    %239 = vmatpush1.msra.mxu0 0.0
    %240 = vmatprep.subr.mxu0 0.0
    %241 = vmatpush1.msra.mxu0 0.0
    %242 = vmatprep.subr.mxu0 0.0
    %243 = vmatpush1.msra.mxu0 0.0
    %244 = vmatprep.subr.mxu0 0.0
    %245 = vmatpush1.msra.mxu0 0.0
    %246 = vmatprep.subr.mxu0 0.0
    %247 = vmatpush1.msra.mxu0 0.0
    %248 = vmatprep.subr.mxu0 0.0
    %249 = vmatpush1.msra.mxu0 0.0
    %250 = vmatprep.subr.mxu0 0.0
    %251 = vmatpush1.msra.mxu0 0.0
    %252 = vmatprep.subr.mxu0 0.0
    %253 = vmatpush1.msra.mxu0 0.0
    %254 = vmatprep.subr.mxu0 0.0
    %255 = vmatpush1.msra.mxu0 0.0
    %256 = vmatprep.subr.mxu0 0.0
    %257 = vmatpush1.msra.mxu0 0.0
    %258 = vmatprep.subr.mxu0 0.0
    %259 = vmatpush1.msra.mxu0 0.0
    %260 = vmatprep.subr.mxu0 0.0
    %261 = vmatpush1.msra.mxu0 0.0
    %262 = vmatprep.subr.mxu0 0.0
    %263 = vmatpush1.msra.mxu0 0.0
    %264 = vmatprep.mubr.f32.mxu0 0.0
    %265 = vmatmul.mubr.f32.gmra.mrb[0].mxu0 %v195
    %v266 = vpop.f32.mrb[0].mxu0
    %v267 = vadd.f32 %v191, %v266
    %v268 = vpop.f32.mrb[0].mxu0
    %269 = vmatprep.mubr.f32.mxu0 0.0
    %270 = vmatmul.mubr.f32.gmra.mrb[0].mxu0 %v198
    %v271 = vpop.f32.mrb[0].mxu0
    %v272 = vadd.f32 %v191, %v271
    %v273 = vpop.f32.mrb[0].mxu0
    %274 = vdwg.mxu0
    %v276 = vlaneseq
    %v277 = vshrl.u32 %v276, 7
    %v278 = vsub.s32 0, %v277
    %v279 = vrot.slane %v186, %v278
    %v281 = vadd.f32 %v267, %v279
    %v282 = vadd.f32 %v272, %v279
    %v283 = vld [vmem:[%s6] sm:$0xff]
    %v284 = vld [vmem:[%s6 + $0x8] sm:$0xff]
    %v285 = vld [vmem:[%s7] sm:$0xff]
    %v286 = vld [vmem:[%s7 + $0x8] sm:$0xff]
    %v287 = vld [vmem:[%s7 + $0x10] sm:$0xff]
    %v288 = vld [vmem:[%s7 + $0x18] sm:$0xff]
    %v289 = vld [vmem:[%s8] sm:$0x1]
    %v290 = vld [vmem:[%s9] sm:$0x1]
    %v292 = vlaneseq
    %v293 = vshrl.u32 %v292, 7
    %v294 = vsub.s32 0, %v293
    %v295 = vrot.slane %v289, %v294
    %297 = vmatprep.subr.mxu0 0.0
    %298 = vmatpush1.msra.mxu0 %v283
    %299 = vmatprep.subr.mxu0 0.0
    %300 = vmatpush1.msra.mxu0 %v284
    %301 = vmatprep.subr.mxu0 0.0
    %302 = vmatpush1.msra.mxu0 0.0
    %303 = vmatprep.subr.mxu0 0.0
    %304 = vmatpush1.msra.mxu0 0.0
    %305 = vmatprep.subr.mxu0 0.0
    %306 = vmatpush1.msra.mxu0 0.0
    %307 = vmatprep.subr.mxu0 0.0
    %308 = vmatpush1.msra.mxu0 0.0
    %309 = vmatprep.subr.mxu0 0.0
    %310 = vmatpush1.msra.mxu0 0.0
    %311 = vmatprep.subr.mxu0 0.0
    %312 = vmatpush1.msra.mxu0 0.0
    %313 = vmatprep.subr.mxu0 0.0
    %314 = vmatpush1.msra.mxu0 0.0
    %315 = vmatprep.subr.mxu0 0.0
    %316 = vmatpush1.msra.mxu0 0.0
    %317 = vmatprep.subr.mxu0 0.0
    %318 = vmatpush1.msra.mxu0 0.0
    %319 = vmatprep.subr.mxu0 0.0
    %320 = vmatpush1.msra.mxu0 0.0
    %321 = vmatprep.subr.mxu0 0.0
    %322 = vmatpush1.msra.mxu0 0.0
    %323 = vmatprep.subr.mxu0 0.0
    %324 = vmatpush1.msra.mxu0 0.0
    %325 = vmatprep.subr.mxu0 0.0
    %326 = vmatpush1.msra.mxu0 0.0
    %327 = vmatprep.subr.mxu0 0.0
    %328 = vmatpush1.msra.mxu0 0.0
    %329 = vmatprep.subr.mxu0 0.0
    %330 = vmatpush1.msra.mxu0 0.0
    %331 = vmatprep.subr.mxu0 0.0
    %332 = vmatpush1.msra.mxu0 0.0
    %333 = vmatprep.subr.mxu0 0.0
    %334 = vmatpush1.msra.mxu0 0.0
    %335 = vmatprep.subr.mxu0 0.0
    %336 = vmatpush1.msra.mxu0 0.0
    %337 = vmatprep.subr.mxu0 0.0
    %338 = vmatpush1.msra.mxu0 0.0
    %339 = vmatprep.subr.mxu0 0.0
    %340 = vmatpush1.msra.mxu0 0.0
    %341 = vmatprep.subr.mxu0 0.0
    %342 = vmatpush1.msra.mxu0 0.0
    %343 = vmatprep.subr.mxu0 0.0
    %344 = vmatpush1.msra.mxu0 0.0
    %345 = vmatprep.subr.mxu0 0.0
    %346 = vmatpush1.msra.mxu0 0.0
    %347 = vmatprep.subr.mxu0 0.0
    %348 = vmatpush1.msra.mxu0 0.0
    %349 = vmatprep.subr.mxu0 0.0
    %350 = vmatpush1.msra.mxu0 0.0
    %351 = vmatprep.subr.mxu0 0.0
    %352 = vmatpush1.msra.mxu0 0.0
    %353 = vmatprep.subr.mxu0 0.0
    %354 = vmatpush1.msra.mxu0 0.0
    %355 = vmatprep.subr.mxu0 0.0
    %356 = vmatpush1.msra.mxu0 0.0
    %357 = vmatprep.subr.mxu0 0.0
    %358 = vmatpush1.msra.mxu0 0.0
    %359 = vmatprep.subr.mxu0 0.0
    %360 = vmatpush1.msra.mxu0 0.0
    %361 = vmatprep.mubr.f32.mxu0 0.0
    %362 = vmatmul.mubr.f32.gmra.mrb[0].mxu0 %v195
    %v363 = vpop.f32.mrb[0].mxu0
    %v364 = vadd.f32 %v295, %v363
    %v365 = vpop.f32.mrb[0].mxu0
    %366 = vmatprep.mubr.f32.mxu0 0.0
    %367 = vmatmul.mubr.f32.gmra.mrb[0].mxu0 %v198
    %v368 = vpop.f32.mrb[0].mxu0
    %v369 = vadd.f32 %v295, %v368
    %v370 = vpop.f32.mrb[0].mxu0
    %371 = vdwg.mxu0
    %v373 = vlaneseq
    %v374 = vshrl.u32 %v373, 7
    %v375 = vsub.s32 0, %v374
    %v376 = vrot.slane %v290, %v375
    %v378 = vadd.f32 %v364, %v376
    %v379 = vadd.f32 %v369, %v376
    %vm380 = vcmask 261120
    %v382 = vsel %vm380, 0.0, 0
    %384 = vmatprep.subr.mxu0 0.0
    %385 = vmatpush1.msra.mxu0 %v181
    %386 = vmatprep.subr.mxu0 0.0
    %387 = vmatpush1.msra.mxu0 %v182
    %388 = vmatprep.subr.mxu0 0.0
    %389 = vmatpush1.msra.mxu0 %v183
    %390 = vmatprep.subr.mxu0 0.0
    %391 = vmatpush1.msra.mxu0 %v184
    %392 = vmatprep.subr.mxu0 0.0
    %393 = vmatpush1.msra.mxu0 0.0
    %394 = vmatprep.subr.mxu0 0.0
    %395 = vmatpush1.msra.mxu0 0.0
    %396 = vmatprep.subr.mxu0 0.0
    %397 = vmatpush1.msra.mxu0 0.0
    %398 = vmatprep.subr.mxu0 0.0
    %399 = vmatpush1.msra.mxu0 0.0
    %400 = vmatprep.subr.mxu0 0.0
    %401 = vmatpush1.msra.mxu0 0.0
    %402 = vmatprep.subr.mxu0 0.0
    %403 = vmatpush1.msra.mxu0 0.0
    %404 = vmatprep.subr.mxu0 0.0
    %405 = vmatpush1.msra.mxu0 0.0
    %406 = vmatprep.subr.mxu0 0.0
    %407 = vmatpush1.msra.mxu0 0.0
    %408 = vmatprep.subr.mxu0 0.0
    %409 = vmatpush1.msra.mxu0 0.0
    %410 = vmatprep.subr.mxu0 0.0
    %411 = vmatpush1.msra.mxu0 0.0
    %412 = vmatprep.subr.mxu0 0.0
    %413 = vmatpush1.msra.mxu0 0.0
    %414 = vmatprep.subr.mxu0 0.0
    %415 = vmatpush1.msra.mxu0 0.0
    %416 = vmatprep.subr.mxu0 0.0
    %417 = vmatpush1.msra.mxu0 0.0
    %418 = vmatprep.subr.mxu0 0.0
    %419 = vmatpush1.msra.mxu0 0.0
    %420 = vmatprep.subr.mxu0 0.0
    %421 = vmatpush1.msra.mxu0 0.0
    %422 = vmatprep.subr.mxu0 0.0
    %423 = vmatpush1.msra.mxu0 0.0
    %424 = vmatprep.subr.mxu0 0.0
    %425 = vmatpush1.msra.mxu0 0.0
    %426 = vmatprep.subr.mxu0 0.0
    %427 = vmatpush1.msra.mxu0 0.0
    %428 = vmatprep.subr.mxu0 0.0
    %429 = vmatpush1.msra.mxu0 0.0
    %430 = vmatprep.subr.mxu0 0.0
    %431 = vmatpush1.msra.mxu0 0.0
    %432 = vmatprep.subr.mxu0 0.0
    %433 = vmatpush1.msra.mxu0 0.0
    %434 = vmatprep.subr.mxu0 0.0
    %435 = vmatpush1.msra.mxu0 0.0
    %436 = vmatprep.subr.mxu0 0.0
    %437 = vmatpush1.msra.mxu0 0.0
    %438 = vmatprep.subr.mxu0 0.0
    %439 = vmatpush1.msra.mxu0 0.0
    %440 = vmatprep.subr.mxu0 0.0
    %441 = vmatpush1.msra.mxu0 0.0
    %442 = vmatprep.subr.mxu0 0.0
    %443 = vmatpush1.msra.mxu0 0.0
    %444 = vmatprep.subr.mxu0 0.0
    %445 = vmatpush1.msra.mxu0 0.0
    %446 = vmatprep.subr.mxu0 0.0
    %447 = vmatpush1.msra.mxu0 0.0
    %448 = vmatprep.mubr.f32.mxu0 0.0
    %449 = vmatmul.mubr.f32.gmra.mrb[0].mxu0 %v382
    %v450 = vpop.f32.mrb[0].mxu0
    %v451 = vadd.f32 0.0, %v450
    %v452 = vpop.f32.mrb[0].mxu0
    %453 = vdwg.mxu0
    %v454 = vadd.f32 %v281, %v451
    %v455 = vxor.u32 %v454, 2147483648
    %v456 = vmul.f32 %v455, 1.442695
    %v457 = vpow.pop %v456
    %v458 = vadd.f32 %v457, 1.0
    %v459 = vrcp.pop %v458
    %v460 = vmul.f32 1.0, %v459
    %v461 = vadd.f32 %v451, %v279
    %463 = vrot.lane.b32.xlu0 %v461, 64
    %v464 = vpop.permute.xlu0 %463
    %v466 = vmul.f32 %v460, %v464
    %468 = vrot.lane.b32.xlu0 %v466, 64
    %v469 = vpop.permute.xlu0 %468
    %v471 = vadd.f32 %v267, %v469
    %v472 = vtanh.pop %v471
    %v473 = vsub.f32 1.0, %v460
    %475 = vrot.lane.b32.xlu0 %v472, 96
    %v476 = vpop.permute.xlu0 %475
    %v478 = vmul.f32 %v473, %v476
    %v479 = vmul.f32 %v460, 0.0
    %v480 = vadd.f32 %v478, %v479
    %481 = vmatprep.subr.mxu0 0.0
    %482 = vmatpush1.msra.mxu0 %v285
    %483 = vmatprep.subr.mxu0 0.0
    %484 = vmatpush1.msra.mxu0 %v286
    %485 = vmatprep.subr.mxu0 0.0
    %486 = vmatpush1.msra.mxu0 %v287
    %487 = vmatprep.subr.mxu0 0.0
    %488 = vmatpush1.msra.mxu0 %v288
    %489 = vmatprep.subr.mxu0 0.0
    %490 = vmatpush1.msra.mxu0 0.0
    %491 = vmatprep.subr.mxu0 0.0
    %492 = vmatpush1.msra.mxu0 0.0
    %493 = vmatprep.subr.mxu0 0.0
    %494 = vmatpush1.msra.mxu0 0.0
    %495 = vmatprep.subr.mxu0 0.0
    %496 = vmatpush1.msra.mxu0 0.0
    %497 = vmatprep.subr.mxu0 0.0
    %498 = vmatpush1.msra.mxu0 0.0
    %499 = vmatprep.subr.mxu0 0.0
    %500 = vmatpush1.msra.mxu0 0.0
    %501 = vmatprep.subr.mxu0 0.0
    %502 = vmatpush1.msra.mxu0 0.0
    %503 = vmatprep.subr.mxu0 0.0
    %504 = vmatpush1.msra.mxu0 0.0
    %505 = vmatprep.subr.mxu0 0.0
    %506 = vmatpush1.msra.mxu0 0.0
    %507 = vmatprep.subr.mxu0 0.0
    %508 = vmatpush1.msra.mxu0 0.0
    %509 = vmatprep.subr.mxu0 0.0
    %510 = vmatpush1.msra.mxu0 0.0
    %511 = vmatprep.subr.mxu0 0.0
    %512 = vmatpush1.msra.mxu0 0.0
    %513 = vmatprep.subr.mxu0 0.0
    %514 = vmatpush1.msra.mxu0 0.0
    %515 = vmatprep.subr.mxu0 0.0
    %516 = vmatpush1.msra.mxu0 0.0
    %517 = vmatprep.subr.mxu0 0.0
    %518 = vmatpush1.msra.mxu0 0.0
    %519 = vmatprep.subr.mxu0 0.0
    %520 = vmatpush1.msra.mxu0 0.0
    %521 = vmatprep.subr.mxu0 0.0
    %522 = vmatpush1.msra.mxu0 0.0
    %523 = vmatprep.subr.mxu0 0.0
    %524 = vmatpush1.msra.mxu0 0.0
    %525 = vmatprep.subr.mxu0 0.0
    %526 = vmatpush1.msra.mxu0 0.0
    %527 = vmatprep.subr.mxu0 0.0
    %528 = vmatpush1.msra.mxu0 0.0
    %529 = vmatprep.subr.mxu0 0.0
    %530 = vmatpush1.msra.mxu0 0.0
    %531 = vmatprep.subr.mxu0 0.0
    %532 = vmatpush1.msra.mxu0 0.0
    %533 = vmatprep.subr.mxu0 0.0
    %534 = vmatpush1.msra.mxu0 0.0
    %535 = vmatprep.subr.mxu0 0.0
    %536 = vmatpush1.msra.mxu0 0.0
    %537 = vmatprep.subr.mxu0 0.0
    %538 = vmatpush1.msra.mxu0 0.0
    %539 = vmatprep.subr.mxu0 0.0
    %540 = vmatpush1.msra.mxu0 0.0
    %541 = vmatprep.subr.mxu0 0.0
    %542 = vmatpush1.msra.mxu0 0.0
    %543 = vmatprep.subr.mxu0 0.0
    %544 = vmatpush1.msra.mxu0 0.0
    %545 = vmatprep.mubr.f32.mxu0 0.0
    %546 = vmatmul.mubr.f32.gmra.mrb[0].mxu0 %v382
    %v547 = vpop.f32.mrb[0].mxu0
    %v548 = vadd.f32 0.0, %v547
    %v549 = vpop.f32.mrb[0].mxu0
    %550 = vdwg.mxu0
    %v552 = vrot.slane %v548, 2
    %v554 = vadd.f32 %v379, %v552
    %v555 = vxor.u32 %v554, 2147483648
    %v556 = vmul.f32 %v555, 1.442695
    %v557 = vpow.pop %v556
    %v558 = vadd.f32 %v557, 1.0
    %v559 = vrcp.pop %v558
    %v560 = vmul.f32 1.0, %v559
    %v561 = vadd.f32 %v548, %v376
    %v563 = vrot.slane %v561, 2
    %564 = vrot.lane.b32.xlu0 %v563, 64
    %v565 = vpop.permute.xlu0 %564
    %v567 = vmul.f32 %v560, %v565
    %569 = vrot.lane.b32.xlu0 %v567, 64
    %v570 = vpop.permute.xlu0 %569
    %v572 = vadd.f32 %v369, %v570
    %v573 = vtanh.pop %v572
    %v574 = vsub.f32 1.0, %v560
    %576 = vrot.lane.b32.xlu0 %v573, 96
    %v577 = vpop.permute.xlu0 %576
    %v579 = vmul.f32 %v574, %v577
    %v580 = vmul.f32 %v560, 0.0
    %v581 = vadd.f32 %v579, %v580
    %583 = vrot.lane.b32.xlu0 %v480, 96
    %v584 = vpop.permute.xlu0 %583
    %vm586 = vcmask 254976
    %587 = vst.msk [vmem:[#allocation2] sm:$0x3] %vm586, %v584
    %vm588 = vcmask 523526
    %589 = vst.msk [vmem:[#allocation2 + $0x8] sm:$0xc0] %vm588, %v581
    %v590 = vsel %vm380, %v584, 0
    %592 = vmatprep.subr.mxu0 0.0
    %593 = vmatpush1.msra.mxu0 %v181
    %594 = vmatprep.subr.mxu0 0.0
    %595 = vmatpush1.msra.mxu0 %v182
    %596 = vmatprep.subr.mxu0 0.0
    %597 = vmatpush1.msra.mxu0 %v183
    %598 = vmatprep.subr.mxu0 0.0
    %599 = vmatpush1.msra.mxu0 %v184
    %600 = vmatprep.subr.mxu0 0.0
    %601 = vmatpush1.msra.mxu0 0.0
    %602 = vmatprep.subr.mxu0 0.0
    %603 = vmatpush1.msra.mxu0 0.0
    %604 = vmatprep.subr.mxu0 0.0
    %605 = vmatpush1.msra.mxu0 0.0
    %606 = vmatprep.subr.mxu0 0.0
    %607 = vmatpush1.msra.mxu0 0.0
    %608 = vmatprep.subr.mxu0 0.0
    %609 = vmatpush1.msra.mxu0 0.0
    %610 = vmatprep.subr.mxu0 0.0
    %611 = vmatpush1.msra.mxu0 0.0
    %612 = vmatprep.subr.mxu0 0.0
    %613 = vmatpush1.msra.mxu0 0.0
    %614 = vmatprep.subr.mxu0 0.0
    %615 = vmatpush1.msra.mxu0 0.0
    %616 = vmatprep.subr.mxu0 0.0
    %617 = vmatpush1.msra.mxu0 0.0
    %618 = vmatprep.subr.mxu0 0.0
    %619 = vmatpush1.msra.mxu0 0.0
    %620 = vmatprep.subr.mxu0 0.0
    %621 = vmatpush1.msra.mxu0 0.0
    %622 = vmatprep.subr.mxu0 0.0
    %623 = vmatpush1.msra.mxu0 0.0
    %624 = vmatprep.subr.mxu0 0.0
    %625 = vmatpush1.msra.mxu0 0.0
    %626 = vmatprep.subr.mxu0 0.0
    %627 = vmatpush1.msra.mxu0 0.0
    %628 = vmatprep.subr.mxu0 0.0
    %629 = vmatpush1.msra.mxu0 0.0
    %630 = vmatprep.subr.mxu0 0.0
    %631 = vmatpush1.msra.mxu0 0.0
    %632 = vmatprep.subr.mxu0 0.0
    %633 = vmatpush1.msra.mxu0 0.0
    %634 = vmatprep.subr.mxu0 0.0
    %635 = vmatpush1.msra.mxu0 0.0
    %636 = vmatprep.subr.mxu0 0.0
    %637 = vmatpush1.msra.mxu0 0.0
    %638 = vmatprep.subr.mxu0 0.0
    %639 = vmatpush1.msra.mxu0 0.0
    %640 = vmatprep.subr.mxu0 0.0
    %641 = vmatpush1.msra.mxu0 0.0
    %642 = vmatprep.subr.mxu0 0.0
    %643 = vmatpush1.msra.mxu0 0.0
    %644 = vmatprep.subr.mxu0 0.0
    %645 = vmatpush1.msra.mxu0 0.0
    %646 = vmatprep.subr.mxu0 0.0
    %647 = vmatpush1.msra.mxu0 0.0
    %648 = vmatprep.subr.mxu0 0.0
    %649 = vmatpush1.msra.mxu0 0.0
    %650 = vmatprep.subr.mxu0 0.0
    %651 = vmatpush1.msra.mxu0 0.0
    %652 = vmatprep.subr.mxu0 0.0
    %653 = vmatpush1.msra.mxu0 0.0
    %654 = vmatprep.subr.mxu0 0.0
    %655 = vmatpush1.msra.mxu0 0.0
    %656 = vmatprep.mubr.f32.mxu0 0.0
    %657 = vmatmul.mubr.f32.gmra.mrb[0].mxu0 %v590
    %v658 = vpop.f32.mrb[0].mxu0
    %v659 = vadd.f32 0.0, %v658
    %v660 = vpop.f32.mrb[0].mxu0
    %661 = vdwg.mxu0
    %v663 = vrot.slane %v659, 6
    %v665 = vadd.f32 %v281, %v663
    %v666 = vxor.u32 %v665, 2147483648
    %v667 = vmul.f32 %v666, 1.442695
    %v668 = vpow.pop %v667
    %v669 = vadd.f32 %v668, 1.0
    %v670 = vrcp.pop %v669
    %v671 = vmul.f32 1.0, %v670
    %v672 = vadd.f32 %v659, %v279
    %v674 = vrot.slane %v672, 6
    %675 = vrot.lane.b32.xlu0 %v674, 64
    %v676 = vpop.permute.xlu0 %675
    %v678 = vmul.f32 %v671, %v676
    %680 = vrot.lane.b32.xlu0 %v678, 64
    %v681 = vpop.permute.xlu0 %680
    %v683 = vadd.f32 %v267, %v681
    %v684 = vtanh.pop %v683
    %v685 = vsub.f32 1.0, %v671
    %687 = vrot.lane.b32.xlu0 %v684, 96
    %v688 = vpop.permute.xlu0 %687
    %v690 = vmul.f32 %v685, %v688
    %v691 = vrot.slane %v480, 6
    %v693 = vmul.f32 %v671, %v691
    %v694 = vadd.f32 %v690, %v693
    %v696 = vrot.slane %v581, 6
    %697 = vrot.lane.b32.xlu0 %v696, 96
    %v698 = vpop.permute.xlu0 %697
    %v699 = vsel %vm380, %v698, 0
    %701 = vmatprep.subr.mxu0 0.0
    %702 = vmatpush1.msra.mxu0 %v285
    %703 = vmatprep.subr.mxu0 0.0
    %704 = vmatpush1.msra.mxu0 %v286
    %705 = vmatprep.subr.mxu0 0.0
    %706 = vmatpush1.msra.mxu0 %v287
    %707 = vmatprep.subr.mxu0 0.0
    %708 = vmatpush1.msra.mxu0 %v288
    %709 = vmatprep.subr.mxu0 0.0
    %710 = vmatpush1.msra.mxu0 0.0
    %711 = vmatprep.subr.mxu0 0.0
    %712 = vmatpush1.msra.mxu0 0.0
    %713 = vmatprep.subr.mxu0 0.0
    %714 = vmatpush1.msra.mxu0 0.0
    %715 = vmatprep.subr.mxu0 0.0
    %716 = vmatpush1.msra.mxu0 0.0
    %717 = vmatprep.subr.mxu0 0.0
    %718 = vmatpush1.msra.mxu0 0.0
    %719 = vmatprep.subr.mxu0 0.0
    %720 = vmatpush1.msra.mxu0 0.0
    %721 = vmatprep.subr.mxu0 0.0
    %722 = vmatpush1.msra.mxu0 0.0
    %723 = vmatprep.subr.mxu0 0.0
    %724 = vmatpush1.msra.mxu0 0.0
    %725 = vmatprep.subr.mxu0 0.0
    %726 = vmatpush1.msra.mxu0 0.0
    %727 = vmatprep.subr.mxu0 0.0
    %728 = vmatpush1.msra.mxu0 0.0
    %729 = vmatprep.subr.mxu0 0.0
    %730 = vmatpush1.msra.mxu0 0.0
    %731 = vmatprep.subr.mxu0 0.0
    %732 = vmatpush1.msra.mxu0 0.0
    %733 = vmatprep.subr.mxu0 0.0
    %734 = vmatpush1.msra.mxu0 0.0
    %735 = vmatprep.subr.mxu0 0.0
    %736 = vmatpush1.msra.mxu0 0.0
    %737 = vmatprep.subr.mxu0 0.0
    %738 = vmatpush1.msra.mxu0 0.0
    %739 = vmatprep.subr.mxu0 0.0
    %740 = vmatpush1.msra.mxu0 0.0
    %741 = vmatprep.subr.mxu0 0.0
    %742 = vmatpush1.msra.mxu0 0.0
    %743 = vmatprep.subr.mxu0 0.0
    %744 = vmatpush1.msra.mxu0 0.0
    %745 = vmatprep.subr.mxu0 0.0
    %746 = vmatpush1.msra.mxu0 0.0
    %747 = vmatprep.subr.mxu0 0.0
    %748 = vmatpush1.msra.mxu0 0.0
    %749 = vmatprep.subr.mxu0 0.0
    %750 = vmatpush1.msra.mxu0 0.0
    %751 = vmatprep.subr.mxu0 0.0
    %752 = vmatpush1.msra.mxu0 0.0
    %753 = vmatprep.subr.mxu0 0.0
    %754 = vmatpush1.msra.mxu0 0.0
    %755 = vmatprep.subr.mxu0 0.0
    %756 = vmatpush1.msra.mxu0 0.0
    %757 = vmatprep.subr.mxu0 0.0
    %758 = vmatpush1.msra.mxu0 0.0
    %759 = vmatprep.subr.mxu0 0.0
    %760 = vmatpush1.msra.mxu0 0.0
    %761 = vmatprep.subr.mxu0 0.0
    %762 = vmatpush1.msra.mxu0 0.0
    %763 = vmatprep.subr.mxu0 0.0
    %764 = vmatpush1.msra.mxu0 0.0
    %765 = vmatprep.mubr.f32.mxu0 0.0
    %766 = vmatmul.mubr.f32.gmra.mrb[0].mxu0 %v699
    %v767 = vpop.f32.mrb[0].mxu0
    %v768 = vadd.f32 0.0, %v767
    %v769 = vpop.f32.mrb[0].mxu0
    %770 = vdwg.mxu0
    %v772 = vrot.slane %v768, 4
    %v774 = vadd.f32 %v379, %v772
    %v775 = vxor.u32 %v774, 2147483648
    %v776 = vmul.f32 %v775, 1.442695
    %v777 = vpow.pop %v776
    %v778 = vadd.f32 %v777, 1.0
    %v779 = vrcp.pop %v778
    %v780 = vmul.f32 1.0, %v779
    %v781 = vadd.f32 %v768, %v376
    %v783 = vrot.slane %v781, 4
    %784 = vrot.lane.b32.xlu0 %v783, 64
    %v785 = vpop.permute.xlu0 %784
    %v787 = vmul.f32 %v780, %v785
    %789 = vrot.lane.b32.xlu0 %v787, 64
    %v790 = vpop.permute.xlu0 %789
    %v792 = vadd.f32 %v369, %v790
    %v793 = vtanh.pop %v792
    %v794 = vsub.f32 1.0, %v780
    %796 = vrot.lane.b32.xlu0 %v793, 96
    %v797 = vpop.permute.xlu0 %796
    %v799 = vmul.f32 %v794, %v797
    %v800 = vrot.slane %v581, 2
    %v802 = vmul.f32 %v780, %v800
    %v803 = vadd.f32 %v799, %v802
    %805 = vrot.lane.b32.xlu0 %v694, 96
    %v806 = vpop.permute.xlu0 %805
    %vm808 = vcmask 257026
    %809 = vst.msk [vmem:[#allocation2] sm:$0xc] %vm808, %v806
    %vm810 = vcmask 521476
    %811 = vst.msk [vmem:[#allocation2 + $0x8] sm:$0x30] %vm810, %v803
    %v812 = vrot.slane %v694, 2
    %813 = vrot.lane.b32.xlu0 %v812, 96
    %v814 = vpop.permute.xlu0 %813
    %v815 = vsel %vm380, %v814, 0
    %817 = vmatprep.subr.mxu0 0.0
    %818 = vmatpush1.msra.mxu0 %v181
    %819 = vmatprep.subr.mxu0 0.0
    %820 = vmatpush1.msra.mxu0 %v182
    %821 = vmatprep.subr.mxu0 0.0
    %822 = vmatpush1.msra.mxu0 %v183
    %823 = vmatprep.subr.mxu0 0.0
    %824 = vmatpush1.msra.mxu0 %v184
    %825 = vmatprep.subr.mxu0 0.0
    %826 = vmatpush1.msra.mxu0 0.0
    %827 = vmatprep.subr.mxu0 0.0
    %828 = vmatpush1.msra.mxu0 0.0
    %829 = vmatprep.subr.mxu0 0.0
    %830 = vmatpush1.msra.mxu0 0.0
    %831 = vmatprep.subr.mxu0 0.0
    %832 = vmatpush1.msra.mxu0 0.0
    %833 = vmatprep.subr.mxu0 0.0
    %834 = vmatpush1.msra.mxu0 0.0
    %835 = vmatprep.subr.mxu0 0.0
    %836 = vmatpush1.msra.mxu0 0.0
    %837 = vmatprep.subr.mxu0 0.0
    %838 = vmatpush1.msra.mxu0 0.0
    %839 = vmatprep.subr.mxu0 0.0
    %840 = vmatpush1.msra.mxu0 0.0
    %841 = vmatprep.subr.mxu0 0.0
    %842 = vmatpush1.msra.mxu0 0.0
    %843 = vmatprep.subr.mxu0 0.0
    %844 = vmatpush1.msra.mxu0 0.0
    %845 = vmatprep.subr.mxu0 0.0
    %846 = vmatpush1.msra.mxu0 0.0
    %847 = vmatprep.subr.mxu0 0.0
    %848 = vmatpush1.msra.mxu0 0.0
    %849 = vmatprep.subr.mxu0 0.0
    %850 = vmatpush1.msra.mxu0 0.0
    %851 = vmatprep.subr.mxu0 0.0
    %852 = vmatpush1.msra.mxu0 0.0
    %853 = vmatprep.subr.mxu0 0.0
    %854 = vmatpush1.msra.mxu0 0.0
    %855 = vmatprep.subr.mxu0 0.0
    %856 = vmatpush1.msra.mxu0 0.0
    %857 = vmatprep.subr.mxu0 0.0
    %858 = vmatpush1.msra.mxu0 0.0
    %859 = vmatprep.subr.mxu0 0.0
    %860 = vmatpush1.msra.mxu0 0.0
    %861 = vmatprep.subr.mxu0 0.0
    %862 = vmatpush1.msra.mxu0 0.0
    %863 = vmatprep.subr.mxu0 0.0
    %864 = vmatpush1.msra.mxu0 0.0
    %865 = vmatprep.subr.mxu0 0.0
    %866 = vmatpush1.msra.mxu0 0.0
    %867 = vmatprep.subr.mxu0 0.0
    %868 = vmatpush1.msra.mxu0 0.0
    %869 = vmatprep.subr.mxu0 0.0
    %870 = vmatpush1.msra.mxu0 0.0
    %871 = vmatprep.subr.mxu0 0.0
    %872 = vmatpush1.msra.mxu0 0.0
    %873 = vmatprep.subr.mxu0 0.0
    %874 = vmatpush1.msra.mxu0 0.0
    %875 = vmatprep.subr.mxu0 0.0
    %876 = vmatpush1.msra.mxu0 0.0
    %877 = vmatprep.subr.mxu0 0.0
    %878 = vmatpush1.msra.mxu0 0.0
    %879 = vmatprep.subr.mxu0 0.0
    %880 = vmatpush1.msra.mxu0 0.0
    %881 = vmatprep.mubr.f32.mxu0 0.0
    %882 = vmatmul.mubr.f32.gmra.mrb[0].mxu0 %v815
    %v883 = vpop.f32.mrb[0].mxu0
    %v884 = vadd.f32 0.0, %v883
    %v885 = vpop.f32.mrb[0].mxu0
    %886 = vdwg.mxu0
    %v888 = vrot.slane %v884, 4
    %v890 = vadd.f32 %v281, %v888
    %v891 = vxor.u32 %v890, 2147483648
    %v892 = vmul.f32 %v891, 1.442695
    %v893 = vpow.pop %v892
    %v894 = vadd.f32 %v893, 1.0
    %v895 = vrcp.pop %v894
    %v896 = vmul.f32 1.0, %v895
    %v897 = vadd.f32 %v884, %v279
    %v899 = vrot.slane %v897, 4
    %900 = vrot.lane.b32.xlu0 %v899, 64
    %v901 = vpop.permute.xlu0 %900
    %v903 = vmul.f32 %v896, %v901
    %905 = vrot.lane.b32.xlu0 %v903, 64
    %v906 = vpop.permute.xlu0 %905
    %v908 = vadd.f32 %v267, %v906
    %v909 = vtanh.pop %v908
    %v910 = vsub.f32 1.0, %v896
    %912 = vrot.lane.b32.xlu0 %v909, 96
    %v913 = vpop.permute.xlu0 %912
    %v915 = vmul.f32 %v910, %v913
    %v916 = vrot.slane %v694, 6
    %v918 = vmul.f32 %v896, %v916
    %v919 = vadd.f32 %v915, %v918
    %v921 = vrot.slane %v803, 4
    %922 = vrot.lane.b32.xlu0 %v921, 96
    %v923 = vpop.permute.xlu0 %922
    %v924 = vsel %vm380, %v923, 0
    %926 = vmatprep.subr.mxu0 0.0
    %927 = vmatpush1.msra.mxu0 %v285
    %928 = vmatprep.subr.mxu0 0.0
    %929 = vmatpush1.msra.mxu0 %v286
    %930 = vmatprep.subr.mxu0 0.0
    %931 = vmatpush1.msra.mxu0 %v287
    %932 = vmatprep.subr.mxu0 0.0
    %933 = vmatpush1.msra.mxu0 %v288
    %934 = vmatprep.subr.mxu0 0.0
    %935 = vmatpush1.msra.mxu0 0.0
    %936 = vmatprep.subr.mxu0 0.0
    %937 = vmatpush1.msra.mxu0 0.0
    %938 = vmatprep.subr.mxu0 0.0
    %939 = vmatpush1.msra.mxu0 0.0
    %940 = vmatprep.subr.mxu0 0.0
    %941 = vmatpush1.msra.mxu0 0.0
    %942 = vmatprep.subr.mxu0 0.0
    %943 = vmatpush1.msra.mxu0 0.0
    %944 = vmatprep.subr.mxu0 0.0
    %945 = vmatpush1.msra.mxu0 0.0
    %946 = vmatprep.subr.mxu0 0.0
    %947 = vmatpush1.msra.mxu0 0.0
    %948 = vmatprep.subr.mxu0 0.0
    %949 = vmatpush1.msra.mxu0 0.0
    %950 = vmatprep.subr.mxu0 0.0
    %951 = vmatpush1.msra.mxu0 0.0
    %952 = vmatprep.subr.mxu0 0.0
    %953 = vmatpush1.msra.mxu0 0.0
    %954 = vmatprep.subr.mxu0 0.0
    %955 = vmatpush1.msra.mxu0 0.0
    %956 = vmatprep.subr.mxu0 0.0
    %957 = vmatpush1.msra.mxu0 0.0
    %958 = vmatprep.subr.mxu0 0.0
    %959 = vmatpush1.msra.mxu0 0.0
    %960 = vmatprep.subr.mxu0 0.0
    %961 = vmatpush1.msra.mxu0 0.0
    %962 = vmatprep.subr.mxu0 0.0
    %963 = vmatpush1.msra.mxu0 0.0
    %964 = vmatprep.subr.mxu0 0.0
    %965 = vmatpush1.msra.mxu0 0.0
    %966 = vmatprep.subr.mxu0 0.0
    %967 = vmatpush1.msra.mxu0 0.0
    %968 = vmatprep.subr.mxu0 0.0
    %969 = vmatpush1.msra.mxu0 0.0
    %970 = vmatprep.subr.mxu0 0.0
    %971 = vmatpush1.msra.mxu0 0.0
    %972 = vmatprep.subr.mxu0 0.0
    %973 = vmatpush1.msra.mxu0 0.0
    %974 = vmatprep.subr.mxu0 0.0
    %975 = vmatpush1.msra.mxu0 0.0
    %976 = vmatprep.subr.mxu0 0.0
    %977 = vmatpush1.msra.mxu0 0.0
    %978 = vmatprep.subr.mxu0 0.0
    %979 = vmatpush1.msra.mxu0 0.0
    %980 = vmatprep.subr.mxu0 0.0
    %981 = vmatpush1.msra.mxu0 0.0
    %982 = vmatprep.subr.mxu0 0.0
    %983 = vmatpush1.msra.mxu0 0.0
    %984 = vmatprep.subr.mxu0 0.0
    %985 = vmatpush1.msra.mxu0 0.0
    %986 = vmatprep.subr.mxu0 0.0
    %987 = vmatpush1.msra.mxu0 0.0
    %988 = vmatprep.subr.mxu0 0.0
    %989 = vmatpush1.msra.mxu0 0.0
    %990 = vmatprep.mubr.f32.mxu0 0.0
    %991 = vmatmul.mubr.f32.gmra.mrb[0].mxu0 %v924
    %v992 = vpop.f32.mrb[0].mxu0
    %v993 = vadd.f32 0.0, %v992
    %v994 = vpop.f32.mrb[0].mxu0
    %995 = vdwg.mxu0
    %v997 = vrot.slane %v993, 6
    %v999 = vadd.f32 %v379, %v997
    %v1000 = vxor.u32 %v999, 2147483648
    %v1001 = vmul.f32 %v1000, 1.442695
    %v1002 = vpow.pop %v1001
    %v1003 = vadd.f32 %v1002, 1.0
    %v1004 = vrcp.pop %v1003
    %v1005 = vmul.f32 1.0, %v1004
    %v1006 = vadd.f32 %v993, %v376
    %v1008 = vrot.slane %v1006, 6
    %1009 = vrot.lane.b32.xlu0 %v1008, 64
    %v1010 = vpop.permute.xlu0 %1009
    %v1012 = vmul.f32 %v1005, %v1010
    %1014 = vrot.lane.b32.xlu0 %v1012, 64
    %v1015 = vpop.permute.xlu0 %1014
    %v1017 = vadd.f32 %v369, %v1015
    %v1018 = vtanh.pop %v1017
    %v1019 = vsub.f32 1.0, %v1005
    %1021 = vrot.lane.b32.xlu0 %v1018, 96
    %v1022 = vpop.permute.xlu0 %1021
    %v1024 = vmul.f32 %v1019, %v1022
    %v1025 = vrot.slane %v803, 2
    %v1027 = vmul.f32 %v1005, %v1025
    %v1028 = vadd.f32 %v1024, %v1027
    %1030 = vrot.lane.b32.xlu0 %v919, 96
    %v1031 = vpop.permute.xlu0 %1030
    %vm1033 = vcmask 259076
    %1034 = vst.msk [vmem:[#allocation2] sm:$0x30] %vm1033, %v1031
    %vm1035 = vcmask 519426
    %1036 = vst.msk [vmem:[#allocation2 + $0x8] sm:$0xc] %vm1035, %v1028
    %v1037 = vrot.slane %v919, 4
    %1038 = vrot.lane.b32.xlu0 %v1037, 96
    %v1039 = vpop.permute.xlu0 %1038
    %v1040 = vsel %vm380, %v1039, 0
    %1042 = vmatprep.subr.mxu0 0.0
    %1043 = vmatpush1.msra.mxu0 %v181
    %1044 = vmatprep.subr.mxu0 0.0
    %1045 = vmatpush1.msra.mxu0 %v182
    %1046 = vmatprep.subr.mxu0 0.0
    %1047 = vmatpush1.msra.mxu0 %v183
    %1048 = vmatprep.subr.mxu0 0.0
    %1049 = vmatpush1.msra.mxu0 %v184
    %1050 = vmatprep.subr.mxu0 0.0
    %1051 = vmatpush1.msra.mxu0 0.0
    %1052 = vmatprep.subr.mxu0 0.0
    %1053 = vmatpush1.msra.mxu0 0.0
    %1054 = vmatprep.subr.mxu0 0.0
    %1055 = vmatpush1.msra.mxu0 0.0
    %1056 = vmatprep.subr.mxu0 0.0
    %1057 = vmatpush1.msra.mxu0 0.0
    %1058 = vmatprep.subr.mxu0 0.0
    %1059 = vmatpush1.msra.mxu0 0.0
    %1060 = vmatprep.subr.mxu0 0.0
    %1061 = vmatpush1.msra.mxu0 0.0
    %1062 = vmatprep.subr.mxu0 0.0
    %1063 = vmatpush1.msra.mxu0 0.0
    %1064 = vmatprep.subr.mxu0 0.0
    %1065 = vmatpush1.msra.mxu0 0.0
    %1066 = vmatprep.subr.mxu0 0.0
    %1067 = vmatpush1.msra.mxu0 0.0
    %1068 = vmatprep.subr.mxu0 0.0
    %1069 = vmatpush1.msra.mxu0 0.0
    %1070 = vmatprep.subr.mxu0 0.0
    %1071 = vmatpush1.msra.mxu0 0.0
    %1072 = vmatprep.subr.mxu0 0.0
    %1073 = vmatpush1.msra.mxu0 0.0
    %1074 = vmatprep.subr.mxu0 0.0
    %1075 = vmatpush1.msra.mxu0 0.0
    %1076 = vmatprep.subr.mxu0 0.0
    %1077 = vmatpush1.msra.mxu0 0.0
    %1078 = vmatprep.subr.mxu0 0.0
    %1079 = vmatpush1.msra.mxu0 0.0
    %1080 = vmatprep.subr.mxu0 0.0
    %1081 = vmatpush1.msra.mxu0 0.0
    %1082 = vmatprep.subr.mxu0 0.0
    %1083 = vmatpush1.msra.mxu0 0.0
    %1084 = vmatprep.subr.mxu0 0.0
    %1085 = vmatpush1.msra.mxu0 0.0
    %1086 = vmatprep.subr.mxu0 0.0
    %1087 = vmatpush1.msra.mxu0 0.0
    %1088 = vmatprep.subr.mxu0 0.0
    %1089 = vmatpush1.msra.mxu0 0.0
    %1090 = vmatprep.subr.mxu0 0.0
    %1091 = vmatpush1.msra.mxu0 0.0
    %1092 = vmatprep.subr.mxu0 0.0
    %1093 = vmatpush1.msra.mxu0 0.0
    %1094 = vmatprep.subr.mxu0 0.0
    %1095 = vmatpush1.msra.mxu0 0.0
    %1096 = vmatprep.subr.mxu0 0.0
    %1097 = vmatpush1.msra.mxu0 0.0
    %1098 = vmatprep.subr.mxu0 0.0
    %1099 = vmatpush1.msra.mxu0 0.0
    %1100 = vmatprep.subr.mxu0 0.0
    %1101 = vmatpush1.msra.mxu0 0.0
    %1102 = vmatprep.subr.mxu0 0.0
    %1103 = vmatpush1.msra.mxu0 0.0
    %1104 = vmatprep.subr.mxu0 0.0
    %1105 = vmatpush1.msra.mxu0 0.0
    %1106 = vmatprep.mubr.f32.mxu0 0.0
    %1107 = vmatmul.mubr.f32.gmra.mrb[0].mxu0 %v1040
    %v1108 = vpop.f32.mrb[0].mxu0
    %v1109 = vadd.f32 0.0, %v1108
    %v1110 = vpop.f32.mrb[0].mxu0
    %1111 = vdwg.mxu0
    %v1113 = vrot.slane %v1109, 2
    %v1115 = vadd.f32 %v281, %v1113
    %v1116 = vxor.u32 %v1115, 2147483648
    %v1117 = vmul.f32 %v1116, 1.442695
    %v1118 = vpow.pop %v1117
    %v1119 = vadd.f32 %v1118, 1.0
    %v1120 = vrcp.pop %v1119
    %v1121 = vmul.f32 1.0, %v1120
    %v1122 = vadd.f32 %v1109, %v279
    %v1124 = vrot.slane %v1122, 2
    %1125 = vrot.lane.b32.xlu0 %v1124, 64
    %v1126 = vpop.permute.xlu0 %1125
    %v1128 = vmul.f32 %v1121, %v1126
    %1130 = vrot.lane.b32.xlu0 %v1128, 64
    %v1131 = vpop.permute.xlu0 %1130
    %v1133 = vadd.f32 %v267, %v1131
    %v1134 = vtanh.pop %v1133
    %v1135 = vsub.f32 1.0, %v1121
    %1137 = vrot.lane.b32.xlu0 %v1134, 96
    %v1138 = vpop.permute.xlu0 %1137
    %v1140 = vmul.f32 %v1135, %v1138
    %v1141 = vrot.slane %v919, 6
    %v1143 = vmul.f32 %v1121, %v1141
    %v1144 = vadd.f32 %v1140, %v1143
    %v1146 = vrot.slane %v1028, 2
    %1147 = vrot.lane.b32.xlu0 %v1146, 96
    %v1148 = vpop.permute.xlu0 %1147
    %v1149 = vsel %vm380, %v1148, 0
    %1151 = vmatprep.subr.mxu0 0.0
    %1152 = vmatpush1.msra.mxu0 %v285
    %1153 = vmatprep.subr.mxu0 0.0
    %1154 = vmatpush1.msra.mxu0 %v286
    %1155 = vmatprep.subr.mxu0 0.0
    %1156 = vmatpush1.msra.mxu0 %v287
    %1157 = vmatprep.subr.mxu0 0.0
    %1158 = vmatpush1.msra.mxu0 %v288
    %1159 = vmatprep.subr.mxu0 0.0
    %1160 = vmatpush1.msra.mxu0 0.0
    %1161 = vmatprep.subr.mxu0 0.0
    %1162 = vmatpush1.msra.mxu0 0.0
    %1163 = vmatprep.subr.mxu0 0.0
    %1164 = vmatpush1.msra.mxu0 0.0
    %1165 = vmatprep.subr.mxu0 0.0
    %1166 = vmatpush1.msra.mxu0 0.0
    %1167 = vmatprep.subr.mxu0 0.0
    %1168 = vmatpush1.msra.mxu0 0.0
    %1169 = vmatprep.subr.mxu0 0.0
    %1170 = vmatpush1.msra.mxu0 0.0
    %1171 = vmatprep.subr.mxu0 0.0
    %1172 = vmatpush1.msra.mxu0 0.0
    %1173 = vmatprep.subr.mxu0 0.0
    %1174 = vmatpush1.msra.mxu0 0.0
    %1175 = vmatprep.subr.mxu0 0.0
    %1176 = vmatpush1.msra.mxu0 0.0
    %1177 = vmatprep.subr.mxu0 0.0
    %1178 = vmatpush1.msra.mxu0 0.0
    %1179 = vmatprep.subr.mxu0 0.0
    %1180 = vmatpush1.msra.mxu0 0.0
    %1181 = vmatprep.subr.mxu0 0.0
    %1182 = vmatpush1.msra.mxu0 0.0
    %1183 = vmatprep.subr.mxu0 0.0
    %1184 = vmatpush1.msra.mxu0 0.0
    %1185 = vmatprep.subr.mxu0 0.0
    %1186 = vmatpush1.msra.mxu0 0.0
    %1187 = vmatprep.subr.mxu0 0.0
    %1188 = vmatpush1.msra.mxu0 0.0
    %1189 = vmatprep.subr.mxu0 0.0
    %1190 = vmatpush1.msra.mxu0 0.0
    %1191 = vmatprep.subr.mxu0 0.0
    %1192 = vmatpush1.msra.mxu0 0.0
    %1193 = vmatprep.subr.mxu0 0.0
    %1194 = vmatpush1.msra.mxu0 0.0
    %1195 = vmatprep.subr.mxu0 0.0
    %1196 = vmatpush1.msra.mxu0 0.0
    %1197 = vmatprep.subr.mxu0 0.0
    %1198 = vmatpush1.msra.mxu0 0.0
    %1199 = vmatprep.subr.mxu0 0.0
    %1200 = vmatpush1.msra.mxu0 0.0
    %1201 = vmatprep.subr.mxu0 0.0
    %1202 = vmatpush1.msra.mxu0 0.0
    %1203 = vmatprep.subr.mxu0 0.0
    %1204 = vmatpush1.msra.mxu0 0.0
    %1205 = vmatprep.subr.mxu0 0.0
    %1206 = vmatpush1.msra.mxu0 0.0
    %1207 = vmatprep.subr.mxu0 0.0
    %1208 = vmatpush1.msra.mxu0 0.0
    %1209 = vmatprep.subr.mxu0 0.0
    %1210 = vmatpush1.msra.mxu0 0.0
    %1211 = vmatprep.subr.mxu0 0.0
    %1212 = vmatpush1.msra.mxu0 0.0
    %1213 = vmatprep.subr.mxu0 0.0
    %1214 = vmatpush1.msra.mxu0 0.0
    %1215 = vmatprep.mubr.f32.mxu0 0.0
    %1216 = vmatmul.mubr.f32.gmra.mrb[0].mxu0 %v1149
    %v1217 = vpop.f32.mrb[0].mxu0
    %v1218 = vadd.f32 0.0, %v1217
    %v1219 = vpop.f32.mrb[0].mxu0
    %1220 = vdwg.mxu0
    %v1221 = vadd.f32 %v379, %v1218
    %v1222 = vxor.u32 %v1221, 2147483648
    %v1223 = vmul.f32 %v1222, 1.442695
    %v1224 = vpow.pop %v1223
    %v1225 = vadd.f32 %v1224, 1.0
    %v1226 = vrcp.pop %v1225
    %v1227 = vmul.f32 1.0, %v1226
    %v1228 = vadd.f32 %v1218, %v376
    %1230 = vrot.lane.b32.xlu0 %v1228, 64
    %v1231 = vpop.permute.xlu0 %1230
    %v1233 = vmul.f32 %v1227, %v1231
    %1235 = vrot.lane.b32.xlu0 %v1233, 64
    %v1236 = vpop.permute.xlu0 %1235
    %v1238 = vadd.f32 %v369, %v1236
    %v1239 = vtanh.pop %v1238
    %v1240 = vsub.f32 1.0, %v1227
    %1242 = vrot.lane.b32.xlu0 %v1239, 96
    %v1243 = vpop.permute.xlu0 %1242
    %v1245 = vmul.f32 %v1240, %v1243
    %v1247 = vmul.f32 %v1227, %v1146
    %v1248 = vadd.f32 %v1245, %v1247
    %1250 = vrot.lane.b32.xlu0 %v1144, 96
    %v1251 = vpop.permute.xlu0 %1250
    %vm1253 = vcmask 261126
    %1254 = vst.msk [vmem:[#allocation2] sm:$0xc0] %vm1253, %v1251
    %vm1255 = vcmask 517376
    %1256 = vst.msk [vmem:[#allocation2 + $0x8] sm:$0x3] %vm1255, %v1248
    %v1257 = vrot.slane %v1144, 6
    %1258 = vrot.lane.b32.xlu0 %v1257, 96
    %v1259 = vpop.permute.xlu0 %1258
    %v1260 = vsel %vm380, %v1259, 0
    %1262 = vmatprep.subr.mxu0 0.0
    %1263 = vmatpush1.msra.mxu0 %v181
    %1264 = vmatprep.subr.mxu0 0.0
    %1265 = vmatpush1.msra.mxu0 %v182
    %1266 = vmatprep.subr.mxu0 0.0
    %1267 = vmatpush1.msra.mxu0 %v183
    %1268 = vmatprep.subr.mxu0 0.0
    %1269 = vmatpush1.msra.mxu0 %v184
    %1270 = vmatprep.subr.mxu0 0.0
    %1271 = vmatpush1.msra.mxu0 0.0
    %1272 = vmatprep.subr.mxu0 0.0
    %1273 = vmatpush1.msra.mxu0 0.0
    %1274 = vmatprep.subr.mxu0 0.0
    %1275 = vmatpush1.msra.mxu0 0.0
    %1276 = vmatprep.subr.mxu0 0.0
    %1277 = vmatpush1.msra.mxu0 0.0
    %1278 = vmatprep.subr.mxu0 0.0
    %1279 = vmatpush1.msra.mxu0 0.0
    %1280 = vmatprep.subr.mxu0 0.0
    %1281 = vmatpush1.msra.mxu0 0.0
    %1282 = vmatprep.subr.mxu0 0.0
    %1283 = vmatpush1.msra.mxu0 0.0
    %1284 = vmatprep.subr.mxu0 0.0
    %1285 = vmatpush1.msra.mxu0 0.0
    %1286 = vmatprep.subr.mxu0 0.0
    %1287 = vmatpush1.msra.mxu0 0.0
    %1288 = vmatprep.subr.mxu0 0.0
    %1289 = vmatpush1.msra.mxu0 0.0
    %1290 = vmatprep.subr.mxu0 0.0
    %1291 = vmatpush1.msra.mxu0 0.0
    %1292 = vmatprep.subr.mxu0 0.0
    %1293 = vmatpush1.msra.mxu0 0.0
    %1294 = vmatprep.subr.mxu0 0.0
    %1295 = vmatpush1.msra.mxu0 0.0
    %1296 = vmatprep.subr.mxu0 0.0
    %1297 = vmatpush1.msra.mxu0 0.0
    %1298 = vmatprep.subr.mxu0 0.0
    %1299 = vmatpush1.msra.mxu0 0.0
    %1300 = vmatprep.subr.mxu0 0.0
    %1301 = vmatpush1.msra.mxu0 0.0
    %1302 = vmatprep.subr.mxu0 0.0
    %1303 = vmatpush1.msra.mxu0 0.0
    %1304 = vmatprep.subr.mxu0 0.0
    %1305 = vmatpush1.msra.mxu0 0.0
    %1306 = vmatprep.subr.mxu0 0.0
    %1307 = vmatpush1.msra.mxu0 0.0
    %1308 = vmatprep.subr.mxu0 0.0
    %1309 = vmatpush1.msra.mxu0 0.0
    %1310 = vmatprep.subr.mxu0 0.0
    %1311 = vmatpush1.msra.mxu0 0.0
    %1312 = vmatprep.subr.mxu0 0.0
    %1313 = vmatpush1.msra.mxu0 0.0
    %1314 = vmatprep.subr.mxu0 0.0
    %1315 = vmatpush1.msra.mxu0 0.0
    %1316 = vmatprep.subr.mxu0 0.0
    %1317 = vmatpush1.msra.mxu0 0.0
    %1318 = vmatprep.subr.mxu0 0.0
    %1319 = vmatpush1.msra.mxu0 0.0
    %1320 = vmatprep.subr.mxu0 0.0
    %1321 = vmatpush1.msra.mxu0 0.0
    %1322 = vmatprep.subr.mxu0 0.0
    %1323 = vmatpush1.msra.mxu0 0.0
    %1324 = vmatprep.subr.mxu0 0.0
    %1325 = vmatpush1.msra.mxu0 0.0
    %1326 = vmatprep.mubr.f32.mxu0 0.0
    %1327 = vmatmul.mubr.f32.gmra.mrb[0].mxu0 %v1260
    %v1328 = vpop.f32.mrb[0].mxu0
    %v1329 = vadd.f32 0.0, %v1328
    %v1330 = vpop.f32.mrb[0].mxu0
    %1331 = vdwg.mxu0
    %v1332 = vadd.f32 %v282, %v1329
    %v1333 = vxor.u32 %v1332, 2147483648
    %v1334 = vmul.f32 %v1333, 1.442695
    %v1335 = vpow.pop %v1334
    %v1336 = vadd.f32 %v1335, 1.0
    %v1337 = vrcp.pop %v1336
    %v1338 = vmul.f32 1.0, %v1337
    %v1339 = vadd.f32 %v1329, %v279
    %1341 = vrot.lane.b32.xlu0 %v1339, 64
    %v1342 = vpop.permute.xlu0 %1341
    %v1344 = vmul.f32 %v1338, %v1342
    %1346 = vrot.lane.b32.xlu0 %v1344, 64
    %v1347 = vpop.permute.xlu0 %1346
    %v1349 = vadd.f32 %v272, %v1347
    %v1350 = vtanh.pop %v1349
    %v1351 = vsub.f32 1.0, %v1338
    %1353 = vrot.lane.b32.xlu0 %v1350, 96
    %v1354 = vpop.permute.xlu0 %1353
    %v1356 = vmul.f32 %v1351, %v1354
    %v1358 = vmul.f32 %v1338, %v1257
    %v1359 = vadd.f32 %v1356, %v1358
    %1361 = vrot.lane.b32.xlu0 %v1248, 96
    %v1362 = vpop.permute.xlu0 %1361
    %v1363 = vsel %vm380, %v1362, 0
    %1365 = vmatprep.subr.mxu0 0.0
    %1366 = vmatpush1.msra.mxu0 %v285
    %1367 = vmatprep.subr.mxu0 0.0
    %1368 = vmatpush1.msra.mxu0 %v286
    %1369 = vmatprep.subr.mxu0 0.0
    %1370 = vmatpush1.msra.mxu0 %v287
    %1371 = vmatprep.subr.mxu0 0.0
    %1372 = vmatpush1.msra.mxu0 %v288
    %1373 = vmatprep.subr.mxu0 0.0
    %1374 = vmatpush1.msra.mxu0 0.0
    %1375 = vmatprep.subr.mxu0 0.0
    %1376 = vmatpush1.msra.mxu0 0.0
    %1377 = vmatprep.subr.mxu0 0.0
    %1378 = vmatpush1.msra.mxu0 0.0
    %1379 = vmatprep.subr.mxu0 0.0
    %1380 = vmatpush1.msra.mxu0 0.0
    %1381 = vmatprep.subr.mxu0 0.0
    %1382 = vmatpush1.msra.mxu0 0.0
    %1383 = vmatprep.subr.mxu0 0.0
    %1384 = vmatpush1.msra.mxu0 0.0
    %1385 = vmatprep.subr.mxu0 0.0
    %1386 = vmatpush1.msra.mxu0 0.0
    %1387 = vmatprep.subr.mxu0 0.0
    %1388 = vmatpush1.msra.mxu0 0.0
    %1389 = vmatprep.subr.mxu0 0.0
    %1390 = vmatpush1.msra.mxu0 0.0
    %1391 = vmatprep.subr.mxu0 0.0
    %1392 = vmatpush1.msra.mxu0 0.0
    %1393 = vmatprep.subr.mxu0 0.0
    %1394 = vmatpush1.msra.mxu0 0.0
    %1395 = vmatprep.subr.mxu0 0.0
    %1396 = vmatpush1.msra.mxu0 0.0
    %1397 = vmatprep.subr.mxu0 0.0
    %1398 = vmatpush1.msra.mxu0 0.0
    %1399 = vmatprep.subr.mxu0 0.0
    %1400 = vmatpush1.msra.mxu0 0.0
    %1401 = vmatprep.subr.mxu0 0.0
    %1402 = vmatpush1.msra.mxu0 0.0
    %1403 = vmatprep.subr.mxu0 0.0
    %1404 = vmatpush1.msra.mxu0 0.0
    %1405 = vmatprep.subr.mxu0 0.0
    %1406 = vmatpush1.msra.mxu0 0.0
    %1407 = vmatprep.subr.mxu0 0.0
    %1408 = vmatpush1.msra.mxu0 0.0
    %1409 = vmatprep.subr.mxu0 0.0
    %1410 = vmatpush1.msra.mxu0 0.0
    %1411 = vmatprep.subr.mxu0 0.0
    %1412 = vmatpush1.msra.mxu0 0.0
    %1413 = vmatprep.subr.mxu0 0.0
    %1414 = vmatpush1.msra.mxu0 0.0
    %1415 = vmatprep.subr.mxu0 0.0
    %1416 = vmatpush1.msra.mxu0 0.0
    %1417 = vmatprep.subr.mxu0 0.0
    %1418 = vmatpush1.msra.mxu0 0.0
    %1419 = vmatprep.subr.mxu0 0.0
    %1420 = vmatpush1.msra.mxu0 0.0
    %1421 = vmatprep.subr.mxu0 0.0
    %1422 = vmatpush1.msra.mxu0 0.0
    %1423 = vmatprep.subr.mxu0 0.0
    %1424 = vmatpush1.msra.mxu0 0.0
    %1425 = vmatprep.subr.mxu0 0.0
    %1426 = vmatpush1.msra.mxu0 0.0
    %1427 = vmatprep.subr.mxu0 0.0
    %1428 = vmatpush1.msra.mxu0 0.0
    %1429 = vmatprep.mubr.f32.mxu0 0.0
    %1430 = vmatmul.mubr.f32.gmra.mrb[0].mxu0 %v1363
    %v1431 = vpop.f32.mrb[0].mxu0
    %v1432 = vadd.f32 0.0, %v1431
    %v1433 = vpop.f32.mrb[0].mxu0
    %1434 = vdwg.mxu0
    %v1436 = vrot.slane %v1432, 2
    %v1438 = vadd.f32 %v378, %v1436
    %v1439 = vxor.u32 %v1438, 2147483648
    %v1440 = vmul.f32 %v1439, 1.442695
    %v1441 = vpow.pop %v1440
    %v1442 = vadd.f32 %v1441, 1.0
    %v1443 = vrcp.pop %v1442
    %v1444 = vmul.f32 1.0, %v1443
    %v1445 = vadd.f32 %v1432, %v376
    %v1447 = vrot.slane %v1445, 2
    %1448 = vrot.lane.b32.xlu0 %v1447, 64
    %v1449 = vpop.permute.xlu0 %1448
    %v1451 = vmul.f32 %v1444, %v1449
    %1453 = vrot.lane.b32.xlu0 %v1451, 64
    %v1454 = vpop.permute.xlu0 %1453
    %v1456 = vadd.f32 %v364, %v1454
    %v1457 = vtanh.pop %v1456
    %v1458 = vsub.f32 1.0, %v1444
    %1460 = vrot.lane.b32.xlu0 %v1457, 96
    %v1461 = vpop.permute.xlu0 %1460
    %v1463 = vmul.f32 %v1458, %v1461
    %v1464 = vrot.slane %v1248, 2
    %v1466 = vmul.f32 %v1444, %v1464
    %v1467 = vadd.f32 %v1463, %v1466
    %1469 = vrot.lane.b32.xlu0 %v1359, 96
    %v1470 = vpop.permute.xlu0 %1469
    %1472 = vst.msk [vmem:[#allocation2 + $0x8] sm:$0x3] %vm586, %v1470
    %1473 = vst.msk [vmem:[#allocation2] sm:$0xc0] %vm588, %v1467
    %v1474 = vsel %vm380, %v1470, 0
    %1476 = vmatprep.subr.mxu0 0.0
    %1477 = vmatpush1.msra.mxu0 %v181
    %1478 = vmatprep.subr.mxu0 0.0
    %1479 = vmatpush1.msra.mxu0 %v182
    %1480 = vmatprep.subr.mxu0 0.0
    %1481 = vmatpush1.msra.mxu0 %v183
    %1482 = vmatprep.subr.mxu0 0.0
    %1483 = vmatpush1.msra.mxu0 %v184
    %1484 = vmatprep.subr.mxu0 0.0
    %1485 = vmatpush1.msra.mxu0 0.0
    %1486 = vmatprep.subr.mxu0 0.0
    %1487 = vmatpush1.msra.mxu0 0.0
    %1488 = vmatprep.subr.mxu0 0.0
    %1489 = vmatpush1.msra.mxu0 0.0
    %1490 = vmatprep.subr.mxu0 0.0
    %1491 = vmatpush1.msra.mxu0 0.0
    %1492 = vmatprep.subr.mxu0 0.0
    %1493 = vmatpush1.msra.mxu0 0.0
    %1494 = vmatprep.subr.mxu0 0.0
    %1495 = vmatpush1.msra.mxu0 0.0
    %1496 = vmatprep.subr.mxu0 0.0
    %1497 = vmatpush1.msra.mxu0 0.0
    %1498 = vmatprep.subr.mxu0 0.0
    %1499 = vmatpush1.msra.mxu0 0.0
    %1500 = vmatprep.subr.mxu0 0.0
    %1501 = vmatpush1.msra.mxu0 0.0
    %1502 = vmatprep.subr.mxu0 0.0
    %1503 = vmatpush1.msra.mxu0 0.0
    %1504 = vmatprep.subr.mxu0 0.0
    %1505 = vmatpush1.msra.mxu0 0.0
    %1506 = vmatprep.subr.mxu0 0.0
    %1507 = vmatpush1.msra.mxu0 0.0
    %1508 = vmatprep.subr.mxu0 0.0
    %1509 = vmatpush1.msra.mxu0 0.0
    %1510 = vmatprep.subr.mxu0 0.0
    %1511 = vmatpush1.msra.mxu0 0.0
    %1512 = vmatprep.subr.mxu0 0.0
    %1513 = vmatpush1.msra.mxu0 0.0
    %1514 = vmatprep.subr.mxu0 0.0
    %1515 = vmatpush1.msra.mxu0 0.0
    %1516 = vmatprep.subr.mxu0 0.0
    %1517 = vmatpush1.msra.mxu0 0.0
    %1518 = vmatprep.subr.mxu0 0.0
    %1519 = vmatpush1.msra.mxu0 0.0
    %1520 = vmatprep.subr.mxu0 0.0
    %1521 = vmatpush1.msra.mxu0 0.0
    %1522 = vmatprep.subr.mxu0 0.0
    %1523 = vmatpush1.msra.mxu0 0.0
    %1524 = vmatprep.subr.mxu0 0.0
    %1525 = vmatpush1.msra.mxu0 0.0
    %1526 = vmatprep.subr.mxu0 0.0
    %1527 = vmatpush1.msra.mxu0 0.0
    %1528 = vmatprep.subr.mxu0 0.0
    %1529 = vmatpush1.msra.mxu0 0.0
    %1530 = vmatprep.subr.mxu0 0.0
    %1531 = vmatpush1.msra.mxu0 0.0
    %1532 = vmatprep.subr.mxu0 0.0
    %1533 = vmatpush1.msra.mxu0 0.0
    %1534 = vmatprep.subr.mxu0 0.0
    %1535 = vmatpush1.msra.mxu0 0.0
    %1536 = vmatprep.subr.mxu0 0.0
    %1537 = vmatpush1.msra.mxu0 0.0
    %1538 = vmatprep.subr.mxu0 0.0
    %1539 = vmatpush1.msra.mxu0 0.0
    %1540 = vmatprep.mubr.f32.mxu0 0.0
    %1541 = vmatmul.mubr.f32.gmra.mrb[0].mxu0 %v1474
    %v1542 = vpop.f32.mrb[0].mxu0
    %v1543 = vadd.f32 0.0, %v1542
    %v1544 = vpop.f32.mrb[0].mxu0
    %1545 = vdwg.mxu0
    %v1547 = vrot.slane %v1543, 6
    %v1549 = vadd.f32 %v282, %v1547
    %v1550 = vxor.u32 %v1549, 2147483648
    %v1551 = vmul.f32 %v1550, 1.442695
    %v1552 = vpow.pop %v1551
    %v1553 = vadd.f32 %v1552, 1.0
    %v1554 = vrcp.pop %v1553
    %v1555 = vmul.f32 1.0, %v1554
    %v1556 = vadd.f32 %v1543, %v279
    %v1558 = vrot.slane %v1556, 6
    %1559 = vrot.lane.b32.xlu0 %v1558, 64
    %v1560 = vpop.permute.xlu0 %1559
    %v1562 = vmul.f32 %v1555, %v1560
    %1564 = vrot.lane.b32.xlu0 %v1562, 64
    %v1565 = vpop.permute.xlu0 %1564
    %v1567 = vadd.f32 %v272, %v1565
    %v1568 = vtanh.pop %v1567
    %v1569 = vsub.f32 1.0, %v1555
    %1571 = vrot.lane.b32.xlu0 %v1568, 96
    %v1572 = vpop.permute.xlu0 %1571
    %v1574 = vmul.f32 %v1569, %v1572
    %v1575 = vrot.slane %v1359, 6
    %v1577 = vmul.f32 %v1555, %v1575
    %v1578 = vadd.f32 %v1574, %v1577
    %v1580 = vrot.slane %v1467, 6
    %1581 = vrot.lane.b32.xlu0 %v1580, 96
    %v1582 = vpop.permute.xlu0 %1581
    %v1583 = vsel %vm380, %v1582, 0
    %1585 = vmatprep.subr.mxu0 0.0
    %1586 = vmatpush1.msra.mxu0 %v285
    %1587 = vmatprep.subr.mxu0 0.0
    %1588 = vmatpush1.msra.mxu0 %v286
    %1589 = vmatprep.subr.mxu0 0.0
    %1590 = vmatpush1.msra.mxu0 %v287
    %1591 = vmatprep.subr.mxu0 0.0
    %1592 = vmatpush1.msra.mxu0 %v288
    %1593 = vmatprep.subr.mxu0 0.0
    %1594 = vmatpush1.msra.mxu0 0.0
    %1595 = vmatprep.subr.mxu0 0.0
    %1596 = vmatpush1.msra.mxu0 0.0
    %1597 = vmatprep.subr.mxu0 0.0
    %1598 = vmatpush1.msra.mxu0 0.0
    %1599 = vmatprep.subr.mxu0 0.0
    %1600 = vmatpush1.msra.mxu0 0.0
    %1601 = vmatprep.subr.mxu0 0.0
    %1602 = vmatpush1.msra.mxu0 0.0
    %1603 = vmatprep.subr.mxu0 0.0
    %1604 = vmatpush1.msra.mxu0 0.0
    %1605 = vmatprep.subr.mxu0 0.0
    %1606 = vmatpush1.msra.mxu0 0.0
    %1607 = vmatprep.subr.mxu0 0.0
    %1608 = vmatpush1.msra.mxu0 0.0
    %1609 = vmatprep.subr.mxu0 0.0
    %1610 = vmatpush1.msra.mxu0 0.0
    %1611 = vmatprep.subr.mxu0 0.0
    %1612 = vmatpush1.msra.mxu0 0.0
    %1613 = vmatprep.subr.mxu0 0.0
    %1614 = vmatpush1.msra.mxu0 0.0
    %1615 = vmatprep.subr.mxu0 0.0
    %1616 = vmatpush1.msra.mxu0 0.0
    %1617 = vmatprep.subr.mxu0 0.0
    %1618 = vmatpush1.msra.mxu0 0.0
    %1619 = vmatprep.subr.mxu0 0.0
    %1620 = vmatpush1.msra.mxu0 0.0
    %1621 = vmatprep.subr.mxu0 0.0
    %1622 = vmatpush1.msra.mxu0 0.0
    %1623 = vmatprep.subr.mxu0 0.0
    %1624 = vmatpush1.msra.mxu0 0.0
    %1625 = vmatprep.subr.mxu0 0.0
    %1626 = vmatpush1.msra.mxu0 0.0
    %1627 = vmatprep.subr.mxu0 0.0
    %1628 = vmatpush1.msra.mxu0 0.0
    %1629 = vmatprep.subr.mxu0 0.0
    %1630 = vmatpush1.msra.mxu0 0.0
    %1631 = vmatprep.subr.mxu0 0.0
    %1632 = vmatpush1.msra.mxu0 0.0
    %1633 = vmatprep.subr.mxu0 0.0
    %1634 = vmatpush1.msra.mxu0 0.0
    %1635 = vmatprep.subr.mxu0 0.0
    %1636 = vmatpush1.msra.mxu0 0.0
    %1637 = vmatprep.subr.mxu0 0.0
    %1638 = vmatpush1.msra.mxu0 0.0
    %1639 = vmatprep.subr.mxu0 0.0
    %1640 = vmatpush1.msra.mxu0 0.0
    %1641 = vmatprep.subr.mxu0 0.0
    %1642 = vmatpush1.msra.mxu0 0.0
    %1643 = vmatprep.subr.mxu0 0.0
    %1644 = vmatpush1.msra.mxu0 0.0
    %1645 = vmatprep.subr.mxu0 0.0
    %1646 = vmatpush1.msra.mxu0 0.0
    %1647 = vmatprep.subr.mxu0 0.0
    %1648 = vmatpush1.msra.mxu0 0.0
    %1649 = vmatprep.mubr.f32.mxu0 0.0
    %1650 = vmatmul.mubr.f32.gmra.mrb[0].mxu0 %v1583
    %v1651 = vpop.f32.mrb[0].mxu0
    %v1652 = vadd.f32 0.0, %v1651
    %v1653 = vpop.f32.mrb[0].mxu0
    %1654 = vdwg.mxu0
    %v1656 = vrot.slane %v1652, 4
    %v1658 = vadd.f32 %v378, %v1656
    %v1659 = vxor.u32 %v1658, 2147483648
    %v1660 = vmul.f32 %v1659, 1.442695
    %v1661 = vpow.pop %v1660
    %v1662 = vadd.f32 %v1661, 1.0
    %v1663 = vrcp.pop %v1662
    %v1664 = vmul.f32 1.0, %v1663
    %v1665 = vadd.f32 %v1652, %v376
    %v1667 = vrot.slane %v1665, 4
    %1668 = vrot.lane.b32.xlu0 %v1667, 64
    %v1669 = vpop.permute.xlu0 %1668
    %v1671 = vmul.f32 %v1664, %v1669
    %1673 = vrot.lane.b32.xlu0 %v1671, 64
    %v1674 = vpop.permute.xlu0 %1673
    %v1676 = vadd.f32 %v364, %v1674
    %v1677 = vtanh.pop %v1676
    %v1678 = vsub.f32 1.0, %v1664
    %1680 = vrot.lane.b32.xlu0 %v1677, 96
    %v1681 = vpop.permute.xlu0 %1680
    %v1683 = vmul.f32 %v1678, %v1681
    %v1684 = vrot.slane %v1467, 2
    %v1686 = vmul.f32 %v1664, %v1684
    %v1687 = vadd.f32 %v1683, %v1686
    %1689 = vrot.lane.b32.xlu0 %v1578, 96
    %v1690 = vpop.permute.xlu0 %1689
    %1692 = vst.msk [vmem:[#allocation2 + $0x8] sm:$0xc] %vm808, %v1690
    %1693 = vst.msk [vmem:[#allocation2] sm:$0x30] %vm810, %v1687
    %v1694 = vrot.slane %v1578, 2
    %1695 = vrot.lane.b32.xlu0 %v1694, 96
    %v1696 = vpop.permute.xlu0 %1695
    %v1697 = vsel %vm380, %v1696, 0
    %1699 = vmatprep.subr.mxu0 0.0
    %1700 = vmatpush1.msra.mxu0 %v181
    %1701 = vmatprep.subr.mxu0 0.0
    %1702 = vmatpush1.msra.mxu0 %v182
    %1703 = vmatprep.subr.mxu0 0.0
    %1704 = vmatpush1.msra.mxu0 %v183
    %1705 = vmatprep.subr.mxu0 0.0
    %1706 = vmatpush1.msra.mxu0 %v184
    %1707 = vmatprep.subr.mxu0 0.0
    %1708 = vmatpush1.msra.mxu0 0.0
    %1709 = vmatprep.subr.mxu0 0.0
    %1710 = vmatpush1.msra.mxu0 0.0
    %1711 = vmatprep.subr.mxu0 0.0
    %1712 = vmatpush1.msra.mxu0 0.0
    %1713 = vmatprep.subr.mxu0 0.0
    %1714 = vmatpush1.msra.mxu0 0.0
    %1715 = vmatprep.subr.mxu0 0.0
    %1716 = vmatpush1.msra.mxu0 0.0
    %1717 = vmatprep.subr.mxu0 0.0
    %1718 = vmatpush1.msra.mxu0 0.0
    %1719 = vmatprep.subr.mxu0 0.0
    %1720 = vmatpush1.msra.mxu0 0.0
    %1721 = vmatprep.subr.mxu0 0.0
    %1722 = vmatpush1.msra.mxu0 0.0
    %1723 = vmatprep.subr.mxu0 0.0
    %1724 = vmatpush1.msra.mxu0 0.0
    %1725 = vmatprep.subr.mxu0 0.0
    %1726 = vmatpush1.msra.mxu0 0.0
    %1727 = vmatprep.subr.mxu0 0.0
    %1728 = vmatpush1.msra.mxu0 0.0
    %1729 = vmatprep.subr.mxu0 0.0
    %1730 = vmatpush1.msra.mxu0 0.0
    %1731 = vmatprep.subr.mxu0 0.0
    %1732 = vmatpush1.msra.mxu0 0.0
    %1733 = vmatprep.subr.mxu0 0.0
    %1734 = vmatpush1.msra.mxu0 0.0
    %1735 = vmatprep.subr.mxu0 0.0
    %1736 = vmatpush1.msra.mxu0 0.0
    %1737 = vmatprep.subr.mxu0 0.0
    %1738 = vmatpush1.msra.mxu0 0.0
    %1739 = vmatprep.subr.mxu0 0.0
    %1740 = vmatpush1.msra.mxu0 0.0
    %1741 = vmatprep.subr.mxu0 0.0
    %1742 = vmatpush1.msra.mxu0 0.0
    %1743 = vmatprep.subr.mxu0 0.0
    %1744 = vmatpush1.msra.mxu0 0.0
    %1745 = vmatprep.subr.mxu0 0.0
    %1746 = vmatpush1.msra.mxu0 0.0
    %1747 = vmatprep.subr.mxu0 0.0
    %1748 = vmatpush1.msra.mxu0 0.0
    %1749 = vmatprep.subr.mxu0 0.0
    %1750 = vmatpush1.msra.mxu0 0.0
    %1751 = vmatprep.subr.mxu0 0.0
    %1752 = vmatpush1.msra.mxu0 0.0
    %1753 = vmatprep.subr.mxu0 0.0
    %1754 = vmatpush1.msra.mxu0 0.0
    %1755 = vmatprep.subr.mxu0 0.0
    %1756 = vmatpush1.msra.mxu0 0.0
    %1757 = vmatprep.subr.mxu0 0.0
    %1758 = vmatpush1.msra.mxu0 0.0
    %1759 = vmatprep.subr.mxu0 0.0
    %1760 = vmatpush1.msra.mxu0 0.0
    %1761 = vmatprep.subr.mxu0 0.0
    %1762 = vmatpush1.msra.mxu0 0.0
    %1763 = vmatprep.mubr.f32.mxu0 0.0
    %1764 = vmatmul.mubr.f32.gmra.mrb[0].mxu0 %v1697
    %v1765 = vpop.f32.mrb[0].mxu0
    %v1766 = vadd.f32 0.0, %v1765
    %v1767 = vpop.f32.mrb[0].mxu0
    %1768 = vdwg.mxu0
    %v1770 = vrot.slane %v1766, 4
    %v1772 = vadd.f32 %v282, %v1770
    %v1773 = vxor.u32 %v1772, 2147483648
    %v1774 = vmul.f32 %v1773, 1.442695
    %v1775 = vpow.pop %v1774
    %v1776 = vadd.f32 %v1775, 1.0
    %v1777 = vrcp.pop %v1776
    %v1778 = vmul.f32 1.0, %v1777
    %v1779 = vadd.f32 %v1766, %v279
    %v1781 = vrot.slane %v1779, 4
    %1782 = vrot.lane.b32.xlu0 %v1781, 64
    %v1783 = vpop.permute.xlu0 %1782
    %v1785 = vmul.f32 %v1778, %v1783
    %1787 = vrot.lane.b32.xlu0 %v1785, 64
    %v1788 = vpop.permute.xlu0 %1787
    %v1790 = vadd.f32 %v272, %v1788
    %v1791 = vtanh.pop %v1790
    %v1792 = vsub.f32 1.0, %v1778
    %1794 = vrot.lane.b32.xlu0 %v1791, 96
    %v1795 = vpop.permute.xlu0 %1794
    %v1797 = vmul.f32 %v1792, %v1795
    %v1798 = vrot.slane %v1578, 6
    %v1800 = vmul.f32 %v1778, %v1798
    %v1801 = vadd.f32 %v1797, %v1800
    %v1803 = vrot.slane %v1687, 4
    %1804 = vrot.lane.b32.xlu0 %v1803, 96
    %v1805 = vpop.permute.xlu0 %1804
    %v1806 = vsel %vm380, %v1805, 0
    %1808 = vmatprep.subr.mxu0 0.0
    %1809 = vmatpush1.msra.mxu0 %v285
    %1810 = vmatprep.subr.mxu0 0.0
    %1811 = vmatpush1.msra.mxu0 %v286
    %1812 = vmatprep.subr.mxu0 0.0
    %1813 = vmatpush1.msra.mxu0 %v287
    %1814 = vmatprep.subr.mxu0 0.0
    %1815 = vmatpush1.msra.mxu0 %v288
    %1816 = vmatprep.subr.mxu0 0.0
    %1817 = vmatpush1.msra.mxu0 0.0
    %1818 = vmatprep.subr.mxu0 0.0
    %1819 = vmatpush1.msra.mxu0 0.0
    %1820 = vmatprep.subr.mxu0 0.0
    %1821 = vmatpush1.msra.mxu0 0.0
    %1822 = vmatprep.subr.mxu0 0.0
    %1823 = vmatpush1.msra.mxu0 0.0
    %1824 = vmatprep.subr.mxu0 0.0
    %1825 = vmatpush1.msra.mxu0 0.0
    %1826 = vmatprep.subr.mxu0 0.0
    %1827 = vmatpush1.msra.mxu0 0.0
    %1828 = vmatprep.subr.mxu0 0.0
    %1829 = vmatpush1.msra.mxu0 0.0
    %1830 = vmatprep.subr.mxu0 0.0
    %1831 = vmatpush1.msra.mxu0 0.0
    %1832 = vmatprep.subr.mxu0 0.0
    %1833 = vmatpush1.msra.mxu0 0.0
    %1834 = vmatprep.subr.mxu0 0.0
    %1835 = vmatpush1.msra.mxu0 0.0
    %1836 = vmatprep.subr.mxu0 0.0
    %1837 = vmatpush1.msra.mxu0 0.0
    %1838 = vmatprep.subr.mxu0 0.0
    %1839 = vmatpush1.msra.mxu0 0.0
    %1840 = vmatprep.subr.mxu0 0.0
    %1841 = vmatpush1.msra.mxu0 0.0
    %1842 = vmatprep.subr.mxu0 0.0
    %1843 = vmatpush1.msra.mxu0 0.0
    %1844 = vmatprep.subr.mxu0 0.0
    %1845 = vmatpush1.msra.mxu0 0.0
    %1846 = vmatprep.subr.mxu0 0.0
    %1847 = vmatpush1.msra.mxu0 0.0
    %1848 = vmatprep.subr.mxu0 0.0
    %1849 = vmatpush1.msra.mxu0 0.0
    %1850 = vmatprep.subr.mxu0 0.0
    %1851 = vmatpush1.msra.mxu0 0.0
    %1852 = vmatprep.subr.mxu0 0.0
    %1853 = vmatpush1.msra.mxu0 0.0
    %1854 = vmatprep.subr.mxu0 0.0
    %1855 = vmatpush1.msra.mxu0 0.0
    %1856 = vmatprep.subr.mxu0 0.0
    %1857 = vmatpush1.msra.mxu0 0.0
    %1858 = vmatprep.subr.mxu0 0.0
    %1859 = vmatpush1.msra.mxu0 0.0
    %1860 = vmatprep.subr.mxu0 0.0
    %1861 = vmatpush1.msra.mxu0 0.0
    %1862 = vmatprep.subr.mxu0 0.0
    %1863 = vmatpush1.msra.mxu0 0.0
    %1864 = vmatprep.subr.mxu0 0.0
    %1865 = vmatpush1.msra.mxu0 0.0
    %1866 = vmatprep.subr.mxu0 0.0
    %1867 = vmatpush1.msra.mxu0 0.0
    %1868 = vmatprep.subr.mxu0 0.0
    %1869 = vmatpush1.msra.mxu0 0.0
    %1870 = vmatprep.subr.mxu0 0.0
    %1871 = vmatpush1.msra.mxu0 0.0
    %1872 = vmatprep.mubr.f32.mxu0 0.0
    %1873 = vmatmul.mubr.f32.gmra.mrb[0].mxu0 %v1806
    %v1874 = vpop.f32.mrb[0].mxu0
    %v1875 = vadd.f32 0.0, %v1874
    %v1876 = vpop.f32.mrb[0].mxu0
    %1877 = vdwg.mxu0
    %v1879 = vrot.slane %v1875, 6
    %v1881 = vadd.f32 %v378, %v1879
    %v1882 = vxor.u32 %v1881, 2147483648
    %v1883 = vmul.f32 %v1882, 1.442695
    %v1884 = vpow.pop %v1883
    %v1885 = vadd.f32 %v1884, 1.0
    %v1886 = vrcp.pop %v1885
    %v1887 = vmul.f32 1.0, %v1886
    %v1888 = vadd.f32 %v1875, %v376
    %v1890 = vrot.slane %v1888, 6
    %1891 = vrot.lane.b32.xlu0 %v1890, 64
    %v1892 = vpop.permute.xlu0 %1891
    %v1894 = vmul.f32 %v1887, %v1892
    %1896 = vrot.lane.b32.xlu0 %v1894, 64
    %v1897 = vpop.permute.xlu0 %1896
    %v1899 = vadd.f32 %v364, %v1897
    %v1900 = vtanh.pop %v1899
    %v1901 = vsub.f32 1.0, %v1887
    %1903 = vrot.lane.b32.xlu0 %v1900, 96
    %v1904 = vpop.permute.xlu0 %1903
    %v1906 = vmul.f32 %v1901, %v1904
    %v1907 = vrot.slane %v1687, 2
    %v1909 = vmul.f32 %v1887, %v1907
    %v1910 = vadd.f32 %v1906, %v1909
    %1912 = vrot.lane.b32.xlu0 %v1801, 96
    %v1913 = vpop.permute.xlu0 %1912
    %1915 = vst.msk [vmem:[#allocation2 + $0x8] sm:$0x30] %vm1033, %v1913
    %1916 = vst.msk [vmem:[#allocation2] sm:$0xc] %vm1035, %v1910
    %v1917 = vrot.slane %v1801, 4
    %1918 = vrot.lane.b32.xlu0 %v1917, 96
    %v1919 = vpop.permute.xlu0 %1918
    %v1920 = vsel %vm380, %v1919, 0
    %1922 = vmatprep.subr.mxu0 0.0
    %1923 = vmatpush1.msra.mxu0 %v181
    %1924 = vmatprep.subr.mxu0 0.0
    %1925 = vmatpush1.msra.mxu0 %v182
    %1926 = vmatprep.subr.mxu0 0.0
    %1927 = vmatpush1.msra.mxu0 %v183
    %1928 = vmatprep.subr.mxu0 0.0
    %1929 = vmatpush1.msra.mxu0 %v184
    %1930 = vmatprep.subr.mxu0 0.0
    %1931 = vmatpush1.msra.mxu0 0.0
    %1932 = vmatprep.subr.mxu0 0.0
    %1933 = vmatpush1.msra.mxu0 0.0
    %1934 = vmatprep.subr.mxu0 0.0
    %1935 = vmatpush1.msra.mxu0 0.0
    %1936 = vmatprep.subr.mxu0 0.0
    %1937 = vmatpush1.msra.mxu0 0.0
    %1938 = vmatprep.subr.mxu0 0.0
    %1939 = vmatpush1.msra.mxu0 0.0
    %1940 = vmatprep.subr.mxu0 0.0
    %1941 = vmatpush1.msra.mxu0 0.0
    %1942 = vmatprep.subr.mxu0 0.0
    %1943 = vmatpush1.msra.mxu0 0.0
    %1944 = vmatprep.subr.mxu0 0.0
    %1945 = vmatpush1.msra.mxu0 0.0
    %1946 = vmatprep.subr.mxu0 0.0
    %1947 = vmatpush1.msra.mxu0 0.0
    %1948 = vmatprep.subr.mxu0 0.0
    %1949 = vmatpush1.msra.mxu0 0.0
    %1950 = vmatprep.subr.mxu0 0.0
    %1951 = vmatpush1.msra.mxu0 0.0
    %1952 = vmatprep.subr.mxu0 0.0
    %1953 = vmatpush1.msra.mxu0 0.0
    %1954 = vmatprep.subr.mxu0 0.0
    %1955 = vmatpush1.msra.mxu0 0.0
    %1956 = vmatprep.subr.mxu0 0.0
    %1957 = vmatpush1.msra.mxu0 0.0
    %1958 = vmatprep.subr.mxu0 0.0
    %1959 = vmatpush1.msra.mxu0 0.0
    %1960 = vmatprep.subr.mxu0 0.0
    %1961 = vmatpush1.msra.mxu0 0.0
    %1962 = vmatprep.subr.mxu0 0.0
    %1963 = vmatpush1.msra.mxu0 0.0
    %1964 = vmatprep.subr.mxu0 0.0
    %1965 = vmatpush1.msra.mxu0 0.0
    %1966 = vmatprep.subr.mxu0 0.0
    %1967 = vmatpush1.msra.mxu0 0.0
    %1968 = vmatprep.subr.mxu0 0.0
    %1969 = vmatpush1.msra.mxu0 0.0
    %1970 = vmatprep.subr.mxu0 0.0
    %1971 = vmatpush1.msra.mxu0 0.0
    %1972 = vmatprep.subr.mxu0 0.0
    %1973 = vmatpush1.msra.mxu0 0.0
    %1974 = vmatprep.subr.mxu0 0.0
    %1975 = vmatpush1.msra.mxu0 0.0
    %1976 = vmatprep.subr.mxu0 0.0
    %1977 = vmatpush1.msra.mxu0 0.0
    %1978 = vmatprep.subr.mxu0 0.0
    %1979 = vmatpush1.msra.mxu0 0.0
    %1980 = vmatprep.subr.mxu0 0.0
    %1981 = vmatpush1.msra.mxu0 0.0
    %1982 = vmatprep.subr.mxu0 0.0
    %1983 = vmatpush1.msra.mxu0 0.0
    %1984 = vmatprep.subr.mxu0 0.0
    %1985 = vmatpush1.msra.mxu0 0.0
    %1986 = vmatprep.mubr.f32.mxu0 0.0
    %1987 = vmatmul.mubr.f32.gmra.mrb[0].mxu0 %v1920
    %v1988 = vpop.f32.mrb[0].mxu0
    %v1989 = vadd.f32 0.0, %v1988
    %v1990 = vpop.f32.mrb[0].mxu0
    %1991 = vdwg.mxu0
    %v1993 = vrot.slane %v1989, 2
    %v1995 = vadd.f32 %v282, %v1993
    %v1996 = vxor.u32 %v1995, 2147483648
    %v1997 = vmul.f32 %v1996, 1.442695
    %v1998 = vpow.pop %v1997
    %v1999 = vadd.f32 %v1998, 1.0
    %v2000 = vrcp.pop %v1999
    %v2001 = vmul.f32 1.0, %v2000
    %v2002 = vadd.f32 %v1989, %v279
    %v2004 = vrot.slane %v2002, 2
    %2005 = vrot.lane.b32.xlu0 %v2004, 64
    %v2006 = vpop.permute.xlu0 %2005
    %v2008 = vmul.f32 %v2001, %v2006
    %2010 = vrot.lane.b32.xlu0 %v2008, 64
    %v2011 = vpop.permute.xlu0 %2010
    %v2013 = vadd.f32 %v272, %v2011
    %v2014 = vtanh.pop %v2013
    %v2015 = vsub.f32 1.0, %v2001
    %2017 = vrot.lane.b32.xlu0 %v2014, 96
    %v2018 = vpop.permute.xlu0 %2017
    %v2020 = vmul.f32 %v2015, %v2018
    %v2021 = vrot.slane %v1801, 6
    %v2023 = vmul.f32 %v2001, %v2021
    %v2024 = vadd.f32 %v2020, %v2023
    %v2026 = vrot.slane %v1910, 2
    %2027 = vrot.lane.b32.xlu0 %v2026, 96
    %v2028 = vpop.permute.xlu0 %2027
    %v2029 = vsel %vm380, %v2028, 0
    %2031 = vmatprep.subr.mxu0 0.0
    %2032 = vmatpush1.msra.mxu0 %v285
    %2033 = vmatprep.subr.mxu0 0.0
    %2034 = vmatpush1.msra.mxu0 %v286
    %2035 = vmatprep.subr.mxu0 0.0
    %2036 = vmatpush1.msra.mxu0 %v287
    %2037 = vmatprep.subr.mxu0 0.0
    %2038 = vmatpush1.msra.mxu0 %v288
    %2039 = vmatprep.subr.mxu0 0.0
    %2040 = vmatpush1.msra.mxu0 0.0
    %2041 = vmatprep.subr.mxu0 0.0
    %2042 = vmatpush1.msra.mxu0 0.0
    %2043 = vmatprep.subr.mxu0 0.0
    %2044 = vmatpush1.msra.mxu0 0.0
    %2045 = vmatprep.subr.mxu0 0.0
    %2046 = vmatpush1.msra.mxu0 0.0
    %2047 = vmatprep.subr.mxu0 0.0
    %2048 = vmatpush1.msra.mxu0 0.0
    %2049 = vmatprep.subr.mxu0 0.0
    %2050 = vmatpush1.msra.mxu0 0.0
    %2051 = vmatprep.subr.mxu0 0.0
    %2052 = vmatpush1.msra.mxu0 0.0
    %2053 = vmatprep.subr.mxu0 0.0
    %2054 = vmatpush1.msra.mxu0 0.0
    %2055 = vmatprep.subr.mxu0 0.0
    %2056 = vmatpush1.msra.mxu0 0.0
    %2057 = vmatprep.subr.mxu0 0.0
    %2058 = vmatpush1.msra.mxu0 0.0
    %2059 = vmatprep.subr.mxu0 0.0
    %2060 = vmatpush1.msra.mxu0 0.0
    %2061 = vmatprep.subr.mxu0 0.0
    %2062 = vmatpush1.msra.mxu0 0.0
    %2063 = vmatprep.subr.mxu0 0.0
    %2064 = vmatpush1.msra.mxu0 0.0
    %2065 = vmatprep.subr.mxu0 0.0
    %2066 = vmatpush1.msra.mxu0 0.0
    %2067 = vmatprep.subr.mxu0 0.0
    %2068 = vmatpush1.msra.mxu0 0.0
    %2069 = vmatprep.subr.mxu0 0.0
    %2070 = vmatpush1.msra.mxu0 0.0
    %2071 = vmatprep.subr.mxu0 0.0
    %2072 = vmatpush1.msra.mxu0 0.0
    %2073 = vmatprep.subr.mxu0 0.0
    %2074 = vmatpush1.msra.mxu0 0.0
    %2075 = vmatprep.subr.mxu0 0.0
    %2076 = vmatpush1.msra.mxu0 0.0
    %2077 = vmatprep.subr.mxu0 0.0
    %2078 = vmatpush1.msra.mxu0 0.0
    %2079 = vmatprep.subr.mxu0 0.0
    %2080 = vmatpush1.msra.mxu0 0.0
    %2081 = vmatprep.subr.mxu0 0.0
    %2082 = vmatpush1.msra.mxu0 0.0
    %2083 = vmatprep.subr.mxu0 0.0
    %2084 = vmatpush1.msra.mxu0 0.0
    %2085 = vmatprep.subr.mxu0 0.0
    %2086 = vmatpush1.msra.mxu0 0.0
    %2087 = vmatprep.subr.mxu0 0.0
    %2088 = vmatpush1.msra.mxu0 0.0
    %2089 = vmatprep.subr.mxu0 0.0
    %2090 = vmatpush1.msra.mxu0 0.0
    %2091 = vmatprep.subr.mxu0 0.0
    %2092 = vmatpush1.msra.mxu0 0.0
    %2093 = vmatprep.subr.mxu0 0.0
    %2094 = vmatpush1.msra.mxu0 0.0
    %2095 = vmatprep.mubr.f32.mxu0 0.0
    %2096 = vmatmul.mubr.f32.gmra.mrb[0].mxu0 %v2029
    %v2097 = vpop.f32.mrb[0].mxu0
    %v2098 = vadd.f32 0.0, %v2097
    %v2099 = vpop.f32.mrb[0].mxu0
    %2100 = vdwg.mxu0
    %v2101 = vadd.f32 %v378, %v2098
    %v2102 = vxor.u32 %v2101, 2147483648
    %v2103 = vmul.f32 %v2102, 1.442695
    %v2104 = vpow.pop %v2103
    %v2105 = vadd.f32 %v2104, 1.0
    %v2106 = vrcp.pop %v2105
    %v2107 = vmul.f32 1.0, %v2106
    %v2108 = vadd.f32 %v2098, %v376
    %2110 = vrot.lane.b32.xlu0 %v2108, 64
    %v2111 = vpop.permute.xlu0 %2110
    %v2113 = vmul.f32 %v2107, %v2111
    %2115 = vrot.lane.b32.xlu0 %v2113, 64
    %v2116 = vpop.permute.xlu0 %2115
    %v2118 = vadd.f32 %v364, %v2116
    %v2119 = vtanh.pop %v2118
    %v2120 = vsub.f32 1.0, %v2107
    %2122 = vrot.lane.b32.xlu0 %v2119, 96
    %v2123 = vpop.permute.xlu0 %2122
    %v2125 = vmul.f32 %v2120, %v2123
    %v2127 = vmul.f32 %v2107, %v2026
    %v2128 = vadd.f32 %v2125, %v2127
    %2130 = vrot.lane.b32.xlu0 %v2024, 96
    %v2131 = vpop.permute.xlu0 %2130
    %2133 = vst.msk [vmem:[#allocation2 + $0x8] sm:$0xc0] %vm1253, %v2131
    %2134 = vst.msk [vmem:[#allocation2] sm:$0x3] %vm1255, %v2128
    %2135 = vst.msk [vmem:[#allocation6 - $0x6] sm:$0xc0] %vm1253, %v2131
    %2137 = vrot.lane.b32.xlu0 %v2128, 96
    %v2138 = vpop.permute.xlu0 %2137
    %s2140 = scalar_lea.vmem [#allocation6], 2
    %2141 = vst.msk [vmem:[%s2140] sm:$0x3] %vm586, %v2138
    %v2142 = vld [vmem:[#allocation2] sm:$0xff]
    %v2143 = vld [vmem:[#allocation2 + $0x8] sm:$0xff]
    %v2144 = vld [vmem:[%s10] sm:$0xff]
    %v2145 = vld [vmem:[%s10 + $0x8] sm:$0xff]
    %v2146 = vld [vmem:[%s10 + $0x10] sm:$0xff]
    %v2147 = vld [vmem:[%s10 + $0x18] sm:$0xff]
    %v2148 = vld [vmem:[%s10 + $0x20] sm:$0xff]
    %v2149 = vld [vmem:[%s10 + $0x28] sm:$0xff]
    %v2150 = vld [vmem:[%s10 + $0x30] sm:$0xff]
    %v2151 = vld [vmem:[%s10 + $0x38] sm:$0xff]
    %v2152 = vld [vmem:[%s11] sm:$0xff]
    %v2153 = vld [vmem:[%s11 + $0x8] sm:$0xff]
    %v2154 = vld [vmem:[%s11 + $0x10] sm:$0xff]
    %v2155 = vld [vmem:[%s11 + $0x18] sm:$0xff]
    %v2156 = vld [vmem:[%s12] sm:$0x1]
    %v2157 = vld [vmem:[%s13] sm:$0x1]
    %v2159 = vlaneseq
    %v2160 = vshrl.u32 %v2159, 7
    %v2161 = vsub.s32 0, %v2160
    %v2162 = vrot.slane %v2156, %v2161
    %vm2164 = vcmask 523264
    %v2166 = vsel %vm2164, %v2142, 0
    %v2169 = vsel %vm2164, %v2143, 0
    %2171 = vmatprep.subr.mxu0 0.0
    %2172 = vmatpush1.msra.mxu0 %v2144
    %2173 = vmatprep.subr.mxu0 0.0
    %2174 = vmatpush1.msra.mxu0 %v2145
    %2175 = vmatprep.subr.mxu0 0.0
    %2176 = vmatpush1.msra.mxu0 %v2146
    %2177 = vmatprep.subr.mxu0 0.0
    %2178 = vmatpush1.msra.mxu0 %v2147
    %2179 = vmatprep.subr.mxu0 0.0
    %2180 = vmatpush1.msra.mxu0 %v2148
    %2181 = vmatprep.subr.mxu0 0.0
    %2182 = vmatpush1.msra.mxu0 %v2149
    %2183 = vmatprep.subr.mxu0 0.0
    %2184 = vmatpush1.msra.mxu0 %v2150
    %2185 = vmatprep.subr.mxu0 0.0
    %2186 = vmatpush1.msra.mxu0 %v2151
    %2187 = vmatprep.subr.mxu0 0.0
    %2188 = vmatpush1.msra.mxu0 0.0
    %2189 = vmatprep.subr.mxu0 0.0
    %2190 = vmatpush1.msra.mxu0 0.0
    %2191 = vmatprep.subr.mxu0 0.0
    %2192 = vmatpush1.msra.mxu0 0.0
    %2193 = vmatprep.subr.mxu0 0.0
    %2194 = vmatpush1.msra.mxu0 0.0
    %2195 = vmatprep.subr.mxu0 0.0
    %2196 = vmatpush1.msra.mxu0 0.0
    %2197 = vmatprep.subr.mxu0 0.0
    %2198 = vmatpush1.msra.mxu0 0.0
    %2199 = vmatprep.subr.mxu0 0.0
    %2200 = vmatpush1.msra.mxu0 0.0
    %2201 = vmatprep.subr.mxu0 0.0
    %2202 = vmatpush1.msra.mxu0 0.0
    %2203 = vmatprep.subr.mxu0 0.0
    %2204 = vmatpush1.msra.mxu0 0.0
    %2205 = vmatprep.subr.mxu0 0.0
    %2206 = vmatpush1.msra.mxu0 0.0
    %2207 = vmatprep.subr.mxu0 0.0
    %2208 = vmatpush1.msra.mxu0 0.0
    %2209 = vmatprep.subr.mxu0 0.0
    %2210 = vmatpush1.msra.mxu0 0.0
    %2211 = vmatprep.subr.mxu0 0.0
    %2212 = vmatpush1.msra.mxu0 0.0
    %2213 = vmatprep.subr.mxu0 0.0
    %2214 = vmatpush1.msra.mxu0 0.0
    %2215 = vmatprep.subr.mxu0 0.0
    %2216 = vmatpush1.msra.mxu0 0.0
    %2217 = vmatprep.subr.mxu0 0.0
    %2218 = vmatpush1.msra.mxu0 0.0
    %2219 = vmatprep.subr.mxu0 0.0
    %2220 = vmatpush1.msra.mxu0 0.0
    %2221 = vmatprep.subr.mxu0 0.0
    %2222 = vmatpush1.msra.mxu0 0.0
    %2223 = vmatprep.subr.mxu0 0.0
    %2224 = vmatpush1.msra.mxu0 0.0
    %2225 = vmatprep.subr.mxu0 0.0
    %2226 = vmatpush1.msra.mxu0 0.0
    %2227 = vmatprep.subr.mxu0 0.0
    %2228 = vmatpush1.msra.mxu0 0.0
    %2229 = vmatprep.subr.mxu0 0.0
    %2230 = vmatpush1.msra.mxu0 0.0
    %2231 = vmatprep.subr.mxu0 0.0
    %2232 = vmatpush1.msra.mxu0 0.0
    %2233 = vmatprep.subr.mxu0 0.0
    %2234 = vmatpush1.msra.mxu0 0.0
    %2235 = vmatprep.mubr.f32.mxu0 0.0
    %2236 = vmatmul.mubr.f32.gmra.mrb[0].mxu0 %v2166
    %v2237 = vpop.f32.mrb[0].mxu0
    %v2238 = vadd.f32 %v2162, %v2237
    %v2239 = vpop.f32.mrb[0].mxu0
    %2240 = vmatprep.mubr.f32.mxu0 0.0
    %2241 = vmatmul.mubr.f32.gmra.mrb[0].mxu0 %v2169
    %v2242 = vpop.f32.mrb[0].mxu0
    %v2243 = vadd.f32 %v2162, %v2242
    %v2244 = vpop.f32.mrb[0].mxu0
    %2245 = vdwg.mxu0
    %v2247 = vlaneseq
    %v2248 = vshrl.u32 %v2247, 7
    %v2249 = vsub.s32 0, %v2248
    %v2250 = vrot.slane %v2157, %v2249
    %v2252 = vadd.f32 %v2238, %v2250
    %v2253 = vadd.f32 %v2243, %v2250
    %v2254 = vld [vmem:[%s14] sm:$0xff]
    %v2255 = vld [vmem:[%s14 + $0x8] sm:$0xff]
    %v2256 = vld [vmem:[%s14 + $0x10] sm:$0xff]
    %v2257 = vld [vmem:[%s14 + $0x18] sm:$0xff]
    %v2258 = vld [vmem:[%s14 + $0x20] sm:$0xff]
    %v2259 = vld [vmem:[%s14 + $0x28] sm:$0xff]
    %v2260 = vld [vmem:[%s14 + $0x30] sm:$0xff]
    %v2261 = vld [vmem:[%s14 + $0x38] sm:$0xff]
    %v2262 = vld [vmem:[%s15] sm:$0xff]
    %v2263 = vld [vmem:[%s15 + $0x8] sm:$0xff]
    %v2264 = vld [vmem:[%s15 + $0x10] sm:$0xff]
    %v2265 = vld [vmem:[%s15 + $0x18] sm:$0xff]
    %v2266 = vld [vmem:[%s16] sm:$0x1]
    %v2267 = vld [vmem:[#allocation3] sm:$0x1]
    %v2269 = vlaneseq
    %v2270 = vshrl.u32 %v2269, 7
    %v2271 = vsub.s32 0, %v2270
    %v2272 = vrot.slane %v2266, %v2271
    %2274 = vmatprep.subr.mxu0 0.0
    %2275 = vmatpush1.msra.mxu0 %v2254
    %2276 = vmatprep.subr.mxu0 0.0
    %2277 = vmatpush1.msra.mxu0 %v2255
    %2278 = vmatprep.subr.mxu0 0.0
    %2279 = vmatpush1.msra.mxu0 %v2256
    %2280 = vmatprep.subr.mxu0 0.0
    %2281 = vmatpush1.msra.mxu0 %v2257
    %2282 = vmatprep.subr.mxu0 0.0
    %2283 = vmatpush1.msra.mxu0 %v2258
    %2284 = vmatprep.subr.mxu0 0.0
    %2285 = vmatpush1.msra.mxu0 %v2259
    %2286 = vmatprep.subr.mxu0 0.0
    %2287 = vmatpush1.msra.mxu0 %v2260
    %2288 = vmatprep.subr.mxu0 0.0
    %2289 = vmatpush1.msra.mxu0 %v2261
    %2290 = vmatprep.subr.mxu0 0.0
    %2291 = vmatpush1.msra.mxu0 0.0
    %2292 = vmatprep.subr.mxu0 0.0
    %2293 = vmatpush1.msra.mxu0 0.0
    %2294 = vmatprep.subr.mxu0 0.0
    %2295 = vmatpush1.msra.mxu0 0.0
    %2296 = vmatprep.subr.mxu0 0.0
    %2297 = vmatpush1.msra.mxu0 0.0
    %2298 = vmatprep.subr.mxu0 0.0
    %2299 = vmatpush1.msra.mxu0 0.0
    %2300 = vmatprep.subr.mxu0 0.0
    %2301 = vmatpush1.msra.mxu0 0.0
    %2302 = vmatprep.subr.mxu0 0.0
    %2303 = vmatpush1.msra.mxu0 0.0
    %2304 = vmatprep.subr.mxu0 0.0
    %2305 = vmatpush1.msra.mxu0 0.0
    %2306 = vmatprep.subr.mxu0 0.0
    %2307 = vmatpush1.msra.mxu0 0.0
    %2308 = vmatprep.subr.mxu0 0.0
    %2309 = vmatpush1.msra.mxu0 0.0
    %2310 = vmatprep.subr.mxu0 0.0
    %2311 = vmatpush1.msra.mxu0 0.0
    %2312 = vmatprep.subr.mxu0 0.0
    %2313 = vmatpush1.msra.mxu0 0.0
    %2314 = vmatprep.subr.mxu0 0.0
    %2315 = vmatpush1.msra.mxu0 0.0
    %2316 = vmatprep.subr.mxu0 0.0
    %2317 = vmatpush1.msra.mxu0 0.0
    %2318 = vmatprep.subr.mxu0 0.0
    %2319 = vmatpush1.msra.mxu0 0.0
    %2320 = vmatprep.subr.mxu0 0.0
    %2321 = vmatpush1.msra.mxu0 0.0
    %2322 = vmatprep.subr.mxu0 0.0
    %2323 = vmatpush1.msra.mxu0 0.0
    %2324 = vmatprep.subr.mxu0 0.0
    %2325 = vmatpush1.msra.mxu0 0.0
    %2326 = vmatprep.subr.mxu0 0.0
    %2327 = vmatpush1.msra.mxu0 0.0
    %2328 = vmatprep.subr.mxu0 0.0
    %2329 = vmatpush1.msra.mxu0 0.0
    %2330 = vmatprep.subr.mxu0 0.0
    %2331 = vmatpush1.msra.mxu0 0.0
    %2332 = vmatprep.subr.mxu0 0.0
    %2333 = vmatpush1.msra.mxu0 0.0
    %2334 = vmatprep.subr.mxu0 0.0
    %2335 = vmatpush1.msra.mxu0 0.0
    %2336 = vmatprep.subr.mxu0 0.0
    %2337 = vmatpush1.msra.mxu0 0.0
    %2338 = vmatprep.mubr.f32.mxu0 0.0
    %2339 = vmatmul.mubr.f32.gmra.mrb[0].mxu0 %v2166
    %v2340 = vpop.f32.mrb[0].mxu0
    %v2341 = vadd.f32 %v2272, %v2340
    %v2342 = vpop.f32.mrb[0].mxu0
    %2343 = vmatprep.mubr.f32.mxu0 0.0
    %2344 = vmatmul.mubr.f32.gmra.mrb[0].mxu0 %v2169
    %v2345 = vpop.f32.mrb[0].mxu0
    %v2346 = vadd.f32 %v2272, %v2345
    %v2347 = vpop.f32.mrb[0].mxu0
    %2348 = vdwg.mxu0
    %v2350 = vlaneseq
    %v2351 = vshrl.u32 %v2350, 7
    %v2352 = vsub.s32 0, %v2351
    %v2353 = vrot.slane %v2267, %v2352
    %v2355 = vadd.f32 %v2341, %v2353
    %v2356 = vadd.f32 %v2346, %v2353
    %2357 = vmatprep.subr.mxu0 0.0
    %2358 = vmatpush1.msra.mxu0 %v2152
    %2359 = vmatprep.subr.mxu0 0.0
    %2360 = vmatpush1.msra.mxu0 %v2153
    %2361 = vmatprep.subr.mxu0 0.0
    %2362 = vmatpush1.msra.mxu0 %v2154
    %2363 = vmatprep.subr.mxu0 0.0
    %2364 = vmatpush1.msra.mxu0 %v2155
    %2365 = vmatprep.subr.mxu0 0.0
    %2366 = vmatpush1.msra.mxu0 0.0
    %2367 = vmatprep.subr.mxu0 0.0
    %2368 = vmatpush1.msra.mxu0 0.0
    %2369 = vmatprep.subr.mxu0 0.0
    %2370 = vmatpush1.msra.mxu0 0.0
    %2371 = vmatprep.subr.mxu0 0.0
    %2372 = vmatpush1.msra.mxu0 0.0
    %2373 = vmatprep.subr.mxu0 0.0
    %2374 = vmatpush1.msra.mxu0 0.0
    %2375 = vmatprep.subr.mxu0 0.0
    %2376 = vmatpush1.msra.mxu0 0.0
    %2377 = vmatprep.subr.mxu0 0.0
    %2378 = vmatpush1.msra.mxu0 0.0
    %2379 = vmatprep.subr.mxu0 0.0
    %2380 = vmatpush1.msra.mxu0 0.0
    %2381 = vmatprep.subr.mxu0 0.0
    %2382 = vmatpush1.msra.mxu0 0.0
    %2383 = vmatprep.subr.mxu0 0.0
    %2384 = vmatpush1.msra.mxu0 0.0
    %2385 = vmatprep.subr.mxu0 0.0
    %2386 = vmatpush1.msra.mxu0 0.0
    %2387 = vmatprep.subr.mxu0 0.0
    %2388 = vmatpush1.msra.mxu0 0.0
    %2389 = vmatprep.subr.mxu0 0.0
    %2390 = vmatpush1.msra.mxu0 0.0
    %2391 = vmatprep.subr.mxu0 0.0
    %2392 = vmatpush1.msra.mxu0 0.0
    %2393 = vmatprep.subr.mxu0 0.0
    %2394 = vmatpush1.msra.mxu0 0.0
    %2395 = vmatprep.subr.mxu0 0.0
    %2396 = vmatpush1.msra.mxu0 0.0
    %2397 = vmatprep.subr.mxu0 0.0
    %2398 = vmatpush1.msra.mxu0 0.0
    %2399 = vmatprep.subr.mxu0 0.0
    %2400 = vmatpush1.msra.mxu0 0.0
    %2401 = vmatprep.subr.mxu0 0.0
    %2402 = vmatpush1.msra.mxu0 0.0
    %2403 = vmatprep.subr.mxu0 0.0
    %2404 = vmatpush1.msra.mxu0 0.0
    %2405 = vmatprep.subr.mxu0 0.0
    %2406 = vmatpush1.msra.mxu0 0.0
    %2407 = vmatprep.subr.mxu0 0.0
    %2408 = vmatpush1.msra.mxu0 0.0
    %2409 = vmatprep.subr.mxu0 0.0
    %2410 = vmatpush1.msra.mxu0 0.0
    %2411 = vmatprep.subr.mxu0 0.0
    %2412 = vmatpush1.msra.mxu0 0.0
    %2413 = vmatprep.subr.mxu0 0.0
    %2414 = vmatpush1.msra.mxu0 0.0
    %2415 = vmatprep.subr.mxu0 0.0
    %2416 = vmatpush1.msra.mxu0 0.0
    %2417 = vmatprep.subr.mxu0 0.0
    %2418 = vmatpush1.msra.mxu0 0.0
    %2419 = vmatprep.subr.mxu0 0.0
    %2420 = vmatpush1.msra.mxu0 0.0
    %2421 = vmatprep.mubr.f32.mxu0 0.0
    %2422 = vmatmul.mubr.f32.gmra.mrb[0].mxu0 %v382
    %v2423 = vpop.f32.mrb[0].mxu0
    %v2424 = vadd.f32 0.0, %v2423
    %v2425 = vpop.f32.mrb[0].mxu0
    %2426 = vdwg.mxu0
    %v2427 = vadd.f32 %v2252, %v2424
    %v2428 = vxor.u32 %v2427, 2147483648
    %v2429 = vmul.f32 %v2428, 1.442695
    %v2430 = vpow.pop %v2429
    %v2431 = vadd.f32 %v2430, 1.0
    %v2432 = vrcp.pop %v2431
    %v2433 = vmul.f32 1.0, %v2432
    %v2434 = vadd.f32 %v2424, %v2250
    %2436 = vrot.lane.b32.xlu0 %v2434, 64
    %v2437 = vpop.permute.xlu0 %2436
    %v2439 = vmul.f32 %v2433, %v2437
    %2441 = vrot.lane.b32.xlu0 %v2439, 64
    %v2442 = vpop.permute.xlu0 %2441
    %v2444 = vadd.f32 %v2238, %v2442
    %v2445 = vtanh.pop %v2444
    %v2446 = vsub.f32 1.0, %v2433
    %2448 = vrot.lane.b32.xlu0 %v2445, 96
    %v2449 = vpop.permute.xlu0 %2448
    %v2451 = vmul.f32 %v2446, %v2449
    %v2452 = vmul.f32 %v2433, 0.0
    %v2453 = vadd.f32 %v2451, %v2452
    %2454 = vmatprep.subr.mxu0 0.0
    %2455 = vmatpush1.msra.mxu0 %v2262
    %2456 = vmatprep.subr.mxu0 0.0
    %2457 = vmatpush1.msra.mxu0 %v2263
    %2458 = vmatprep.subr.mxu0 0.0
    %2459 = vmatpush1.msra.mxu0 %v2264
    %2460 = vmatprep.subr.mxu0 0.0
    %2461 = vmatpush1.msra.mxu0 %v2265
    %2462 = vmatprep.subr.mxu0 0.0
    %2463 = vmatpush1.msra.mxu0 0.0
    %2464 = vmatprep.subr.mxu0 0.0
    %2465 = vmatpush1.msra.mxu0 0.0
    %2466 = vmatprep.subr.mxu0 0.0
    %2467 = vmatpush1.msra.mxu0 0.0
    %2468 = vmatprep.subr.mxu0 0.0
    %2469 = vmatpush1.msra.mxu0 0.0
    %2470 = vmatprep.subr.mxu0 0.0
    %2471 = vmatpush1.msra.mxu0 0.0
    %2472 = vmatprep.subr.mxu0 0.0
    %2473 = vmatpush1.msra.mxu0 0.0
    %2474 = vmatprep.subr.mxu0 0.0
    %2475 = vmatpush1.msra.mxu0 0.0
    %2476 = vmatprep.subr.mxu0 0.0
    %2477 = vmatpush1.msra.mxu0 0.0
    %2478 = vmatprep.subr.mxu0 0.0
    %2479 = vmatpush1.msra.mxu0 0.0
    %2480 = vmatprep.subr.mxu0 0.0
    %2481 = vmatpush1.msra.mxu0 0.0
    %2482 = vmatprep.subr.mxu0 0.0
    %2483 = vmatpush1.msra.mxu0 0.0
    %2484 = vmatprep.subr.mxu0 0.0
    %2485 = vmatpush1.msra.mxu0 0.0
    %2486 = vmatprep.subr.mxu0 0.0
    %2487 = vmatpush1.msra.mxu0 0.0
    %2488 = vmatprep.subr.mxu0 0.0
    %2489 = vmatpush1.msra.mxu0 0.0
    %2490 = vmatprep.subr.mxu0 0.0
    %2491 = vmatpush1.msra.mxu0 0.0
    %2492 = vmatprep.subr.mxu0 0.0
    %2493 = vmatpush1.msra.mxu0 0.0
    %2494 = vmatprep.subr.mxu0 0.0
    %2495 = vmatpush1.msra.mxu0 0.0
    %2496 = vmatprep.subr.mxu0 0.0
    %2497 = vmatpush1.msra.mxu0 0.0
    %2498 = vmatprep.subr.mxu0 0.0
    %2499 = vmatpush1.msra.mxu0 0.0
    %2500 = vmatprep.subr.mxu0 0.0
    %2501 = vmatpush1.msra.mxu0 0.0
    %2502 = vmatprep.subr.mxu0 0.0
    %2503 = vmatpush1.msra.mxu0 0.0
    %2504 = vmatprep.subr.mxu0 0.0
    %2505 = vmatpush1.msra.mxu0 0.0
    %2506 = vmatprep.subr.mxu0 0.0
    %2507 = vmatpush1.msra.mxu0 0.0
    %2508 = vmatprep.subr.mxu0 0.0
    %2509 = vmatpush1.msra.mxu0 0.0
    %2510 = vmatprep.subr.mxu0 0.0
    %2511 = vmatpush1.msra.mxu0 0.0
    %2512 = vmatprep.subr.mxu0 0.0
    %2513 = vmatpush1.msra.mxu0 0.0
    %2514 = vmatprep.subr.mxu0 0.0
    %2515 = vmatpush1.msra.mxu0 0.0
    %2516 = vmatprep.subr.mxu0 0.0
    %2517 = vmatpush1.msra.mxu0 0.0
    %2518 = vmatprep.mubr.f32.mxu0 0.0
    %2519 = vmatmul.mubr.f32.gmra.mrb[0].mxu0 %v382
    %v2520 = vpop.f32.mrb[0].mxu0
    %v2521 = vadd.f32 0.0, %v2520
    %v2522 = vpop.f32.mrb[0].mxu0
    %2523 = vdwg.mxu0
    %v2525 = vrot.slane %v2521, 2
    %v2527 = vadd.f32 %v2356, %v2525
    %v2528 = vxor.u32 %v2527, 2147483648
    %v2529 = vmul.f32 %v2528, 1.442695
    %v2530 = vpow.pop %v2529
    %v2531 = vadd.f32 %v2530, 1.0
    %v2532 = vrcp.pop %v2531
    %v2533 = vmul.f32 1.0, %v2532
    %v2534 = vadd.f32 %v2521, %v2353
    %v2536 = vrot.slane %v2534, 2
    %2537 = vrot.lane.b32.xlu0 %v2536, 64
    %v2538 = vpop.permute.xlu0 %2537
    %v2540 = vmul.f32 %v2533, %v2538
    %2542 = vrot.lane.b32.xlu0 %v2540, 64
    %v2543 = vpop.permute.xlu0 %2542
    %v2545 = vadd.f32 %v2346, %v2543
    %v2546 = vtanh.pop %v2545
    %v2547 = vsub.f32 1.0, %v2533
    %2549 = vrot.lane.b32.xlu0 %v2546, 96
    %v2550 = vpop.permute.xlu0 %2549
    %v2552 = vmul.f32 %v2547, %v2550
    %v2553 = vmul.f32 %v2533, 0.0
    %v2554 = vadd.f32 %v2552, %v2553
    %2556 = vrot.lane.b32.xlu0 %v2453, 96
    %v2557 = vpop.permute.xlu0 %2556
    %2559 = vst.msk [vmem:[%s18] sm:$0x3] %vm586, %v2557
    %2560 = vst.msk [vmem:[%s18 + $0x8] sm:$0xc0] %vm588, %v2554
    %v2561 = vsel %vm380, %v2557, 0
    %2563 = vmatprep.subr.mxu0 0.0
    %2564 = vmatpush1.msra.mxu0 %v2152
    %2565 = vmatprep.subr.mxu0 0.0
    %2566 = vmatpush1.msra.mxu0 %v2153
    %2567 = vmatprep.subr.mxu0 0.0
    %2568 = vmatpush1.msra.mxu0 %v2154
    %2569 = vmatprep.subr.mxu0 0.0
    %2570 = vmatpush1.msra.mxu0 %v2155
    %2571 = vmatprep.subr.mxu0 0.0
    %2572 = vmatpush1.msra.mxu0 0.0
    %2573 = vmatprep.subr.mxu0 0.0
    %2574 = vmatpush1.msra.mxu0 0.0
    %2575 = vmatprep.subr.mxu0 0.0
    %2576 = vmatpush1.msra.mxu0 0.0
    %2577 = vmatprep.subr.mxu0 0.0
    %2578 = vmatpush1.msra.mxu0 0.0
    %2579 = vmatprep.subr.mxu0 0.0
    %2580 = vmatpush1.msra.mxu0 0.0
    %2581 = vmatprep.subr.mxu0 0.0
    %2582 = vmatpush1.msra.mxu0 0.0
    %2583 = vmatprep.subr.mxu0 0.0
    %2584 = vmatpush1.msra.mxu0 0.0
    %2585 = vmatprep.subr.mxu0 0.0
    %2586 = vmatpush1.msra.mxu0 0.0
    %2587 = vmatprep.subr.mxu0 0.0
    %2588 = vmatpush1.msra.mxu0 0.0
    %2589 = vmatprep.subr.mxu0 0.0
    %2590 = vmatpush1.msra.mxu0 0.0
    %2591 = vmatprep.subr.mxu0 0.0
    %2592 = vmatpush1.msra.mxu0 0.0
    %2593 = vmatprep.subr.mxu0 0.0
    %2594 = vmatpush1.msra.mxu0 0.0
    %2595 = vmatprep.subr.mxu0 0.0
    %2596 = vmatpush1.msra.mxu0 0.0
    %2597 = vmatprep.subr.mxu0 0.0
    %2598 = vmatpush1.msra.mxu0 0.0
    %2599 = vmatprep.subr.mxu0 0.0
    %2600 = vmatpush1.msra.mxu0 0.0
    %2601 = vmatprep.subr.mxu0 0.0
    %2602 = vmatpush1.msra.mxu0 0.0
    %2603 = vmatprep.subr.mxu0 0.0
    %2604 = vmatpush1.msra.mxu0 0.0
    %2605 = vmatprep.subr.mxu0 0.0
    %2606 = vmatpush1.msra.mxu0 0.0
    %2607 = vmatprep.subr.mxu0 0.0
    %2608 = vmatpush1.msra.mxu0 0.0
    %2609 = vmatprep.subr.mxu0 0.0
    %2610 = vmatpush1.msra.mxu0 0.0
    %2611 = vmatprep.subr.mxu0 0.0
    %2612 = vmatpush1.msra.mxu0 0.0
    %2613 = vmatprep.subr.mxu0 0.0
    %2614 = vmatpush1.msra.mxu0 0.0
    %2615 = vmatprep.subr.mxu0 0.0
    %2616 = vmatpush1.msra.mxu0 0.0
    %2617 = vmatprep.subr.mxu0 0.0
    %2618 = vmatpush1.msra.mxu0 0.0
    %2619 = vmatprep.subr.mxu0 0.0
    %2620 = vmatpush1.msra.mxu0 0.0
    %2621 = vmatprep.subr.mxu0 0.0
    %2622 = vmatpush1.msra.mxu0 0.0
    %2623 = vmatprep.subr.mxu0 0.0
    %2624 = vmatpush1.msra.mxu0 0.0
    %2625 = vmatprep.subr.mxu0 0.0
    %2626 = vmatpush1.msra.mxu0 0.0
    %2627 = vmatprep.mubr.f32.mxu0 0.0
    %2628 = vmatmul.mubr.f32.gmra.mrb[0].mxu0 %v2561
    %v2629 = vpop.f32.mrb[0].mxu0
    %v2630 = vadd.f32 0.0, %v2629
    %v2631 = vpop.f32.mrb[0].mxu0
    %2632 = vdwg.mxu0
    %v2634 = vrot.slane %v2630, 6
    %v2636 = vadd.f32 %v2252, %v2634
    %v2637 = vxor.u32 %v2636, 2147483648
    %v2638 = vmul.f32 %v2637, 1.442695
    %v2639 = vpow.pop %v2638
    %v2640 = vadd.f32 %v2639, 1.0
    %v2641 = vrcp.pop %v2640
    %v2642 = vmul.f32 1.0, %v2641
    %v2643 = vadd.f32 %v2630, %v2250
    %v2645 = vrot.slane %v2643, 6
    %2646 = vrot.lane.b32.xlu0 %v2645, 64
    %v2647 = vpop.permute.xlu0 %2646
    %v2649 = vmul.f32 %v2642, %v2647
    %2651 = vrot.lane.b32.xlu0 %v2649, 64
    %v2652 = vpop.permute.xlu0 %2651
    %v2654 = vadd.f32 %v2238, %v2652
    %v2655 = vtanh.pop %v2654
    %v2656 = vsub.f32 1.0, %v2642
    %2658 = vrot.lane.b32.xlu0 %v2655, 96
    %v2659 = vpop.permute.xlu0 %2658
    %v2661 = vmul.f32 %v2656, %v2659
    %v2662 = vrot.slane %v2453, 6
    %v2664 = vmul.f32 %v2642, %v2662
    %v2665 = vadd.f32 %v2661, %v2664
    %v2667 = vrot.slane %v2554, 6
    %2668 = vrot.lane.b32.xlu0 %v2667, 96
    %v2669 = vpop.permute.xlu0 %2668
    %v2670 = vsel %vm380, %v2669, 0
    %2672 = vmatprep.subr.mxu0 0.0
    %2673 = vmatpush1.msra.mxu0 %v2262
    %2674 = vmatprep.subr.mxu0 0.0
    %2675 = vmatpush1.msra.mxu0 %v2263
    %2676 = vmatprep.subr.mxu0 0.0
    %2677 = vmatpush1.msra.mxu0 %v2264
    %2678 = vmatprep.subr.mxu0 0.0
    %2679 = vmatpush1.msra.mxu0 %v2265
    %2680 = vmatprep.subr.mxu0 0.0
    %2681 = vmatpush1.msra.mxu0 0.0
    %2682 = vmatprep.subr.mxu0 0.0
    %2683 = vmatpush1.msra.mxu0 0.0
    %2684 = vmatprep.subr.mxu0 0.0
    %2685 = vmatpush1.msra.mxu0 0.0
    %2686 = vmatprep.subr.mxu0 0.0
    %2687 = vmatpush1.msra.mxu0 0.0
    %2688 = vmatprep.subr.mxu0 0.0
    %2689 = vmatpush1.msra.mxu0 0.0
    %2690 = vmatprep.subr.mxu0 0.0
    %2691 = vmatpush1.msra.mxu0 0.0
    %2692 = vmatprep.subr.mxu0 0.0
    %2693 = vmatpush1.msra.mxu0 0.0
    %2694 = vmatprep.subr.mxu0 0.0
    %2695 = vmatpush1.msra.mxu0 0.0
    %2696 = vmatprep.subr.mxu0 0.0
    %2697 = vmatpush1.msra.mxu0 0.0
    %2698 = vmatprep.subr.mxu0 0.0
    %2699 = vmatpush1.msra.mxu0 0.0
    %2700 = vmatprep.subr.mxu0 0.0
    %2701 = vmatpush1.msra.mxu0 0.0
    %2702 = vmatprep.subr.mxu0 0.0
    %2703 = vmatpush1.msra.mxu0 0.0
    %2704 = vmatprep.subr.mxu0 0.0
    %2705 = vmatpush1.msra.mxu0 0.0
    %2706 = vmatprep.subr.mxu0 0.0
    %2707 = vmatpush1.msra.mxu0 0.0
    %2708 = vmatprep.subr.mxu0 0.0
    %2709 = vmatpush1.msra.mxu0 0.0
    %2710 = vmatprep.subr.mxu0 0.0
    %2711 = vmatpush1.msra.mxu0 0.0
    %2712 = vmatprep.subr.mxu0 0.0
    %2713 = vmatpush1.msra.mxu0 0.0
    %2714 = vmatprep.subr.mxu0 0.0
    %2715 = vmatpush1.msra.mxu0 0.0
    %2716 = vmatprep.subr.mxu0 0.0
    %2717 = vmatpush1.msra.mxu0 0.0
    %2718 = vmatprep.subr.mxu0 0.0
    %2719 = vmatpush1.msra.mxu0 0.0
    %2720 = vmatprep.subr.mxu0 0.0
    %2721 = vmatpush1.msra.mxu0 0.0
    %2722 = vmatprep.subr.mxu0 0.0
    %2723 = vmatpush1.msra.mxu0 0.0
    %2724 = vmatprep.subr.mxu0 0.0
    %2725 = vmatpush1.msra.mxu0 0.0
    %2726 = vmatprep.subr.mxu0 0.0
    %2727 = vmatpush1.msra.mxu0 0.0
    %2728 = vmatprep.subr.mxu0 0.0
    %2729 = vmatpush1.msra.mxu0 0.0
    %2730 = vmatprep.subr.mxu0 0.0
    %2731 = vmatpush1.msra.mxu0 0.0
    %2732 = vmatprep.subr.mxu0 0.0
    %2733 = vmatpush1.msra.mxu0 0.0
    %2734 = vmatprep.subr.mxu0 0.0
    %2735 = vmatpush1.msra.mxu0 0.0
    %2736 = vmatprep.mubr.f32.mxu0 0.0
    %2737 = vmatmul.mubr.f32.gmra.mrb[0].mxu0 %v2670
    %v2738 = vpop.f32.mrb[0].mxu0
    %v2739 = vadd.f32 0.0, %v2738
    %v2740 = vpop.f32.mrb[0].mxu0
    %2741 = vdwg.mxu0
    %v2743 = vrot.slane %v2739, 4
    %v2745 = vadd.f32 %v2356, %v2743
    %v2746 = vxor.u32 %v2745, 2147483648
    %v2747 = vmul.f32 %v2746, 1.442695
    %v2748 = vpow.pop %v2747
    %v2749 = vadd.f32 %v2748, 1.0
    %v2750 = vrcp.pop %v2749
    %v2751 = vmul.f32 1.0, %v2750
    %v2752 = vadd.f32 %v2739, %v2353
    %v2754 = vrot.slane %v2752, 4
    %2755 = vrot.lane.b32.xlu0 %v2754, 64
    %v2756 = vpop.permute.xlu0 %2755
    %v2758 = vmul.f32 %v2751, %v2756
    %2760 = vrot.lane.b32.xlu0 %v2758, 64
    %v2761 = vpop.permute.xlu0 %2760
    %v2763 = vadd.f32 %v2346, %v2761
    %v2764 = vtanh.pop %v2763
    %v2765 = vsub.f32 1.0, %v2751
    %2767 = vrot.lane.b32.xlu0 %v2764, 96
    %v2768 = vpop.permute.xlu0 %2767
    %v2770 = vmul.f32 %v2765, %v2768
    %v2771 = vrot.slane %v2554, 2
    %v2773 = vmul.f32 %v2751, %v2771
    %v2774 = vadd.f32 %v2770, %v2773
    %2776 = vrot.lane.b32.xlu0 %v2665, 96
    %v2777 = vpop.permute.xlu0 %2776
    %2779 = vst.msk [vmem:[%s18] sm:$0xc] %vm808, %v2777
    %2780 = vst.msk [vmem:[%s18 + $0x8] sm:$0x30] %vm810, %v2774
    %v2781 = vrot.slane %v2665, 2
    %2782 = vrot.lane.b32.xlu0 %v2781, 96
    %v2783 = vpop.permute.xlu0 %2782
    %v2784 = vsel %vm380, %v2783, 0
    %2786 = vmatprep.subr.mxu0 0.0
    %2787 = vmatpush1.msra.mxu0 %v2152
    %2788 = vmatprep.subr.mxu0 0.0
    %2789 = vmatpush1.msra.mxu0 %v2153
    %2790 = vmatprep.subr.mxu0 0.0
    %2791 = vmatpush1.msra.mxu0 %v2154
    %2792 = vmatprep.subr.mxu0 0.0
    %2793 = vmatpush1.msra.mxu0 %v2155
    %2794 = vmatprep.subr.mxu0 0.0
    %2795 = vmatpush1.msra.mxu0 0.0
    %2796 = vmatprep.subr.mxu0 0.0
    %2797 = vmatpush1.msra.mxu0 0.0
    %2798 = vmatprep.subr.mxu0 0.0
    %2799 = vmatpush1.msra.mxu0 0.0
    %2800 = vmatprep.subr.mxu0 0.0
    %2801 = vmatpush1.msra.mxu0 0.0
    %2802 = vmatprep.subr.mxu0 0.0
    %2803 = vmatpush1.msra.mxu0 0.0
    %2804 = vmatprep.subr.mxu0 0.0
    %2805 = vmatpush1.msra.mxu0 0.0
    %2806 = vmatprep.subr.mxu0 0.0
    %2807 = vmatpush1.msra.mxu0 0.0
    %2808 = vmatprep.subr.mxu0 0.0
    %2809 = vmatpush1.msra.mxu0 0.0
    %2810 = vmatprep.subr.mxu0 0.0
    %2811 = vmatpush1.msra.mxu0 0.0
    %2812 = vmatprep.subr.mxu0 0.0
    %2813 = vmatpush1.msra.mxu0 0.0
    %2814 = vmatprep.subr.mxu0 0.0
    %2815 = vmatpush1.msra.mxu0 0.0
    %2816 = vmatprep.subr.mxu0 0.0
    %2817 = vmatpush1.msra.mxu0 0.0
    %2818 = vmatprep.subr.mxu0 0.0
    %2819 = vmatpush1.msra.mxu0 0.0
    %2820 = vmatprep.subr.mxu0 0.0
    %2821 = vmatpush1.msra.mxu0 0.0
    %2822 = vmatprep.subr.mxu0 0.0
    %2823 = vmatpush1.msra.mxu0 0.0
    %2824 = vmatprep.subr.mxu0 0.0
    %2825 = vmatpush1.msra.mxu0 0.0
    %2826 = vmatprep.subr.mxu0 0.0
    %2827 = vmatpush1.msra.mxu0 0.0
    %2828 = vmatprep.subr.mxu0 0.0
    %2829 = vmatpush1.msra.mxu0 0.0
    %2830 = vmatprep.subr.mxu0 0.0
    %2831 = vmatpush1.msra.mxu0 0.0
    %2832 = vmatprep.subr.mxu0 0.0
    %2833 = vmatpush1.msra.mxu0 0.0
    %2834 = vmatprep.subr.mxu0 0.0
    %2835 = vmatpush1.msra.mxu0 0.0
    %2836 = vmatprep.subr.mxu0 0.0
    %2837 = vmatpush1.msra.mxu0 0.0
    %2838 = vmatprep.subr.mxu0 0.0
    %2839 = vmatpush1.msra.mxu0 0.0
    %2840 = vmatprep.subr.mxu0 0.0
    %2841 = vmatpush1.msra.mxu0 0.0
    %2842 = vmatprep.subr.mxu0 0.0
    %2843 = vmatpush1.msra.mxu0 0.0
    %2844 = vmatprep.subr.mxu0 0.0
    %2845 = vmatpush1.msra.mxu0 0.0
    %2846 = vmatprep.subr.mxu0 0.0
    %2847 = vmatpush1.msra.mxu0 0.0
    %2848 = vmatprep.subr.mxu0 0.0
    %2849 = vmatpush1.msra.mxu0 0.0
    %2850 = vmatprep.mubr.f32.mxu0 0.0
    %2851 = vmatmul.mubr.f32.gmra.mrb[0].mxu0 %v2784
    %v2852 = vpop.f32.mrb[0].mxu0
    %v2853 = vadd.f32 0.0, %v2852
    %v2854 = vpop.f32.mrb[0].mxu0
    %2855 = vdwg.mxu0
    %v2857 = vrot.slane %v2853, 4
    %v2859 = vadd.f32 %v2252, %v2857
    %v2860 = vxor.u32 %v2859, 2147483648
    %v2861 = vmul.f32 %v2860, 1.442695
    %v2862 = vpow.pop %v2861
    %v2863 = vadd.f32 %v2862, 1.0
    %v2864 = vrcp.pop %v2863
    %v2865 = vmul.f32 1.0, %v2864
    %v2866 = vadd.f32 %v2853, %v2250
    %v2868 = vrot.slane %v2866, 4
    %2869 = vrot.lane.b32.xlu0 %v2868, 64
    %v2870 = vpop.permute.xlu0 %2869
    %v2872 = vmul.f32 %v2865, %v2870
    %2874 = vrot.lane.b32.xlu0 %v2872, 64
    %v2875 = vpop.permute.xlu0 %2874
    %v2877 = vadd.f32 %v2238, %v2875
    %v2878 = vtanh.pop %v2877
    %v2879 = vsub.f32 1.0, %v2865
    %2881 = vrot.lane.b32.xlu0 %v2878, 96
    %v2882 = vpop.permute.xlu0 %2881
    %v2884 = vmul.f32 %v2879, %v2882
    %v2885 = vrot.slane %v2665, 6
    %v2887 = vmul.f32 %v2865, %v2885
    %v2888 = vadd.f32 %v2884, %v2887
    %v2890 = vrot.slane %v2774, 4
    %2891 = vrot.lane.b32.xlu0 %v2890, 96
    %v2892 = vpop.permute.xlu0 %2891
    %v2893 = vsel %vm380, %v2892, 0
    %2895 = vmatprep.subr.mxu0 0.0
    %2896 = vmatpush1.msra.mxu0 %v2262
    %2897 = vmatprep.subr.mxu0 0.0
    %2898 = vmatpush1.msra.mxu0 %v2263
    %2899 = vmatprep.subr.mxu0 0.0
    %2900 = vmatpush1.msra.mxu0 %v2264
    %2901 = vmatprep.subr.mxu0 0.0
    %2902 = vmatpush1.msra.mxu0 %v2265
    %2903 = vmatprep.subr.mxu0 0.0
    %2904 = vmatpush1.msra.mxu0 0.0
    %2905 = vmatprep.subr.mxu0 0.0
    %2906 = vmatpush1.msra.mxu0 0.0
    %2907 = vmatprep.subr.mxu0 0.0
    %2908 = vmatpush1.msra.mxu0 0.0
    %2909 = vmatprep.subr.mxu0 0.0
    %2910 = vmatpush1.msra.mxu0 0.0
    %2911 = vmatprep.subr.mxu0 0.0
    %2912 = vmatpush1.msra.mxu0 0.0
    %2913 = vmatprep.subr.mxu0 0.0
    %2914 = vmatpush1.msra.mxu0 0.0
    %2915 = vmatprep.subr.mxu0 0.0
    %2916 = vmatpush1.msra.mxu0 0.0
    %2917 = vmatprep.subr.mxu0 0.0
    %2918 = vmatpush1.msra.mxu0 0.0
    %2919 = vmatprep.subr.mxu0 0.0
    %2920 = vmatpush1.msra.mxu0 0.0
    %2921 = vmatprep.subr.mxu0 0.0
    %2922 = vmatpush1.msra.mxu0 0.0
    %2923 = vmatprep.subr.mxu0 0.0
    %2924 = vmatpush1.msra.mxu0 0.0
    %2925 = vmatprep.subr.mxu0 0.0
    %2926 = vmatpush1.msra.mxu0 0.0
    %2927 = vmatprep.subr.mxu0 0.0
    %2928 = vmatpush1.msra.mxu0 0.0
    %2929 = vmatprep.subr.mxu0 0.0
    %2930 = vmatpush1.msra.mxu0 0.0
    %2931 = vmatprep.subr.mxu0 0.0
    %2932 = vmatpush1.msra.mxu0 0.0
    %2933 = vmatprep.subr.mxu0 0.0
    %2934 = vmatpush1.msra.mxu0 0.0
    %2935 = vmatprep.subr.mxu0 0.0
    %2936 = vmatpush1.msra.mxu0 0.0
    %2937 = vmatprep.subr.mxu0 0.0
    %2938 = vmatpush1.msra.mxu0 0.0
    %2939 = vmatprep.subr.mxu0 0.0
    %2940 = vmatpush1.msra.mxu0 0.0
    %2941 = vmatprep.subr.mxu0 0.0
    %2942 = vmatpush1.msra.mxu0 0.0
    %2943 = vmatprep.subr.mxu0 0.0
    %2944 = vmatpush1.msra.mxu0 0.0
    %2945 = vmatprep.subr.mxu0 0.0
    %2946 = vmatpush1.msra.mxu0 0.0
    %2947 = vmatprep.subr.mxu0 0.0
    %2948 = vmatpush1.msra.mxu0 0.0
    %2949 = vmatprep.subr.mxu0 0.0
    %2950 = vmatpush1.msra.mxu0 0.0
    %2951 = vmatprep.subr.mxu0 0.0
    %2952 = vmatpush1.msra.mxu0 0.0
    %2953 = vmatprep.subr.mxu0 0.0
    %2954 = vmatpush1.msra.mxu0 0.0
    %2955 = vmatprep.subr.mxu0 0.0
    %2956 = vmatpush1.msra.mxu0 0.0
    %2957 = vmatprep.subr.mxu0 0.0
    %2958 = vmatpush1.msra.mxu0 0.0
    %2959 = vmatprep.mubr.f32.mxu0 0.0
    %2960 = vmatmul.mubr.f32.gmra.mrb[0].mxu0 %v2893
    %v2961 = vpop.f32.mrb[0].mxu0
    %v2962 = vadd.f32 0.0, %v2961
    %v2963 = vpop.f32.mrb[0].mxu0
    %2964 = vdwg.mxu0
    %v2966 = vrot.slane %v2962, 6
    %v2968 = vadd.f32 %v2356, %v2966
    %v2969 = vxor.u32 %v2968, 2147483648
    %v2970 = vmul.f32 %v2969, 1.442695
    %v2971 = vpow.pop %v2970
    %v2972 = vadd.f32 %v2971, 1.0
    %v2973 = vrcp.pop %v2972
    %v2974 = vmul.f32 1.0, %v2973
    %v2975 = vadd.f32 %v2962, %v2353
    %v2977 = vrot.slane %v2975, 6
    %2978 = vrot.lane.b32.xlu0 %v2977, 64
    %v2979 = vpop.permute.xlu0 %2978
    %v2981 = vmul.f32 %v2974, %v2979
    %2983 = vrot.lane.b32.xlu0 %v2981, 64
    %v2984 = vpop.permute.xlu0 %2983
    %v2986 = vadd.f32 %v2346, %v2984
    %v2987 = vtanh.pop %v2986
    %v2988 = vsub.f32 1.0, %v2974
    %2990 = vrot.lane.b32.xlu0 %v2987, 96
    %v2991 = vpop.permute.xlu0 %2990
    %v2993 = vmul.f32 %v2988, %v2991
    %v2994 = vrot.slane %v2774, 2
    %v2996 = vmul.f32 %v2974, %v2994
    %v2997 = vadd.f32 %v2993, %v2996
    %2999 = vrot.lane.b32.xlu0 %v2888, 96
    %v3000 = vpop.permute.xlu0 %2999
    %3002 = vst.msk [vmem:[%s18] sm:$0x30] %vm1033, %v3000
    %3003 = vst.msk [vmem:[%s18 + $0x8] sm:$0xc] %vm1035, %v2997
    %v3004 = vrot.slane %v2888, 4
    %3005 = vrot.lane.b32.xlu0 %v3004, 96
    %v3006 = vpop.permute.xlu0 %3005
    %v3007 = vsel %vm380, %v3006, 0
    %3009 = vmatprep.subr.mxu0 0.0
    %3010 = vmatpush1.msra.mxu0 %v2152
    %3011 = vmatprep.subr.mxu0 0.0
    %3012 = vmatpush1.msra.mxu0 %v2153
    %3013 = vmatprep.subr.mxu0 0.0
    %3014 = vmatpush1.msra.mxu0 %v2154
    %3015 = vmatprep.subr.mxu0 0.0
    %3016 = vmatpush1.msra.mxu0 %v2155
    %3017 = vmatprep.subr.mxu0 0.0
    %3018 = vmatpush1.msra.mxu0 0.0
    %3019 = vmatprep.subr.mxu0 0.0
    %3020 = vmatpush1.msra.mxu0 0.0
    %3021 = vmatprep.subr.mxu0 0.0
    %3022 = vmatpush1.msra.mxu0 0.0
    %3023 = vmatprep.subr.mxu0 0.0
    %3024 = vmatpush1.msra.mxu0 0.0
    %3025 = vmatprep.subr.mxu0 0.0
    %3026 = vmatpush1.msra.mxu0 0.0
    %3027 = vmatprep.subr.mxu0 0.0
    %3028 = vmatpush1.msra.mxu0 0.0
    %3029 = vmatprep.subr.mxu0 0.0
    %3030 = vmatpush1.msra.mxu0 0.0
    %3031 = vmatprep.subr.mxu0 0.0
    %3032 = vmatpush1.msra.mxu0 0.0
    %3033 = vmatprep.subr.mxu0 0.0
    %3034 = vmatpush1.msra.mxu0 0.0
    %3035 = vmatprep.subr.mxu0 0.0
    %3036 = vmatpush1.msra.mxu0 0.0
    %3037 = vmatprep.subr.mxu0 0.0
    %3038 = vmatpush1.msra.mxu0 0.0
    %3039 = vmatprep.subr.mxu0 0.0
    %3040 = vmatpush1.msra.mxu0 0.0
    %3041 = vmatprep.subr.mxu0 0.0
    %3042 = vmatpush1.msra.mxu0 0.0
    %3043 = vmatprep.subr.mxu0 0.0
    %3044 = vmatpush1.msra.mxu0 0.0
    %3045 = vmatprep.subr.mxu0 0.0
    %3046 = vmatpush1.msra.mxu0 0.0
    %3047 = vmatprep.subr.mxu0 0.0
    %3048 = vmatpush1.msra.mxu0 0.0
    %3049 = vmatprep.subr.mxu0 0.0
    %3050 = vmatpush1.msra.mxu0 0.0
    %3051 = vmatprep.subr.mxu0 0.0
    %3052 = vmatpush1.msra.mxu0 0.0
    %3053 = vmatprep.subr.mxu0 0.0
    %3054 = vmatpush1.msra.mxu0 0.0
    %3055 = vmatprep.subr.mxu0 0.0
    %3056 = vmatpush1.msra.mxu0 0.0
    %3057 = vmatprep.subr.mxu0 0.0
    %3058 = vmatpush1.msra.mxu0 0.0
    %3059 = vmatprep.subr.mxu0 0.0
    %3060 = vmatpush1.msra.mxu0 0.0
    %3061 = vmatprep.subr.mxu0 0.0
    %3062 = vmatpush1.msra.mxu0 0.0
    %3063 = vmatprep.subr.mxu0 0.0
    %3064 = vmatpush1.msra.mxu0 0.0
    %3065 = vmatprep.subr.mxu0 0.0
    %3066 = vmatpush1.msra.mxu0 0.0
    %3067 = vmatprep.subr.mxu0 0.0
    %3068 = vmatpush1.msra.mxu0 0.0
    %3069 = vmatprep.subr.mxu0 0.0
    %3070 = vmatpush1.msra.mxu0 0.0
    %3071 = vmatprep.subr.mxu0 0.0
    %3072 = vmatpush1.msra.mxu0 0.0
    %3073 = vmatprep.mubr.f32.mxu0 0.0
    %3074 = vmatmul.mubr.f32.gmra.mrb[0].mxu0 %v3007
    %v3075 = vpop.f32.mrb[0].mxu0
    %v3076 = vadd.f32 0.0, %v3075
    %v3077 = vpop.f32.mrb[0].mxu0
    %3078 = vdwg.mxu0
    %v3080 = vrot.slane %v3076, 2
    %v3082 = vadd.f32 %v2252, %v3080
    %v3083 = vxor.u32 %v3082, 2147483648
    %v3084 = vmul.f32 %v3083, 1.442695
    %v3085 = vpow.pop %v3084
    %v3086 = vadd.f32 %v3085, 1.0
    %v3087 = vrcp.pop %v3086
    %v3088 = vmul.f32 1.0, %v3087
    %v3089 = vadd.f32 %v3076, %v2250
    %v3091 = vrot.slane %v3089, 2
    %3092 = vrot.lane.b32.xlu0 %v3091, 64
    %v3093 = vpop.permute.xlu0 %3092
    %v3095 = vmul.f32 %v3088, %v3093
    %3097 = vrot.lane.b32.xlu0 %v3095, 64
    %v3098 = vpop.permute.xlu0 %3097
    %v3100 = vadd.f32 %v2238, %v3098
    %v3101 = vtanh.pop %v3100
    %v3102 = vsub.f32 1.0, %v3088
    %3104 = vrot.lane.b32.xlu0 %v3101, 96
    %v3105 = vpop.permute.xlu0 %3104
    %v3107 = vmul.f32 %v3102, %v3105
    %v3108 = vrot.slane %v2888, 6
    %v3110 = vmul.f32 %v3088, %v3108
    %v3111 = vadd.f32 %v3107, %v3110
    %v3113 = vrot.slane %v2997, 2
    %3114 = vrot.lane.b32.xlu0 %v3113, 96
    %v3115 = vpop.permute.xlu0 %3114
    %v3116 = vsel %vm380, %v3115, 0
    %3118 = vmatprep.subr.mxu0 0.0
    %3119 = vmatpush1.msra.mxu0 %v2262
    %3120 = vmatprep.subr.mxu0 0.0
    %3121 = vmatpush1.msra.mxu0 %v2263
    %3122 = vmatprep.subr.mxu0 0.0
    %3123 = vmatpush1.msra.mxu0 %v2264
    %3124 = vmatprep.subr.mxu0 0.0
    %3125 = vmatpush1.msra.mxu0 %v2265
    %3126 = vmatprep.subr.mxu0 0.0
    %3127 = vmatpush1.msra.mxu0 0.0
    %3128 = vmatprep.subr.mxu0 0.0
    %3129 = vmatpush1.msra.mxu0 0.0
    %3130 = vmatprep.subr.mxu0 0.0
    %3131 = vmatpush1.msra.mxu0 0.0
    %3132 = vmatprep.subr.mxu0 0.0
    %3133 = vmatpush1.msra.mxu0 0.0
    %3134 = vmatprep.subr.mxu0 0.0
    %3135 = vmatpush1.msra.mxu0 0.0
    %3136 = vmatprep.subr.mxu0 0.0
    %3137 = vmatpush1.msra.mxu0 0.0
    %3138 = vmatprep.subr.mxu0 0.0
    %3139 = vmatpush1.msra.mxu0 0.0
    %3140 = vmatprep.subr.mxu0 0.0
    %3141 = vmatpush1.msra.mxu0 0.0
    %3142 = vmatprep.subr.mxu0 0.0
    %3143 = vmatpush1.msra.mxu0 0.0
    %3144 = vmatprep.subr.mxu0 0.0
    %3145 = vmatpush1.msra.mxu0 0.0
    %3146 = vmatprep.subr.mxu0 0.0
    %3147 = vmatpush1.msra.mxu0 0.0
    %3148 = vmatprep.subr.mxu0 0.0
    %3149 = vmatpush1.msra.mxu0 0.0
    %3150 = vmatprep.subr.mxu0 0.0
    %3151 = vmatpush1.msra.mxu0 0.0
    %3152 = vmatprep.subr.mxu0 0.0
    %3153 = vmatpush1.msra.mxu0 0.0
    %3154 = vmatprep.subr.mxu0 0.0
    %3155 = vmatpush1.msra.mxu0 0.0
    %3156 = vmatprep.subr.mxu0 0.0
    %3157 = vmatpush1.msra.mxu0 0.0
    %3158 = vmatprep.subr.mxu0 0.0
    %3159 = vmatpush1.msra.mxu0 0.0
    %3160 = vmatprep.subr.mxu0 0.0
    %3161 = vmatpush1.msra.mxu0 0.0
    %3162 = vmatprep.subr.mxu0 0.0
    %3163 = vmatpush1.msra.mxu0 0.0
    %3164 = vmatprep.subr.mxu0 0.0
    %3165 = vmatpush1.msra.mxu0 0.0
    %3166 = vmatprep.subr.mxu0 0.0
    %3167 = vmatpush1.msra.mxu0 0.0
    %3168 = vmatprep.subr.mxu0 0.0
    %3169 = vmatpush1.msra.mxu0 0.0
    %3170 = vmatprep.subr.mxu0 0.0
    %3171 = vmatpush1.msra.mxu0 0.0
    %3172 = vmatprep.subr.mxu0 0.0
    %3173 = vmatpush1.msra.mxu0 0.0
    %3174 = vmatprep.subr.mxu0 0.0
    %3175 = vmatpush1.msra.mxu0 0.0
    %3176 = vmatprep.subr.mxu0 0.0
    %3177 = vmatpush1.msra.mxu0 0.0
    %3178 = vmatprep.subr.mxu0 0.0
    %3179 = vmatpush1.msra.mxu0 0.0
    %3180 = vmatprep.subr.mxu0 0.0
    %3181 = vmatpush1.msra.mxu0 0.0
    %3182 = vmatprep.mubr.f32.mxu0 0.0
    %3183 = vmatmul.mubr.f32.gmra.mrb[0].mxu0 %v3116
    %v3184 = vpop.f32.mrb[0].mxu0
    %v3185 = vadd.f32 0.0, %v3184
    %v3186 = vpop.f32.mrb[0].mxu0
    %3187 = vdwg.mxu0
    %v3188 = vadd.f32 %v2356, %v3185
    %v3189 = vxor.u32 %v3188, 2147483648
    %v3190 = vmul.f32 %v3189, 1.442695
    %v3191 = vpow.pop %v3190
    %v3192 = vadd.f32 %v3191, 1.0
    %v3193 = vrcp.pop %v3192
    %v3194 = vmul.f32 1.0, %v3193
    %v3195 = vadd.f32 %v3185, %v2353
    %3197 = vrot.lane.b32.xlu0 %v3195, 64
    %v3198 = vpop.permute.xlu0 %3197
    %v3200 = vmul.f32 %v3194, %v3198
    %3202 = vrot.lane.b32.xlu0 %v3200, 64
    %v3203 = vpop.permute.xlu0 %3202
    %v3205 = vadd.f32 %v2346, %v3203
    %v3206 = vtanh.pop %v3205
    %v3207 = vsub.f32 1.0, %v3194
    %3209 = vrot.lane.b32.xlu0 %v3206, 96
    %v3210 = vpop.permute.xlu0 %3209
    %v3212 = vmul.f32 %v3207, %v3210
    %v3214 = vmul.f32 %v3194, %v3113
    %v3215 = vadd.f32 %v3212, %v3214
    %3217 = vrot.lane.b32.xlu0 %v3111, 96
    %v3218 = vpop.permute.xlu0 %3217
    %3220 = vst.msk [vmem:[%s18] sm:$0xc0] %vm1253, %v3218
    %3221 = vst.msk [vmem:[%s18 + $0x8] sm:$0x3] %vm1255, %v3215
    %v3222 = vrot.slane %v3111, 6
    %3223 = vrot.lane.b32.xlu0 %v3222, 96
    %v3224 = vpop.permute.xlu0 %3223
    %v3225 = vsel %vm380, %v3224, 0
    %3227 = vmatprep.subr.mxu0 0.0
    %3228 = vmatpush1.msra.mxu0 %v2152
    %3229 = vmatprep.subr.mxu0 0.0
    %3230 = vmatpush1.msra.mxu0 %v2153
    %3231 = vmatprep.subr.mxu0 0.0
    %3232 = vmatpush1.msra.mxu0 %v2154
    %3233 = vmatprep.subr.mxu0 0.0
    %3234 = vmatpush1.msra.mxu0 %v2155
    %3235 = vmatprep.subr.mxu0 0.0
    %3236 = vmatpush1.msra.mxu0 0.0
    %3237 = vmatprep.subr.mxu0 0.0
    %3238 = vmatpush1.msra.mxu0 0.0
    %3239 = vmatprep.subr.mxu0 0.0
    %3240 = vmatpush1.msra.mxu0 0.0
    %3241 = vmatprep.subr.mxu0 0.0
    %3242 = vmatpush1.msra.mxu0 0.0
    %3243 = vmatprep.subr.mxu0 0.0
    %3244 = vmatpush1.msra.mxu0 0.0
    %3245 = vmatprep.subr.mxu0 0.0
    %3246 = vmatpush1.msra.mxu0 0.0
    %3247 = vmatprep.subr.mxu0 0.0
    %3248 = vmatpush1.msra.mxu0 0.0
    %3249 = vmatprep.subr.mxu0 0.0
    %3250 = vmatpush1.msra.mxu0 0.0
    %3251 = vmatprep.subr.mxu0 0.0
    %3252 = vmatpush1.msra.mxu0 0.0
    %3253 = vmatprep.subr.mxu0 0.0
    %3254 = vmatpush1.msra.mxu0 0.0
    %3255 = vmatprep.subr.mxu0 0.0
    %3256 = vmatpush1.msra.mxu0 0.0
    %3257 = vmatprep.subr.mxu0 0.0
    %3258 = vmatpush1.msra.mxu0 0.0
    %3259 = vmatprep.subr.mxu0 0.0
    %3260 = vmatpush1.msra.mxu0 0.0
    %3261 = vmatprep.subr.mxu0 0.0
    %3262 = vmatpush1.msra.mxu0 0.0
    %3263 = vmatprep.subr.mxu0 0.0
    %3264 = vmatpush1.msra.mxu0 0.0
    %3265 = vmatprep.subr.mxu0 0.0
    %3266 = vmatpush1.msra.mxu0 0.0
    %3267 = vmatprep.subr.mxu0 0.0
    %3268 = vmatpush1.msra.mxu0 0.0
    %3269 = vmatprep.subr.mxu0 0.0
    %3270 = vmatpush1.msra.mxu0 0.0
    %3271 = vmatprep.subr.mxu0 0.0
    %3272 = vmatpush1.msra.mxu0 0.0
    %3273 = vmatprep.subr.mxu0 0.0
    %3274 = vmatpush1.msra.mxu0 0.0
    %3275 = vmatprep.subr.mxu0 0.0
    %3276 = vmatpush1.msra.mxu0 0.0
    %3277 = vmatprep.subr.mxu0 0.0
    %3278 = vmatpush1.msra.mxu0 0.0
    %3279 = vmatprep.subr.mxu0 0.0
    %3280 = vmatpush1.msra.mxu0 0.0
    %3281 = vmatprep.subr.mxu0 0.0
    %3282 = vmatpush1.msra.mxu0 0.0
    %3283 = vmatprep.subr.mxu0 0.0
    %3284 = vmatpush1.msra.mxu0 0.0
    %3285 = vmatprep.subr.mxu0 0.0
    %3286 = vmatpush1.msra.mxu0 0.0
    %3287 = vmatprep.subr.mxu0 0.0
    %3288 = vmatpush1.msra.mxu0 0.0
    %3289 = vmatprep.subr.mxu0 0.0
    %3290 = vmatpush1.msra.mxu0 0.0
    %3291 = vmatprep.mubr.f32.mxu0 0.0
    %3292 = vmatmul.mubr.f32.gmra.mrb[0].mxu0 %v3225
    %v3293 = vpop.f32.mrb[0].mxu0
    %v3294 = vadd.f32 0.0, %v3293
    %v3295 = vpop.f32.mrb[0].mxu0
    %3296 = vdwg.mxu0
    %v3297 = vadd.f32 %v2253, %v3294
    %v3298 = vxor.u32 %v3297, 2147483648
    %v3299 = vmul.f32 %v3298, 1.442695
    %v3300 = vpow.pop %v3299
    %v3301 = vadd.f32 %v3300, 1.0
    %v3302 = vrcp.pop %v3301
    %v3303 = vmul.f32 1.0, %v3302
    %v3304 = vadd.f32 %v3294, %v2250
    %3306 = vrot.lane.b32.xlu0 %v3304, 64
    %v3307 = vpop.permute.xlu0 %3306
    %v3309 = vmul.f32 %v3303, %v3307
    %3311 = vrot.lane.b32.xlu0 %v3309, 64
    %v3312 = vpop.permute.xlu0 %3311
    %v3314 = vadd.f32 %v2243, %v3312
    %v3315 = vtanh.pop %v3314
    %v3316 = vsub.f32 1.0, %v3303
    %3318 = vrot.lane.b32.xlu0 %v3315, 96
    %v3319 = vpop.permute.xlu0 %3318
    %v3321 = vmul.f32 %v3316, %v3319
    %v3323 = vmul.f32 %v3303, %v3222
    %v3324 = vadd.f32 %v3321, %v3323
    %3326 = vrot.lane.b32.xlu0 %v3215, 96
    %v3327 = vpop.permute.xlu0 %3326
    %v3328 = vsel %vm380, %v3327, 0
    %3330 = vmatprep.subr.mxu0 0.0
    %3331 = vmatpush1.msra.mxu0 %v2262
    %3332 = vmatprep.subr.mxu0 0.0
    %3333 = vmatpush1.msra.mxu0 %v2263
    %3334 = vmatprep.subr.mxu0 0.0
    %3335 = vmatpush1.msra.mxu0 %v2264
    %3336 = vmatprep.subr.mxu0 0.0
    %3337 = vmatpush1.msra.mxu0 %v2265
    %3338 = vmatprep.subr.mxu0 0.0
    %3339 = vmatpush1.msra.mxu0 0.0
    %3340 = vmatprep.subr.mxu0 0.0
    %3341 = vmatpush1.msra.mxu0 0.0
    %3342 = vmatprep.subr.mxu0 0.0
    %3343 = vmatpush1.msra.mxu0 0.0
    %3344 = vmatprep.subr.mxu0 0.0
    %3345 = vmatpush1.msra.mxu0 0.0
    %3346 = vmatprep.subr.mxu0 0.0
    %3347 = vmatpush1.msra.mxu0 0.0
    %3348 = vmatprep.subr.mxu0 0.0
    %3349 = vmatpush1.msra.mxu0 0.0
    %3350 = vmatprep.subr.mxu0 0.0
    %3351 = vmatpush1.msra.mxu0 0.0
    %3352 = vmatprep.subr.mxu0 0.0
    %3353 = vmatpush1.msra.mxu0 0.0
    %3354 = vmatprep.subr.mxu0 0.0
    %3355 = vmatpush1.msra.mxu0 0.0
    %3356 = vmatprep.subr.mxu0 0.0
    %3357 = vmatpush1.msra.mxu0 0.0
    %3358 = vmatprep.subr.mxu0 0.0
    %3359 = vmatpush1.msra.mxu0 0.0
    %3360 = vmatprep.subr.mxu0 0.0
    %3361 = vmatpush1.msra.mxu0 0.0
    %3362 = vmatprep.subr.mxu0 0.0
    %3363 = vmatpush1.msra.mxu0 0.0
    %3364 = vmatprep.subr.mxu0 0.0
    %3365 = vmatpush1.msra.mxu0 0.0
    %3366 = vmatprep.subr.mxu0 0.0
    %3367 = vmatpush1.msra.mxu0 0.0
    %3368 = vmatprep.subr.mxu0 0.0
    %3369 = vmatpush1.msra.mxu0 0.0
    %3370 = vmatprep.subr.mxu0 0.0
    %3371 = vmatpush1.msra.mxu0 0.0
    %3372 = vmatprep.subr.mxu0 0.0
    %3373 = vmatpush1.msra.mxu0 0.0
    %3374 = vmatprep.subr.mxu0 0.0
    %3375 = vmatpush1.msra.mxu0 0.0
    %3376 = vmatprep.subr.mxu0 0.0
    %3377 = vmatpush1.msra.mxu0 0.0
    %3378 = vmatprep.subr.mxu0 0.0
    %3379 = vmatpush1.msra.mxu0 0.0
    %3380 = vmatprep.subr.mxu0 0.0
    %3381 = vmatpush1.msra.mxu0 0.0
    %3382 = vmatprep.subr.mxu0 0.0
    %3383 = vmatpush1.msra.mxu0 0.0
    %3384 = vmatprep.subr.mxu0 0.0
    %3385 = vmatpush1.msra.mxu0 0.0
    %3386 = vmatprep.subr.mxu0 0.0
    %3387 = vmatpush1.msra.mxu0 0.0
    %3388 = vmatprep.subr.mxu0 0.0
    %3389 = vmatpush1.msra.mxu0 0.0
    %3390 = vmatprep.subr.mxu0 0.0
    %3391 = vmatpush1.msra.mxu0 0.0
    %3392 = vmatprep.subr.mxu0 0.0
    %3393 = vmatpush1.msra.mxu0 0.0
    %3394 = vmatprep.mubr.f32.mxu0 0.0
    %3395 = vmatmul.mubr.f32.gmra.mrb[0].mxu0 %v3328
    %v3396 = vpop.f32.mrb[0].mxu0
    %v3397 = vadd.f32 0.0, %v3396
    %v3398 = vpop.f32.mrb[0].mxu0
    %3399 = vdwg.mxu0
    %v3401 = vrot.slane %v3397, 2
    %v3403 = vadd.f32 %v2355, %v3401
    %v3404 = vxor.u32 %v3403, 2147483648
    %v3405 = vmul.f32 %v3404, 1.442695
    %v3406 = vpow.pop %v3405
    %v3407 = vadd.f32 %v3406, 1.0
    %v3408 = vrcp.pop %v3407
    %v3409 = vmul.f32 1.0, %v3408
    %v3410 = vadd.f32 %v3397, %v2353
    %v3412 = vrot.slane %v3410, 2
    %3413 = vrot.lane.b32.xlu0 %v3412, 64
    %v3414 = vpop.permute.xlu0 %3413
    %v3416 = vmul.f32 %v3409, %v3414
    %3418 = vrot.lane.b32.xlu0 %v3416, 64
    %v3419 = vpop.permute.xlu0 %3418
    %v3421 = vadd.f32 %v2341, %v3419
    %v3422 = vtanh.pop %v3421
    %v3423 = vsub.f32 1.0, %v3409
    %3425 = vrot.lane.b32.xlu0 %v3422, 96
    %v3426 = vpop.permute.xlu0 %3425
    %v3428 = vmul.f32 %v3423, %v3426
    %v3429 = vrot.slane %v3215, 2
    %v3431 = vmul.f32 %v3409, %v3429
    %v3432 = vadd.f32 %v3428, %v3431
    %3434 = vrot.lane.b32.xlu0 %v3324, 96
    %v3435 = vpop.permute.xlu0 %3434
    %3437 = vst.msk [vmem:[%s18 + $0x8] sm:$0x3] %vm586, %v3435
    %3438 = vst.msk [vmem:[%s18] sm:$0xc0] %vm588, %v3432
    %v3439 = vsel %vm380, %v3435, 0
    %3441 = vmatprep.subr.mxu0 0.0
    %3442 = vmatpush1.msra.mxu0 %v2152
    %3443 = vmatprep.subr.mxu0 0.0
    %3444 = vmatpush1.msra.mxu0 %v2153
    %3445 = vmatprep.subr.mxu0 0.0
    %3446 = vmatpush1.msra.mxu0 %v2154
    %3447 = vmatprep.subr.mxu0 0.0
    %3448 = vmatpush1.msra.mxu0 %v2155
    %3449 = vmatprep.subr.mxu0 0.0
    %3450 = vmatpush1.msra.mxu0 0.0
    %3451 = vmatprep.subr.mxu0 0.0
    %3452 = vmatpush1.msra.mxu0 0.0
    %3453 = vmatprep.subr.mxu0 0.0
    %3454 = vmatpush1.msra.mxu0 0.0
    %3455 = vmatprep.subr.mxu0 0.0
    %3456 = vmatpush1.msra.mxu0 0.0
    %3457 = vmatprep.subr.mxu0 0.0
    %3458 = vmatpush1.msra.mxu0 0.0
    %3459 = vmatprep.subr.mxu0 0.0
    %3460 = vmatpush1.msra.mxu0 0.0
    %3461 = vmatprep.subr.mxu0 0.0
    %3462 = vmatpush1.msra.mxu0 0.0
    %3463 = vmatprep.subr.mxu0 0.0
    %3464 = vmatpush1.msra.mxu0 0.0
    %3465 = vmatprep.subr.mxu0 0.0
    %3466 = vmatpush1.msra.mxu0 0.0
    %3467 = vmatprep.subr.mxu0 0.0
    %3468 = vmatpush1.msra.mxu0 0.0
    %3469 = vmatprep.subr.mxu0 0.0
    %3470 = vmatpush1.msra.mxu0 0.0
    %3471 = vmatprep.subr.mxu0 0.0
    %3472 = vmatpush1.msra.mxu0 0.0
    %3473 = vmatprep.subr.mxu0 0.0
    %3474 = vmatpush1.msra.mxu0 0.0
    %3475 = vmatprep.subr.mxu0 0.0
    %3476 = vmatpush1.msra.mxu0 0.0
    %3477 = vmatprep.subr.mxu0 0.0
    %3478 = vmatpush1.msra.mxu0 0.0
    %3479 = vmatprep.subr.mxu0 0.0
    %3480 = vmatpush1.msra.mxu0 0.0
    %3481 = vmatprep.subr.mxu0 0.0
    %3482 = vmatpush1.msra.mxu0 0.0
    %3483 = vmatprep.subr.mxu0 0.0
    %3484 = vmatpush1.msra.mxu0 0.0
    %3485 = vmatprep.subr.mxu0 0.0
    %3486 = vmatpush1.msra.mxu0 0.0
    %3487 = vmatprep.subr.mxu0 0.0
    %3488 = vmatpush1.msra.mxu0 0.0
    %3489 = vmatprep.subr.mxu0 0.0
    %3490 = vmatpush1.msra.mxu0 0.0
    %3491 = vmatprep.subr.mxu0 0.0
    %3492 = vmatpush1.msra.mxu0 0.0
    %3493 = vmatprep.subr.mxu0 0.0
    %3494 = vmatpush1.msra.mxu0 0.0
    %3495 = vmatprep.subr.mxu0 0.0
    %3496 = vmatpush1.msra.mxu0 0.0
    %3497 = vmatprep.subr.mxu0 0.0
    %3498 = vmatpush1.msra.mxu0 0.0
    %3499 = vmatprep.subr.mxu0 0.0
    %3500 = vmatpush1.msra.mxu0 0.0
    %3501 = vmatprep.subr.mxu0 0.0
    %3502 = vmatpush1.msra.mxu0 0.0
    %3503 = vmatprep.subr.mxu0 0.0
    %3504 = vmatpush1.msra.mxu0 0.0
    %3505 = vmatprep.mubr.f32.mxu0 0.0
    %3506 = vmatmul.mubr.f32.gmra.mrb[0].mxu0 %v3439
    %v3507 = vpop.f32.mrb[0].mxu0
    %v3508 = vadd.f32 0.0, %v3507
    %v3509 = vpop.f32.mrb[0].mxu0
    %3510 = vdwg.mxu0
    %v3512 = vrot.slane %v3508, 6
    %v3514 = vadd.f32 %v2253, %v3512
    %v3515 = vxor.u32 %v3514, 2147483648
    %v3516 = vmul.f32 %v3515, 1.442695
    %v3517 = vpow.pop %v3516
    %v3518 = vadd.f32 %v3517, 1.0
    %v3519 = vrcp.pop %v3518
    %v3520 = vmul.f32 1.0, %v3519
    %v3521 = vadd.f32 %v3508, %v2250
    %v3523 = vrot.slane %v3521, 6
    %3524 = vrot.lane.b32.xlu0 %v3523, 64
    %v3525 = vpop.permute.xlu0 %3524
    %v3527 = vmul.f32 %v3520, %v3525
    %3529 = vrot.lane.b32.xlu0 %v3527, 64
    %v3530 = vpop.permute.xlu0 %3529
    %v3532 = vadd.f32 %v2243, %v3530
    %v3533 = vtanh.pop %v3532
    %v3534 = vsub.f32 1.0, %v3520
    %3536 = vrot.lane.b32.xlu0 %v3533, 96
    %v3537 = vpop.permute.xlu0 %3536
    %v3539 = vmul.f32 %v3534, %v3537
    %v3540 = vrot.slane %v3324, 6
    %v3542 = vmul.f32 %v3520, %v3540
    %v3543 = vadd.f32 %v3539, %v3542
    %v3545 = vrot.slane %v3432, 6
    %3546 = vrot.lane.b32.xlu0 %v3545, 96
    %v3547 = vpop.permute.xlu0 %3546
    %v3548 = vsel %vm380, %v3547, 0
    %3550 = vmatprep.subr.mxu0 0.0
    %3551 = vmatpush1.msra.mxu0 %v2262
    %3552 = vmatprep.subr.mxu0 0.0
    %3553 = vmatpush1.msra.mxu0 %v2263
    %3554 = vmatprep.subr.mxu0 0.0
    %3555 = vmatpush1.msra.mxu0 %v2264
    %3556 = vmatprep.subr.mxu0 0.0
    %3557 = vmatpush1.msra.mxu0 %v2265
    %3558 = vmatprep.subr.mxu0 0.0
    %3559 = vmatpush1.msra.mxu0 0.0
    %3560 = vmatprep.subr.mxu0 0.0
    %3561 = vmatpush1.msra.mxu0 0.0
    %3562 = vmatprep.subr.mxu0 0.0
    %3563 = vmatpush1.msra.mxu0 0.0
    %3564 = vmatprep.subr.mxu0 0.0
    %3565 = vmatpush1.msra.mxu0 0.0
    %3566 = vmatprep.subr.mxu0 0.0
    %3567 = vmatpush1.msra.mxu0 0.0
    %3568 = vmatprep.subr.mxu0 0.0
    %3569 = vmatpush1.msra.mxu0 0.0
    %3570 = vmatprep.subr.mxu0 0.0
    %3571 = vmatpush1.msra.mxu0 0.0
    %3572 = vmatprep.subr.mxu0 0.0
    %3573 = vmatpush1.msra.mxu0 0.0
    %3574 = vmatprep.subr.mxu0 0.0
    %3575 = vmatpush1.msra.mxu0 0.0
    %3576 = vmatprep.subr.mxu0 0.0
    %3577 = vmatpush1.msra.mxu0 0.0
    %3578 = vmatprep.subr.mxu0 0.0
    %3579 = vmatpush1.msra.mxu0 0.0
    %3580 = vmatprep.subr.mxu0 0.0
    %3581 = vmatpush1.msra.mxu0 0.0
    %3582 = vmatprep.subr.mxu0 0.0
    %3583 = vmatpush1.msra.mxu0 0.0
    %3584 = vmatprep.subr.mxu0 0.0
    %3585 = vmatpush1.msra.mxu0 0.0
    %3586 = vmatprep.subr.mxu0 0.0
    %3587 = vmatpush1.msra.mxu0 0.0
    %3588 = vmatprep.subr.mxu0 0.0
    %3589 = vmatpush1.msra.mxu0 0.0
    %3590 = vmatprep.subr.mxu0 0.0
    %3591 = vmatpush1.msra.mxu0 0.0
    %3592 = vmatprep.subr.mxu0 0.0
    %3593 = vmatpush1.msra.mxu0 0.0
    %3594 = vmatprep.subr.mxu0 0.0
    %3595 = vmatpush1.msra.mxu0 0.0
    %3596 = vmatprep.subr.mxu0 0.0
    %3597 = vmatpush1.msra.mxu0 0.0
    %3598 = vmatprep.subr.mxu0 0.0
    %3599 = vmatpush1.msra.mxu0 0.0
    %3600 = vmatprep.subr.mxu0 0.0
    %3601 = vmatpush1.msra.mxu0 0.0
    %3602 = vmatprep.subr.mxu0 0.0
    %3603 = vmatpush1.msra.mxu0 0.0
    %3604 = vmatprep.subr.mxu0 0.0
    %3605 = vmatpush1.msra.mxu0 0.0
    %3606 = vmatprep.subr.mxu0 0.0
    %3607 = vmatpush1.msra.mxu0 0.0
    %3608 = vmatprep.subr.mxu0 0.0
    %3609 = vmatpush1.msra.mxu0 0.0
    %3610 = vmatprep.subr.mxu0 0.0
    %3611 = vmatpush1.msra.mxu0 0.0
    %3612 = vmatprep.subr.mxu0 0.0
    %3613 = vmatpush1.msra.mxu0 0.0
    %3614 = vmatprep.mubr.f32.mxu0 0.0
    %3615 = vmatmul.mubr.f32.gmra.mrb[0].mxu0 %v3548
    %v3616 = vpop.f32.mrb[0].mxu0
    %v3617 = vadd.f32 0.0, %v3616
    %v3618 = vpop.f32.mrb[0].mxu0
    %3619 = vdwg.mxu0
    %v3621 = vrot.slane %v3617, 4
    %v3623 = vadd.f32 %v2355, %v3621
    %v3624 = vxor.u32 %v3623, 2147483648
    %v3625 = vmul.f32 %v3624, 1.442695
    %v3626 = vpow.pop %v3625
    %v3627 = vadd.f32 %v3626, 1.0
    %v3628 = vrcp.pop %v3627
    %v3629 = vmul.f32 1.0, %v3628
    %v3630 = vadd.f32 %v3617, %v2353
    %v3632 = vrot.slane %v3630, 4
    %3633 = vrot.lane.b32.xlu0 %v3632, 64
    %v3634 = vpop.permute.xlu0 %3633
    %v3636 = vmul.f32 %v3629, %v3634
    %3638 = vrot.lane.b32.xlu0 %v3636, 64
    %v3639 = vpop.permute.xlu0 %3638
    %v3641 = vadd.f32 %v2341, %v3639
    %v3642 = vtanh.pop %v3641
    %v3643 = vsub.f32 1.0, %v3629
    %3645 = vrot.lane.b32.xlu0 %v3642, 96
    %v3646 = vpop.permute.xlu0 %3645
    %v3648 = vmul.f32 %v3643, %v3646
    %v3649 = vrot.slane %v3432, 2
    %v3651 = vmul.f32 %v3629, %v3649
    %v3652 = vadd.f32 %v3648, %v3651
    %3654 = vrot.lane.b32.xlu0 %v3543, 96
    %v3655 = vpop.permute.xlu0 %3654
    %3657 = vst.msk [vmem:[%s18 + $0x8] sm:$0xc] %vm808, %v3655
    %3658 = vst.msk [vmem:[%s18] sm:$0x30] %vm810, %v3652
    %v3659 = vrot.slane %v3543, 2
    %3660 = vrot.lane.b32.xlu0 %v3659, 96
    %v3661 = vpop.permute.xlu0 %3660
    %v3662 = vsel %vm380, %v3661, 0
    %3664 = vmatprep.subr.mxu0 0.0
    %3665 = vmatpush1.msra.mxu0 %v2152
    %3666 = vmatprep.subr.mxu0 0.0
    %3667 = vmatpush1.msra.mxu0 %v2153
    %3668 = vmatprep.subr.mxu0 0.0
    %3669 = vmatpush1.msra.mxu0 %v2154
    %3670 = vmatprep.subr.mxu0 0.0
    %3671 = vmatpush1.msra.mxu0 %v2155
    %3672 = vmatprep.subr.mxu0 0.0
    %3673 = vmatpush1.msra.mxu0 0.0
    %3674 = vmatprep.subr.mxu0 0.0
    %3675 = vmatpush1.msra.mxu0 0.0
    %3676 = vmatprep.subr.mxu0 0.0
    %3677 = vmatpush1.msra.mxu0 0.0
    %3678 = vmatprep.subr.mxu0 0.0
    %3679 = vmatpush1.msra.mxu0 0.0
    %3680 = vmatprep.subr.mxu0 0.0
    %3681 = vmatpush1.msra.mxu0 0.0
    %3682 = vmatprep.subr.mxu0 0.0
    %3683 = vmatpush1.msra.mxu0 0.0
    %3684 = vmatprep.subr.mxu0 0.0
    %3685 = vmatpush1.msra.mxu0 0.0
    %3686 = vmatprep.subr.mxu0 0.0
    %3687 = vmatpush1.msra.mxu0 0.0
    %3688 = vmatprep.subr.mxu0 0.0
    %3689 = vmatpush1.msra.mxu0 0.0
    %3690 = vmatprep.subr.mxu0 0.0
    %3691 = vmatpush1.msra.mxu0 0.0
    %3692 = vmatprep.subr.mxu0 0.0
    %3693 = vmatpush1.msra.mxu0 0.0
    %3694 = vmatprep.subr.mxu0 0.0
    %3695 = vmatpush1.msra.mxu0 0.0
    %3696 = vmatprep.subr.mxu0 0.0
    %3697 = vmatpush1.msra.mxu0 0.0
    %3698 = vmatprep.subr.mxu0 0.0
    %3699 = vmatpush1.msra.mxu0 0.0
    %3700 = vmatprep.subr.mxu0 0.0
    %3701 = vmatpush1.msra.mxu0 0.0
    %3702 = vmatprep.subr.mxu0 0.0
    %3703 = vmatpush1.msra.mxu0 0.0
    %3704 = vmatprep.subr.mxu0 0.0
    %3705 = vmatpush1.msra.mxu0 0.0
    %3706 = vmatprep.subr.mxu0 0.0
    %3707 = vmatpush1.msra.mxu0 0.0
    %3708 = vmatprep.subr.mxu0 0.0
    %3709 = vmatpush1.msra.mxu0 0.0
    %3710 = vmatprep.subr.mxu0 0.0
    %3711 = vmatpush1.msra.mxu0 0.0
    %3712 = vmatprep.subr.mxu0 0.0
    %3713 = vmatpush1.msra.mxu0 0.0
    %3714 = vmatprep.subr.mxu0 0.0
    %3715 = vmatpush1.msra.mxu0 0.0
    %3716 = vmatprep.subr.mxu0 0.0
    %3717 = vmatpush1.msra.mxu0 0.0
    %3718 = vmatprep.subr.mxu0 0.0
    %3719 = vmatpush1.msra.mxu0 0.0
    %3720 = vmatprep.subr.mxu0 0.0
    %3721 = vmatpush1.msra.mxu0 0.0
    %3722 = vmatprep.subr.mxu0 0.0
    %3723 = vmatpush1.msra.mxu0 0.0
    %3724 = vmatprep.subr.mxu0 0.0
    %3725 = vmatpush1.msra.mxu0 0.0
    %3726 = vmatprep.subr.mxu0 0.0
    %3727 = vmatpush1.msra.mxu0 0.0
    %3728 = vmatprep.mubr.f32.mxu0 0.0
    %3729 = vmatmul.mubr.f32.gmra.mrb[0].mxu0 %v3662
    %v3730 = vpop.f32.mrb[0].mxu0
    %v3731 = vadd.f32 0.0, %v3730
    %v3732 = vpop.f32.mrb[0].mxu0
    %3733 = vdwg.mxu0
    %v3735 = vrot.slane %v3731, 4
    %v3737 = vadd.f32 %v2253, %v3735
    %v3738 = vxor.u32 %v3737, 2147483648
    %v3739 = vmul.f32 %v3738, 1.442695
    %v3740 = vpow.pop %v3739
    %v3741 = vadd.f32 %v3740, 1.0
    %v3742 = vrcp.pop %v3741
    %v3743 = vmul.f32 1.0, %v3742
    %v3744 = vadd.f32 %v3731, %v2250
    %v3746 = vrot.slane %v3744, 4
    %3747 = vrot.lane.b32.xlu0 %v3746, 64
    %v3748 = vpop.permute.xlu0 %3747
    %v3750 = vmul.f32 %v3743, %v3748
    %3752 = vrot.lane.b32.xlu0 %v3750, 64
    %v3753 = vpop.permute.xlu0 %3752
    %v3755 = vadd.f32 %v2243, %v3753
    %v3756 = vtanh.pop %v3755
    %v3757 = vsub.f32 1.0, %v3743
    %3759 = vrot.lane.b32.xlu0 %v3756, 96
    %v3760 = vpop.permute.xlu0 %3759
    %v3762 = vmul.f32 %v3757, %v3760
    %v3763 = vrot.slane %v3543, 6
    %v3765 = vmul.f32 %v3743, %v3763
    %v3766 = vadd.f32 %v3762, %v3765
    %v3768 = vrot.slane %v3652, 4
    %3769 = vrot.lane.b32.xlu0 %v3768, 96
    %v3770 = vpop.permute.xlu0 %3769
    %v3771 = vsel %vm380, %v3770, 0
    %3773 = vmatprep.subr.mxu0 0.0
    %3774 = vmatpush1.msra.mxu0 %v2262
    %3775 = vmatprep.subr.mxu0 0.0
    %3776 = vmatpush1.msra.mxu0 %v2263
    %3777 = vmatprep.subr.mxu0 0.0
    %3778 = vmatpush1.msra.mxu0 %v2264
    %3779 = vmatprep.subr.mxu0 0.0
    %3780 = vmatpush1.msra.mxu0 %v2265
    %3781 = vmatprep.subr.mxu0 0.0
    %3782 = vmatpush1.msra.mxu0 0.0
    %3783 = vmatprep.subr.mxu0 0.0
    %3784 = vmatpush1.msra.mxu0 0.0
    %3785 = vmatprep.subr.mxu0 0.0
    %3786 = vmatpush1.msra.mxu0 0.0
    %3787 = vmatprep.subr.mxu0 0.0
    %3788 = vmatpush1.msra.mxu0 0.0
    %3789 = vmatprep.subr.mxu0 0.0
    %3790 = vmatpush1.msra.mxu0 0.0
    %3791 = vmatprep.subr.mxu0 0.0
    %3792 = vmatpush1.msra.mxu0 0.0
    %3793 = vmatprep.subr.mxu0 0.0
    %3794 = vmatpush1.msra.mxu0 0.0
    %3795 = vmatprep.subr.mxu0 0.0
    %3796 = vmatpush1.msra.mxu0 0.0
    %3797 = vmatprep.subr.mxu0 0.0
    %3798 = vmatpush1.msra.mxu0 0.0
    %3799 = vmatprep.subr.mxu0 0.0
    %3800 = vmatpush1.msra.mxu0 0.0
    %3801 = vmatprep.subr.mxu0 0.0
    %3802 = vmatpush1.msra.mxu0 0.0
    %3803 = vmatprep.subr.mxu0 0.0
    %3804 = vmatpush1.msra.mxu0 0.0
    %3805 = vmatprep.subr.mxu0 0.0
    %3806 = vmatpush1.msra.mxu0 0.0
    %3807 = vmatprep.subr.mxu0 0.0
    %3808 = vmatpush1.msra.mxu0 0.0
    %3809 = vmatprep.subr.mxu0 0.0
    %3810 = vmatpush1.msra.mxu0 0.0
    %3811 = vmatprep.subr.mxu0 0.0
    %3812 = vmatpush1.msra.mxu0 0.0
    %3813 = vmatprep.subr.mxu0 0.0
    %3814 = vmatpush1.msra.mxu0 0.0
    %3815 = vmatprep.subr.mxu0 0.0
    %3816 = vmatpush1.msra.mxu0 0.0
    %3817 = vmatprep.subr.mxu0 0.0
    %3818 = vmatpush1.msra.mxu0 0.0
    %3819 = vmatprep.subr.mxu0 0.0
    %3820 = vmatpush1.msra.mxu0 0.0
    %3821 = vmatprep.subr.mxu0 0.0
    %3822 = vmatpush1.msra.mxu0 0.0
    %3823 = vmatprep.subr.mxu0 0.0
    %3824 = vmatpush1.msra.mxu0 0.0
    %3825 = vmatprep.subr.mxu0 0.0
    %3826 = vmatpush1.msra.mxu0 0.0
    %3827 = vmatprep.subr.mxu0 0.0
    %3828 = vmatpush1.msra.mxu0 0.0
    %3829 = vmatprep.subr.mxu0 0.0
    %3830 = vmatpush1.msra.mxu0 0.0
    %3831 = vmatprep.subr.mxu0 0.0
    %3832 = vmatpush1.msra.mxu0 0.0
    %3833 = vmatprep.subr.mxu0 0.0
    %3834 = vmatpush1.msra.mxu0 0.0
    %3835 = vmatprep.subr.mxu0 0.0
    %3836 = vmatpush1.msra.mxu0 0.0
    %3837 = vmatprep.mubr.f32.mxu0 0.0
    %3838 = vmatmul.mubr.f32.gmra.mrb[0].mxu0 %v3771
    %v3839 = vpop.f32.mrb[0].mxu0
    %v3840 = vadd.f32 0.0, %v3839
    %v3841 = vpop.f32.mrb[0].mxu0
    %3842 = vdwg.mxu0
    %v3844 = vrot.slane %v3840, 6
    %v3846 = vadd.f32 %v2355, %v3844
    %v3847 = vxor.u32 %v3846, 2147483648
    %v3848 = vmul.f32 %v3847, 1.442695
    %v3849 = vpow.pop %v3848
    %v3850 = vadd.f32 %v3849, 1.0
    %v3851 = vrcp.pop %v3850
    %v3852 = vmul.f32 1.0, %v3851
    %v3853 = vadd.f32 %v3840, %v2353
    %v3855 = vrot.slane %v3853, 6
    %3856 = vrot.lane.b32.xlu0 %v3855, 64
    %v3857 = vpop.permute.xlu0 %3856
    %v3859 = vmul.f32 %v3852, %v3857
    %3861 = vrot.lane.b32.xlu0 %v3859, 64
    %v3862 = vpop.permute.xlu0 %3861
    %v3864 = vadd.f32 %v2341, %v3862
    %v3865 = vtanh.pop %v3864
    %v3866 = vsub.f32 1.0, %v3852
    %3868 = vrot.lane.b32.xlu0 %v3865, 96
    %v3869 = vpop.permute.xlu0 %3868
    %v3871 = vmul.f32 %v3866, %v3869
    %v3872 = vrot.slane %v3652, 2
    %v3874 = vmul.f32 %v3852, %v3872
    %v3875 = vadd.f32 %v3871, %v3874
    %3877 = vrot.lane.b32.xlu0 %v3766, 96
    %v3878 = vpop.permute.xlu0 %3877
    %3880 = vst.msk [vmem:[%s18 + $0x8] sm:$0x30] %vm1033, %v3878
    %3881 = vst.msk [vmem:[%s18] sm:$0xc] %vm1035, %v3875
    %v3882 = vrot.slane %v3766, 4
    %3883 = vrot.lane.b32.xlu0 %v3882, 96
    %v3884 = vpop.permute.xlu0 %3883
    %v3885 = vsel %vm380, %v3884, 0
    %3887 = vmatprep.subr.mxu0 0.0
    %3888 = vmatpush1.msra.mxu0 %v2152
    %3889 = vmatprep.subr.mxu0 0.0
    %3890 = vmatpush1.msra.mxu0 %v2153
    %3891 = vmatprep.subr.mxu0 0.0
    %3892 = vmatpush1.msra.mxu0 %v2154
    %3893 = vmatprep.subr.mxu0 0.0
    %3894 = vmatpush1.msra.mxu0 %v2155
    %3895 = vmatprep.subr.mxu0 0.0
    %3896 = vmatpush1.msra.mxu0 0.0
    %3897 = vmatprep.subr.mxu0 0.0
    %3898 = vmatpush1.msra.mxu0 0.0
    %3899 = vmatprep.subr.mxu0 0.0
    %3900 = vmatpush1.msra.mxu0 0.0
    %3901 = vmatprep.subr.mxu0 0.0
    %3902 = vmatpush1.msra.mxu0 0.0
    %3903 = vmatprep.subr.mxu0 0.0
    %3904 = vmatpush1.msra.mxu0 0.0
    %3905 = vmatprep.subr.mxu0 0.0
    %3906 = vmatpush1.msra.mxu0 0.0
    %3907 = vmatprep.subr.mxu0 0.0
    %3908 = vmatpush1.msra.mxu0 0.0
    %3909 = vmatprep.subr.mxu0 0.0
    %3910 = vmatpush1.msra.mxu0 0.0
    %3911 = vmatprep.subr.mxu0 0.0
    %3912 = vmatpush1.msra.mxu0 0.0
    %3913 = vmatprep.subr.mxu0 0.0
    %3914 = vmatpush1.msra.mxu0 0.0
    %3915 = vmatprep.subr.mxu0 0.0
    %3916 = vmatpush1.msra.mxu0 0.0
    %3917 = vmatprep.subr.mxu0 0.0
    %3918 = vmatpush1.msra.mxu0 0.0
    %3919 = vmatprep.subr.mxu0 0.0
    %3920 = vmatpush1.msra.mxu0 0.0
    %3921 = vmatprep.subr.mxu0 0.0
    %3922 = vmatpush1.msra.mxu0 0.0
    %3923 = vmatprep.subr.mxu0 0.0
    %3924 = vmatpush1.msra.mxu0 0.0
    %3925 = vmatprep.subr.mxu0 0.0
    %3926 = vmatpush1.msra.mxu0 0.0
    %3927 = vmatprep.subr.mxu0 0.0
    %3928 = vmatpush1.msra.mxu0 0.0
    %3929 = vmatprep.subr.mxu0 0.0
    %3930 = vmatpush1.msra.mxu0 0.0
    %3931 = vmatprep.subr.mxu0 0.0
    %3932 = vmatpush1.msra.mxu0 0.0
    %3933 = vmatprep.subr.mxu0 0.0
    %3934 = vmatpush1.msra.mxu0 0.0
    %3935 = vmatprep.subr.mxu0 0.0
    %3936 = vmatpush1.msra.mxu0 0.0
    %3937 = vmatprep.subr.mxu0 0.0
    %3938 = vmatpush1.msra.mxu0 0.0
    %3939 = vmatprep.subr.mxu0 0.0
    %3940 = vmatpush1.msra.mxu0 0.0
    %3941 = vmatprep.subr.mxu0 0.0
    %3942 = vmatpush1.msra.mxu0 0.0
    %3943 = vmatprep.subr.mxu0 0.0
    %3944 = vmatpush1.msra.mxu0 0.0
    %3945 = vmatprep.subr.mxu0 0.0
    %3946 = vmatpush1.msra.mxu0 0.0
    %3947 = vmatprep.subr.mxu0 0.0
    %3948 = vmatpush1.msra.mxu0 0.0
    %3949 = vmatprep.subr.mxu0 0.0
    %3950 = vmatpush1.msra.mxu0 0.0
    %3951 = vmatprep.mubr.f32.mxu0 0.0
    %3952 = vmatmul.mubr.f32.gmra.mrb[0].mxu0 %v3885
    %v3953 = vpop.f32.mrb[0].mxu0
    %v3954 = vadd.f32 0.0, %v3953
    %v3955 = vpop.f32.mrb[0].mxu0
    %3956 = vdwg.mxu0
    %v3958 = vrot.slane %v3954, 2
    %v3960 = vadd.f32 %v2253, %v3958
    %v3961 = vxor.u32 %v3960, 2147483648
    %v3962 = vmul.f32 %v3961, 1.442695
    %v3963 = vpow.pop %v3962
    %v3964 = vadd.f32 %v3963, 1.0
    %v3965 = vrcp.pop %v3964
    %v3966 = vmul.f32 1.0, %v3965
    %v3967 = vadd.f32 %v3954, %v2250
    %v3969 = vrot.slane %v3967, 2
    %3970 = vrot.lane.b32.xlu0 %v3969, 64
    %v3971 = vpop.permute.xlu0 %3970
    %v3973 = vmul.f32 %v3966, %v3971
    %3975 = vrot.lane.b32.xlu0 %v3973, 64
    %v3976 = vpop.permute.xlu0 %3975
    %v3978 = vadd.f32 %v2243, %v3976
    %v3979 = vtanh.pop %v3978
    %v3980 = vsub.f32 1.0, %v3966
    %3982 = vrot.lane.b32.xlu0 %v3979, 96
    %v3983 = vpop.permute.xlu0 %3982
    %v3985 = vmul.f32 %v3980, %v3983
    %v3986 = vrot.slane %v3766, 6
    %v3988 = vmul.f32 %v3966, %v3986
    %v3989 = vadd.f32 %v3985, %v3988
    %v3991 = vrot.slane %v3875, 2
    %3992 = vrot.lane.b32.xlu0 %v3991, 96
    %v3993 = vpop.permute.xlu0 %3992
    %v3994 = vsel %vm380, %v3993, 0
    %3996 = vmatprep.subr.mxu0 0.0
    %3997 = vmatpush1.msra.mxu0 %v2262
    %3998 = vmatprep.subr.mxu0 0.0
    %3999 = vmatpush1.msra.mxu0 %v2263
    %4000 = vmatprep.subr.mxu0 0.0
    %4001 = vmatpush1.msra.mxu0 %v2264
    %4002 = vmatprep.subr.mxu0 0.0
    %4003 = vmatpush1.msra.mxu0 %v2265
    %4004 = vmatprep.subr.mxu0 0.0
    %4005 = vmatpush1.msra.mxu0 0.0
    %4006 = vmatprep.subr.mxu0 0.0
    %4007 = vmatpush1.msra.mxu0 0.0
    %4008 = vmatprep.subr.mxu0 0.0
    %4009 = vmatpush1.msra.mxu0 0.0
    %4010 = vmatprep.subr.mxu0 0.0
    %4011 = vmatpush1.msra.mxu0 0.0
    %4012 = vmatprep.subr.mxu0 0.0
    %4013 = vmatpush1.msra.mxu0 0.0
    %4014 = vmatprep.subr.mxu0 0.0
    %4015 = vmatpush1.msra.mxu0 0.0
    %4016 = vmatprep.subr.mxu0 0.0
    %4017 = vmatpush1.msra.mxu0 0.0
    %4018 = vmatprep.subr.mxu0 0.0
    %4019 = vmatpush1.msra.mxu0 0.0
    %4020 = vmatprep.subr.mxu0 0.0
    %4021 = vmatpush1.msra.mxu0 0.0
    %4022 = vmatprep.subr.mxu0 0.0
    %4023 = vmatpush1.msra.mxu0 0.0
    %4024 = vmatprep.subr.mxu0 0.0
    %4025 = vmatpush1.msra.mxu0 0.0
    %4026 = vmatprep.subr.mxu0 0.0
    %4027 = vmatpush1.msra.mxu0 0.0
    %4028 = vmatprep.subr.mxu0 0.0
    %4029 = vmatpush1.msra.mxu0 0.0
    %4030 = vmatprep.subr.mxu0 0.0
    %4031 = vmatpush1.msra.mxu0 0.0
    %4032 = vmatprep.subr.mxu0 0.0
    %4033 = vmatpush1.msra.mxu0 0.0
    %4034 = vmatprep.subr.mxu0 0.0
    %4035 = vmatpush1.msra.mxu0 0.0
    %4036 = vmatprep.subr.mxu0 0.0
    %4037 = vmatpush1.msra.mxu0 0.0
    %4038 = vmatprep.subr.mxu0 0.0
    %4039 = vmatpush1.msra.mxu0 0.0
    %4040 = vmatprep.subr.mxu0 0.0
    %4041 = vmatpush1.msra.mxu0 0.0
    %4042 = vmatprep.subr.mxu0 0.0
    %4043 = vmatpush1.msra.mxu0 0.0
    %4044 = vmatprep.subr.mxu0 0.0
    %4045 = vmatpush1.msra.mxu0 0.0
    %4046 = vmatprep.subr.mxu0 0.0
    %4047 = vmatpush1.msra.mxu0 0.0
    %4048 = vmatprep.subr.mxu0 0.0
    %4049 = vmatpush1.msra.mxu0 0.0
    %4050 = vmatprep.subr.mxu0 0.0
    %4051 = vmatpush1.msra.mxu0 0.0
    %4052 = vmatprep.subr.mxu0 0.0
    %4053 = vmatpush1.msra.mxu0 0.0
    %4054 = vmatprep.subr.mxu0 0.0
    %4055 = vmatpush1.msra.mxu0 0.0
    %4056 = vmatprep.subr.mxu0 0.0
    %4057 = vmatpush1.msra.mxu0 0.0
    %4058 = vmatprep.subr.mxu0 0.0
    %4059 = vmatpush1.msra.mxu0 0.0
    %4060 = vmatprep.mubr.f32.mxu0 0.0
    %4061 = vmatmul.mubr.f32.gmra.mrb[0].mxu0 %v3994
    %v4062 = vpop.f32.mrb[0].mxu0
    %v4063 = vadd.f32 0.0, %v4062
    %v4064 = vpop.f32.mrb[0].mxu0
    %4065 = vdwg.mxu0
    %v4066 = vadd.f32 %v2355, %v4063
    %v4067 = vxor.u32 %v4066, 2147483648
    %v4068 = vmul.f32 %v4067, 1.442695
    %v4069 = vpow.pop %v4068
    %v4070 = vadd.f32 %v4069, 1.0
    %v4071 = vrcp.pop %v4070
    %v4072 = vmul.f32 1.0, %v4071
    %v4073 = vadd.f32 %v4063, %v2353
    %4075 = vrot.lane.b32.xlu0 %v4073, 64
    %v4076 = vpop.permute.xlu0 %4075
    %v4078 = vmul.f32 %v4072, %v4076
    %4080 = vrot.lane.b32.xlu0 %v4078, 64
    %v4081 = vpop.permute.xlu0 %4080
    %v4083 = vadd.f32 %v2341, %v4081
    %v4084 = vtanh.pop %v4083
    %v4085 = vsub.f32 1.0, %v4072
    %4087 = vrot.lane.b32.xlu0 %v4084, 96
    %v4088 = vpop.permute.xlu0 %4087
    %v4090 = vmul.f32 %v4085, %v4088
    %v4092 = vmul.f32 %v4072, %v3991
    %v4093 = vadd.f32 %v4090, %v4092
    %4095 = vrot.lane.b32.xlu0 %v3989, 96
    %v4096 = vpop.permute.xlu0 %4095
    %4098 = vst.msk [vmem:[%s18 + $0x8] sm:$0xc0] %vm1253, %v4096
    %4099 = vst.msk [vmem:[%s18] sm:$0x3] %vm1255, %v4093
    %s4100 = scalar_lea.vmem [#allocation6], 4
    %4101 = vst.msk [vmem:[%s4100 - $0x6] sm:$0xc0] %vm1253, %v4096
    %4103 = vrot.lane.b32.xlu0 %v4093, 96
    %v4104 = vpop.permute.xlu0 %4103
    %s4106 = scalar_lea.vmem [#allocation6], 6
    %4107 = vst.msk [vmem:[%s4106] sm:$0x3] %vm586, %v4104
    // Predicated region
    $region78: #{encoder_forward.1} parent=1 // pred_check
      _
    $region79: #{encoder_forward.1} parent=1 // pred_check_branch
      %4109 = sbr.rel (0) target = $region81
    $region80: #{encoder_forward.1} parent=1 // pred_region
      _
    $region81: #{encoder_forward.1} parent=1 // pred_fallthru
      _
    // Predicated region
    $region82: #{encoder_forward.1} parent=1 // pred_check
      _
    $region83: #{encoder_forward.1} parent=1 // pred_check_branch
      %4111 = sbr.rel (0) target = $region85
    $region84: #{encoder_forward.1} parent=1 // pred_region
      %s4113 = ssub.s32 128, 128
      %4114 = vsyncadd [#allocation5], %s4113
      %s4115 = sshll.u32 [#allocation6], 4
      %s4116 = int_to_ptr.vmem [resolvable:$true] %s4115
      %4121 = dma.vmem_to_hbm [thread:$0]  %s4116, 128, %s19, [#allocation5], 32, 32, 2
    $region85: #{encoder_forward.1} parent=1 // pred_fallthru
      _
    // Predicated region
    $region86: #{encoder_forward.1} parent=1 // pred_check
      _
    $region87: #{encoder_forward.1} parent=1 // pred_check_branch
      %4123 = sbr.rel (0) target = $region89
    $region88: #{encoder_forward.1} parent=1 // pred_region
      _
    $region89: #{encoder_forward.1} parent=1 // pred_fallthru
      _
    // Predicated region
    $region90: #{encoder_forward.1} parent=1 // pred_check
      _
    $region91: #{encoder_forward.1} parent=1 // pred_check_branch
      %4125 = sbr.rel (0) target = $region93
    $region92: #{encoder_forward.1} parent=1 // pred_region
      %4126 = dma.done [#allocation5], 128
    $region93: #{encoder_forward.1} parent=1 // pred_fallthru
      _
    %4127 = vsyncpa [#allocation4], 1
    %4128 = vsyncpa [#allocation5], 1

</llo_original>
